<compile_context>
chip_gen: v6e
topology: v6e:2x2x1
jax: 0.10.0
libtpu: 0.0.40
codegen_flags: <defaults>
</compile_context>

<pallas_src>
import functools

import jax
import jax.numpy as jnp
from jax.experimental import pallas as pl
from jax.experimental.pallas import tpu as pltpu

LANE = 128


def _round_up(x, m):
    return (x + m - 1) // m * m


# --------------------------------------------------------------------------------------
# Kernel 1: (optional fused input affine+ReLU) -> 3x3 "same" conv as one im2col matmul,
#           plus per-step partial BatchNorm statistics. Optionally writes the output
#           already spatially halo-padded so the next conv can consume it directly.
# --------------------------------------------------------------------------------------
def _conv_kernel(apply_input_act, pad_output, xp_ref, w_ref, scale_ref, shift_ref,
                 y_ref, stats_ref):
    # xp_ref:    (1, H+2, W+2, Cp)   spatially zero-padded input tile (channels padded to 128)
    # w_ref:     (9*Cp, Coutp)       im2col weight matrix (tap-major, then input channel)
    # scale_ref: (1, Cp)             folded BN scale for the *input* activation (conv2 only)
    # shift_ref: (1, Cp)             folded BN shift for the *input* activation (conv2 only)
    # y_ref:     (1, H, W, Coutp) or (1, H+2, W+2, Coutp) if pad_output
    # stats_ref: (1, 2, Coutp)       this step's partial [sum, sum_sq] over H*W
    H = xp_ref.shape[1] - 2
    W = xp_ref.shape[2] - 2
    Cp = xp_ref.shape[3]
    Coutp = w_ref.shape[1]

    x = xp_ref[0]                                             # (H+2, W+2, Cp) f32

    if apply_input_act:
        # Fused BN(layer 1) + ReLU applied to the raw conv1 output tile.
        a = jnp.maximum(
            x * scale_ref[...].reshape(1, 1, Cp) + shift_ref[...].reshape(1, 1, Cp), 0.0)
        # Re-zero the spatial halo: "same" padding must be zeros *after* BN+ReLU.
        rows = jax.lax.broadcasted_iota(jnp.int32, (H + 2, W + 2, Cp), 0)
        cols = jax.lax.broadcasted_iota(jnp.int32, (H + 2, W + 2, Cp), 1)
        interior = (rows >= 1) & (rows <= H) & (cols >= 1) & (cols <= W)
        x = jnp.where(interior, a, 0.0)

    # im2col: concatenate the 9 shifted windows along the lane axis, single MXU matmul.
    taps = []
    for ky in range(3):
        for kx in range(3):
            taps.append(x[ky:ky + H, kx:kx + W, :].reshape(H * W, Cp))
    patch = jnp.concatenate(taps, axis=-1)                    # (H*W, 9*Cp)
    y = jnp.dot(patch, w_ref[...], preferred_element_type=jnp.float32)  # (H*W, Coutp)

    y_img = y.reshape(H, W, Coutp)
    if pad_output:
        # Emit zero halo directly so the next conv needs no wrapper-side jnp.pad pass.
        y_ref[...] = jnp.zeros(y_ref.shape, jnp.float32)
        y_ref[0, 1:H + 1, 1:W + 1, :] = y_img
    else:
        y_ref[...] = y_img.reshape(1, H, W, Coutp)

    # Partial BN statistics for this grid step (interior positions only; reduced over
    # the batch in the wrapper).
    stats_ref[0, 0:1, :] = jnp.sum(y, axis=0, keepdims=True)
    stats_ref[0, 1:2, :] = jnp.sum(y * y, axis=0, keepdims=True)


def conv3x3_fused(xp, w_mat, in_scale, in_shift, *, apply_input_act, pad_output):
    N, Hp2, Wp2, Cp_in = xp.shape
    H, W = Hp2 - 2, Wp2 - 2
    Coutp = w_mat.shape[1]
    if pad_output:
        y_spec = pl.BlockSpec((1, Hp2, Wp2, Coutp), lambda n: (n, 0, 0, 0))
        y_shape = jax.ShapeDtypeStruct((N, Hp2, Wp2, Coutp), jnp.float32)
    else:
        y_spec = pl.BlockSpec((1, H, W, Coutp), lambda n: (n, 0, 0, 0))
        y_shape = jax.ShapeDtypeStruct((N, H, W, Coutp), jnp.float32)

    kernel = functools.partial(_conv_kernel, apply_input_act, pad_output)
    y, stats = pl.pallas_call(
        kernel,
        grid=(N,),
        in_specs=[
            pl.BlockSpec((1, Hp2, Wp2, Cp_in), lambda n: (n, 0, 0, 0)),
            pl.BlockSpec((9 * Cp_in, Coutp), lambda n: (0, 0)),
            pl.BlockSpec((1, Cp_in), lambda n: (0, 0)),
            pl.BlockSpec((1, Cp_in), lambda n: (0, 0)),
        ],
        out_specs=[
            y_spec,
            pl.BlockSpec((1, 2, Coutp), lambda n: (n, 0, 0)),
        ],
        out_shape=[
            y_shape,
            jax.ShapeDtypeStruct((N, 2, Coutp), jnp.float32),
        ],
        compiler_params=pltpu.CompilerParams(dimension_semantics=("parallel",)),
    )(xp, w_mat, in_scale, in_shift)
    return y, stats


# --------------------------------------------------------------------------------------
# Kernel 2: final BN + ReLU over a flattened, lane-dense (rows, Cp) view.
# --------------------------------------------------------------------------------------
def _bn_relu_kernel(y_ref, scale_ref, shift_ref, o_ref):
    o_ref[...] = jnp.maximum(y_ref[...] * scale_ref[...] + shift_ref[...], 0.0)


def bn_relu_flat(y_flat, scale, shift, row_tile):
    R, C = y_flat.shape
    return pl.pallas_call(
        _bn_relu_kernel,
        grid=(R // row_tile,),
        in_specs=[
            pl.BlockSpec((row_tile, C), lambda r: (r, 0)),
            pl.BlockSpec((1, C), lambda r: (0, 0)),
            pl.BlockSpec((1, C), lambda r: (0, 0)),
        ],
        out_specs=pl.BlockSpec((row_tile, C), lambda r: (r, 0)),
        out_shape=jax.ShapeDtypeStruct((R, C), jnp.float32),
        compiler_params=pltpu.CompilerParams(dimension_semantics=("parallel",)),
    )(y_flat, scale, shift)


def _pick_row_tile(total, cap=1024):
    for t in range(min(total, cap), 0, -1):
        if total % t == 0 and (t % 8 == 0 or t == total):
            return t
    return total


# --------------------------------------------------------------------------------------
# Tiny JAX glue (per-channel scalars / layout plumbing only).
# --------------------------------------------------------------------------------------
def _fold_bn(partial_stats, count, gamma_p, beta_p, eps=1e-5):
    s = jnp.sum(partial_stats, axis=0)       # (2, Cp)
    mean = s[0] / count
    var = s[1] / count - mean * mean         # biased batch variance (BatchNorm train mode)
    inv_std = jax.lax.rsqrt(var + eps)
    scale = gamma_p * inv_std
    shift = beta_p - mean * scale
    return scale.reshape(1, -1), shift.reshape(1, -1)


def _im2col_weights(w_oihw, cin_pad, cout_pad):
    co, ci, kh, kw = w_oihw.shape
    wt = jnp.transpose(w_oihw, (2, 3, 1, 0))                           # (3, 3, Cin, Cout)
    wt = jnp.pad(wt, ((0, 0), (0, 0), (0, cin_pad - ci), (0, cout_pad - co)))
    return wt.reshape(kh * kw * cin_pad, cout_pad).astype(jnp.float32)


@jax.jit
def double_conv(x_nchw, w1, g1, b1, w2, g2, b2):
    eps = 1e-5
    N, Cin, H, W = x_nchw.shape
    Cout = w1.shape[0]
    Cp_in = _round_up(Cin, LANE)
    Cp = _round_up(Cout, LANE)
    count = N * H * W

    # NCHW -> NHWC, spatial halo pad, channel pad to 128 lanes.
    x = jnp.transpose(x_nchw, (0, 2, 3, 1)).astype(jnp.float32)
    xp = jnp.pad(x, ((0, 0), (1, 1), (1, 1), (0, Cp_in - Cin)))

    w1m = _im2col_weights(w1, Cp_in, Cp)
    w2m = _im2col_weights(w2, Cp, Cp)
    g1p = jnp.pad(g1, (0, Cp - Cout)).astype(jnp.float32)
    b1p = jnp.pad(b1, (0, Cp - Cout)).astype(jnp.float32)
    g2p = jnp.pad(g2, (0, Cp - Cout)).astype(jnp.float32)
    b2p = jnp.pad(b2, (0, Cp - Cout)).astype(jnp.float32)

    # Conv1 (no input activation), output emitted spatially pre-padded, + partial stats.
    dummy = jnp.zeros((1, Cp_in), jnp.float32)
    y1p, st1 = conv3x3_fused(xp, w1m, dummy, dummy,
                             apply_input_act=False, pad_output=True)
    sc1, sh1 = _fold_bn(st1, count, g1p, b1p, eps)

    # Conv2 with BN1+ReLU fused into its input path, + partial stats.
    y2, st2 = conv3x3_fused(y1p, w2m, sc1, sh1,
                            apply_input_act=True, pad_output=False)
    sc2, sh2 = _fold_bn(st2, count, g2p, b2p, eps)

    # Final BN2 + ReLU on a big lane-dense flattened view.
    row_tile = _pick_row_tile(N * H * W)
    out_flat = bn_relu_flat(y2.reshape(N * H * W, Cp), sc2, sh2, row_tile)
    out = out_flat.reshape(N, H, W, Cp)[..., :Cout]
    return jnp.transpose(out, (0, 3, 1, 2))                            # back to NCHW


# --------------------------------------------------------------------------------------
# Pure-JAX reference (PyTorch DoubleConv forward in training mode, no bias convs).
# --------------------------------------------------------------------------------------
def _reference(x_nchw, w1, g1, b1, w2, g2, b2, eps=1e-5):
    def conv(x, w):
        return jax.lax.conv_general_dilated(
            x, w, (1, 1), 'SAME',
            dimension_numbers=('NCHW', 'OIHW', 'NCHW'),
            precision=jax.lax.Precision.HIGHEST)

    def bnr(y, g, b):
        mean = jnp.mean(y, axis=(0, 2, 3), keepdims=True)
        var = jnp.mean((y - mean) ** 2, axis=(0, 2, 3), keepdims=True)
        yn = (y - mean) / jnp.sqrt(var + eps)
        yn = yn * g.reshape(1, -1, 1, 1) + b.reshape(1, -1, 1, 1)
        return jnp.maximum(yn, 0.0)

    y = bnr(conv(x_nchw, w1), g1, b1)
    return bnr(conv(y, w2), g2, b2)


if __name__ == "__main__":
    key = jax.random.PRNGKey(0)
    kx, k1, kg1, kb1, k2, kg2, kb2 = jax.random.split(key, 7)
    N, Cin, Cout, H, W = 2, 4, 8, 16, 16

    x = jax.random.normal(kx, (N, Cin, H, W), jnp.float32)
    w1 = jax.random.normal(k1, (Cout, Cin, 3, 3), jnp.float32) * 0.2
    g1 = 1.0 + 0.1 * jax.random.normal(kg1, (Cout,), jnp.float32)
    b1 = 0.1 * jax.random.normal(kb1, (Cout,), jnp.float32)
    w2 = jax.random.normal(k2, (Cout, Cout, 3, 3), jnp.float32) * 0.2
    g2 = 1.0 + 0.1 * jax.random.normal(kg2, (Cout,), jnp.float32)
    b2 = 0.1 * jax.random.normal(kb2, (Cout,), jnp.float32)

    out = double_conv(x, w1, g1, b1, w2, g2, b2)
    out = jax.block_until_ready(out)

    ref = _reference(x, w1, g1, b1, w2, g2, b2)
    assert out.shape == (N, Cout, H, W), out.shape
    max_err = float(jnp.max(jnp.abs(out - ref)))
    assert jnp.allclose(out, ref, atol=1e-2, rtol=1e-2), f"max abs err {max_err}"
    print("KERNEL_OK")
</pallas_src>

<mosaic_0001>
module attributes {stable_mosaic.version = 11 : i64} {
  func.func @_conv_kernel(%arg0: i32, %arg1: memref<1x18x18x128xf32, #tpu.memory_space<vmem>>, %arg2: memref<1152x128xf32, #tpu.memory_space<vmem>>, %arg3: memref<1x128xf32, #tpu.memory_space<vmem>>, %arg4: memref<1x128xf32, #tpu.memory_space<vmem>>, %arg5: memref<1x18x18x128xf32, #tpu.memory_space<vmem>>, %arg6: memref<1x2x128xf32, #tpu.memory_space<vmem>>) attributes {dimension_semantics = [#tpu.dimension_semantics<parallel>], iteration_bounds = array<i64: 2>, scalar_prefetch = 0 : i64, scratch_operands = 0 : i64, tpu.core_type = #tpu.core_type<tc>, window_params = [{transform_indices = @transform_0, window_bounds = array<i64: 1, 18, 18, 128>}, {pipeline_mode = #tpu.pipeline_mode<synchronous>, transform_indices = @transform_1, window_bounds = array<i64: 1152, 128>}, {pipeline_mode = #tpu.pipeline_mode<synchronous>, transform_indices = @transform_2, window_bounds = array<i64: 1, 128>}, {pipeline_mode = #tpu.pipeline_mode<synchronous>, transform_indices = @transform_3, window_bounds = array<i64: 1, 128>}, {transform_indices = @transform_4, window_bounds = array<i64: 1, 18, 18, 128>}, {transform_indices = @transform_5, window_bounds = array<i64: 1, 2, 128>}]} {
    %c0 = arith.constant 0 : index
    %c0_0 = arith.constant 0 : index
    %c0_1 = arith.constant 0 : index
    %c0_2 = arith.constant 0 : index
    %0 = vector.load %arg1[%c0, %c0_0, %c0_1, %c0_2] : memref<1x18x18x128xf32, #tpu.memory_space<vmem>>, vector<1x18x18x128xf32>
    %1 = vector.shape_cast %0 : vector<1x18x18x128xf32> to vector<18x18x128xf32>
    %2 = vector.extract_strided_slice %1 {offsets = [0, 0, 0], sizes = [16, 16, 128], strides = [1, 1, 1]} : vector<18x18x128xf32> to vector<16x16x128xf32>
    %3 = vector.shape_cast %2 : vector<16x16x128xf32> to vector<256x128xf32>
    %4 = vector.extract_strided_slice %1 {offsets = [0, 1, 0], sizes = [16, 16, 128], strides = [1, 1, 1]} : vector<18x18x128xf32> to vector<16x16x128xf32>
    %5 = vector.shape_cast %4 : vector<16x16x128xf32> to vector<256x128xf32>
    %6 = vector.extract_strided_slice %1 {offsets = [0, 2, 0], sizes = [16, 16, 128], strides = [1, 1, 1]} : vector<18x18x128xf32> to vector<16x16x128xf32>
    %7 = vector.shape_cast %6 : vector<16x16x128xf32> to vector<256x128xf32>
    %8 = vector.extract_strided_slice %1 {offsets = [1, 0, 0], sizes = [16, 16, 128], strides = [1, 1, 1]} : vector<18x18x128xf32> to vector<16x16x128xf32>
    %9 = vector.shape_cast %8 : vector<16x16x128xf32> to vector<256x128xf32>
    %10 = vector.extract_strided_slice %1 {offsets = [1, 1, 0], sizes = [16, 16, 128], strides = [1, 1, 1]} : vector<18x18x128xf32> to vector<16x16x128xf32>
    %11 = vector.shape_cast %10 : vector<16x16x128xf32> to vector<256x128xf32>
    %12 = vector.extract_strided_slice %1 {offsets = [1, 2, 0], sizes = [16, 16, 128], strides = [1, 1, 1]} : vector<18x18x128xf32> to vector<16x16x128xf32>
    %13 = vector.shape_cast %12 : vector<16x16x128xf32> to vector<256x128xf32>
    %14 = vector.extract_strided_slice %1 {offsets = [2, 0, 0], sizes = [16, 16, 128], strides = [1, 1, 1]} : vector<18x18x128xf32> to vector<16x16x128xf32>
    %15 = vector.shape_cast %14 : vector<16x16x128xf32> to vector<256x128xf32>
    %16 = vector.extract_strided_slice %1 {offsets = [2, 1, 0], sizes = [16, 16, 128], strides = [1, 1, 1]} : vector<18x18x128xf32> to vector<16x16x128xf32>
    %17 = vector.shape_cast %16 : vector<16x16x128xf32> to vector<256x128xf32>
    %18 = vector.extract_strided_slice %1 {offsets = [2, 2, 0], sizes = [16, 16, 128], strides = [1, 1, 1]} : vector<18x18x128xf32> to vector<16x16x128xf32>
    %19 = vector.shape_cast %18 : vector<16x16x128xf32> to vector<256x128xf32>
    %20 = tpu.concatenate %3, %5, %7, %9, %11, %13, %15, %17, %19 in 1 : vector<256x128xf32>, vector<256x128xf32>, vector<256x128xf32>, vector<256x128xf32>, vector<256x128xf32>, vector<256x128xf32>, vector<256x128xf32>, vector<256x128xf32>, vector<256x128xf32> -> vector<256x1152xf32>
    %c0_3 = arith.constant 0 : index
    %c0_4 = arith.constant 0 : index
    %21 = vector.load %arg2[%c0_3, %c0_4] : memref<1152x128xf32, #tpu.memory_space<vmem>>, vector<1152x128xf32>
    %cst = arith.constant dense<0.000000e+00> : vector<256x128xf32>
    %22 = tpu.matmul %20, %21, %cst {dimension_numbers = #tpu.dot_dimension_numbers<[1], [0], [0], [1], [0, 0, 1, 1], [], []>} : vector<256x1152xf32>, vector<1152x128xf32>, vector<256x128xf32> -> vector<256x128xf32>
    %23 = vector.shape_cast %22 : vector<256x128xf32> to vector<16x16x128xf32>
    %cst_5 = arith.constant 0.000000e+00 : f32
    %24 = vector.broadcast %cst_5 : f32 to vector<1x18x18x128xf32>
    %c0_6 = arith.constant 0 : index
    %c0_7 = arith.constant 0 : index
    %c0_8 = arith.constant 0 : index
    %c0_9 = arith.constant 0 : index
    %25 = vector.load %arg5[%c0_6, %c0_7, %c0_8, %c0_9] : memref<1x18x18x128xf32, #tpu.memory_space<vmem>>, vector<1x18x18x128xf32>
    tpu.vector_store %arg5[%c0_6, %c0_7, %c0_8, %c0_9], %24 {strides = array<i32>} : memref<1x18x18x128xf32, #tpu.memory_space<vmem>>, vector<1x18x18x128xf32>,
    %c0_10 = arith.constant 0 : index
    %c1 = arith.constant 1 : index
    %c1_11 = arith.constant 1 : index
    %c0_12 = arith.constant 0 : index
    %26 = vector.load %arg5[%c0_10, %c1, %c1_11, %c0_12] : memref<1x18x18x128xf32, #tpu.memory_space<vmem>>, vector<1x16x16x128xf32>
    %27 = vector.shape_cast %26 : vector<1x16x16x128xf32> to vector<16x16x128xf32>
    %28 = vector.shape_cast %23 : vector<16x16x128xf32> to vector<1x16x16x128xf32>
    tpu.vector_store %arg5[%c0_10, %c1, %c1_11, %c0_12], %28 {strides = array<i32>} : memref<1x18x18x128xf32, #tpu.memory_space<vmem>>, vector<1x16x16x128xf32>,
    %cst_13 = arith.constant dense<0.000000e+00> : vector<128xf32>
    %29 = vector.multi_reduction <add>, %22, %cst_13 [0] : vector<256x128xf32> to vector<128xf32>
    %30 = vector.shape_cast %29 : vector<128xf32> to vector<1x128xf32>
    %c0_14 = arith.constant 0 : index
    %c0_15 = arith.constant 0 : index
    %c0_16 = arith.constant 0 : index
    %31 = vector.load %arg6[%c0_14, %c0_15, %c0_16] : memref<1x2x128xf32, #tpu.memory_space<vmem>>, vector<1x1x128xf32>
    %32 = vector.shape_cast %31 : vector<1x1x128xf32> to vector<1x128xf32>
    %33 = vector.shape_cast %30 : vector<1x128xf32> to vector<1x1x128xf32>
    tpu.vector_store %arg6[%c0_14, %c0_15, %c0_16], %33 {strides = array<i32>} : memref<1x2x128xf32, #tpu.memory_space<vmem>>, vector<1x1x128xf32>,
    %34 = arith.mulf %22, %22 : vector<256x128xf32>
    %cst_17 = arith.constant dense<0.000000e+00> : vector<128xf32>
    %35 = vector.multi_reduction <add>, %34, %cst_17 [0] : vector<256x128xf32> to vector<128xf32>
    %36 = vector.shape_cast %35 : vector<128xf32> to vector<1x128xf32>
    %c0_18 = arith.constant 0 : index
    %c1_19 = arith.constant 1 : index
    %c0_20 = arith.constant 0 : index
    %37 = vector.load %arg6[%c0_18, %c1_19, %c0_20] : memref<1x2x128xf32, #tpu.memory_space<vmem>>, vector<1x1x128xf32>
    %38 = vector.shape_cast %37 : vector<1x1x128xf32> to vector<1x128xf32>
    %39 = vector.shape_cast %36 : vector<1x128xf32> to vector<1x1x128xf32>
    tpu.vector_store %arg6[%c0_18, %c1_19, %c0_20], %39 {strides = array<i32>} : memref<1x2x128xf32, #tpu.memory_space<vmem>>, vector<1x1x128xf32>,
    return
  }
  func.func @transform_0(%arg0: i32) -> (i32, i32, i32, i32) {
    %c0_i32 = arith.constant 0 : i32
    %c0_i32_0 = arith.constant 0 : i32
    %c0_i32_1 = arith.constant 0 : i32
    %c0_i32_2 = arith.constant 0 : i32
    return %arg0, %c0_i32, %c0_i32_0, %c0_i32_1 : i32, i32, i32, i32
  }
  func.func @transform_1(%arg0: i32) -> (i32, i32) {
    %c0_i32 = arith.constant 0 : i32
    %c0_i32_0 = arith.constant 0 : i32
    %c0_i32_1 = arith.constant 0 : i32
    return %c0_i32, %c0_i32_0 : i32, i32
  }
  func.func @transform_2(%arg0: i32) -> (i32, i32) {
    %c0_i32 = arith.constant 0 : i32
    %c0_i32_0 = arith.constant 0 : i32
    %c0_i32_1 = arith.constant 0 : i32
    return %c0_i32, %c0_i32_0 : i32, i32
  }
  func.func @transform_3(%arg0: i32) -> (i32, i32) {
    %c0_i32 = arith.constant 0 : i32
    %c0_i32_0 = arith.constant 0 : i32
    %c0_i32_1 = arith.constant 0 : i32
    return %c0_i32, %c0_i32_0 : i32, i32
  }
  func.func @transform_4(%arg0: i32) -> (i32, i32, i32, i32) {
    %c0_i32 = arith.constant 0 : i32
    %c0_i32_0 = arith.constant 0 : i32
    %c0_i32_1 = arith.constant 0 : i32
    %c0_i32_2 = arith.constant 0 : i32
    return %arg0, %c0_i32, %c0_i32_0, %c0_i32_1 : i32, i32, i32, i32
  }
  func.func @transform_5(%arg0: i32) -> (i32, i32, i32) {
    %c0_i32 = arith.constant 0 : i32
    %c0_i32_0 = arith.constant 0 : i32
    %c0_i32_1 = arith.constant 0 : i32
    return %arg0, %c0_i32, %c0_i32_0 : i32, i32, i32
  }
}

module attributes {stable_mosaic.version = 11 : i64} {
  func.func @_conv_kernel(%arg0: i32, %arg1: memref<1x18x18x128xf32, #tpu.memory_space<vmem>>, %arg2: memref<1152x128xf32, #tpu.memory_space<vmem>>, %arg3: memref<1x128xf32, #tpu.memory_space<vmem>>, %arg4: memref<1x128xf32, #tpu.memory_space<vmem>>, %arg5: memref<1x16x16x128xf32, #tpu.memory_space<vmem>>, %arg6: memref<1x2x128xf32, #tpu.memory_space<vmem>>) attributes {dimension_semantics = [#tpu.dimension_semantics<parallel>], iteration_bounds = array<i64: 2>, scalar_prefetch = 0 : i64, scratch_operands = 0 : i64, tpu.core_type = #tpu.core_type<tc>, window_params = [{transform_indices = @transform_0, window_bounds = array<i64: 1, 18, 18, 128>}, {pipeline_mode = #tpu.pipeline_mode<synchronous>, transform_indices = @transform_1, window_bounds = array<i64: 1152, 128>}, {pipeline_mode = #tpu.pipeline_mode<synchronous>, transform_indices = @transform_2, window_bounds = array<i64: 1, 128>}, {pipeline_mode = #tpu.pipeline_mode<synchronous>, transform_indices = @transform_3, window_bounds = array<i64: 1, 128>}, {transform_indices = @transform_4, window_bounds = array<i64: 1, 16, 16, 128>}, {transform_indices = @transform_5, window_bounds = array<i64: 1, 2, 128>}]} {
    %c0 = arith.constant 0 : index
    %c0_0 = arith.constant 0 : index
    %c0_1 = arith.constant 0 : index
    %c0_2 = arith.constant 0 : index
    %0 = vector.load %arg1[%c0, %c0_0, %c0_1, %c0_2] : memref<1x18x18x128xf32, #tpu.memory_space<vmem>>, vector<1x18x18x128xf32>
    %1 = vector.shape_cast %0 : vector<1x18x18x128xf32> to vector<18x18x128xf32>
    %c0_3 = arith.constant 0 : index
    %c0_4 = arith.constant 0 : index
    %2 = vector.load %arg3[%c0_3, %c0_4] : memref<1x128xf32, #tpu.memory_space<vmem>>, vector<1x128xf32>
    %3 = vector.shape_cast %2 : vector<1x128xf32> to vector<1x1x128xf32>
    %4 = vector.broadcast %3 : vector<1x1x128xf32> to vector<18x18x128xf32>
    %5 = arith.mulf %1, %4 : vector<18x18x128xf32>
    %c0_5 = arith.constant 0 : index
    %c0_6 = arith.constant 0 : index
    %6 = vector.load %arg4[%c0_5, %c0_6] : memref<1x128xf32, #tpu.memory_space<vmem>>, vector<1x128xf32>
    %7 = vector.shape_cast %6 : vector<1x128xf32> to vector<1x1x128xf32>
    %8 = vector.broadcast %7 : vector<1x1x128xf32> to vector<18x18x128xf32>
    %9 = arith.addf %5, %8 : vector<18x18x128xf32>
    %cst = arith.constant 0.000000e+00 : f32
    %10 = vector.broadcast %cst : f32 to vector<18x18x128xf32>
    %11 = arith.maximumf %9, %10 : vector<18x18x128xf32>
    %12 = tpu.iota {dimensions = array<i32: 0>} : vector<18x18x128xi32>
    %13 = tpu.iota {dimensions = array<i32: 1>} : vector<18x18x128xi32>
    %c1_i32 = arith.constant 1 : i32
    %14 = vector.broadcast %c1_i32 : i32 to vector<18x18x128xi32>
    %15 = arith.cmpi sge, %12, %14 : vector<18x18x128xi32>
    %c16_i32 = arith.constant 16 : i32
    %16 = vector.broadcast %c16_i32 : i32 to vector<18x18x128xi32>
    %17 = arith.cmpi sle, %12, %16 : vector<18x18x128xi32>
    %18 = arith.andi %15, %17 : vector<18x18x128xi1>
    %c1_i32_7 = arith.constant 1 : i32
    %19 = vector.broadcast %c1_i32_7 : i32 to vector<18x18x128xi32>
    %20 = arith.cmpi sge, %13, %19 : vector<18x18x128xi32>
    %21 = arith.andi %18, %20 : vector<18x18x128xi1>
    %c16_i32_8 = arith.constant 16 : i32
    %22 = vector.broadcast %c16_i32_8 : i32 to vector<18x18x128xi32>
    %23 = arith.cmpi sle, %13, %22 : vector<18x18x128xi32>
    %24 = arith.andi %21, %23 : vector<18x18x128xi1>
    %cst_9 = arith.constant 0.000000e+00 : f32
    %25 = vector.broadcast %cst_9 : f32 to vector<18x18x128xf32>
    %26 = arith.select %24, %11, %25 : vector<18x18x128xi1>, vector<18x18x128xf32>
    %27 = vector.extract_strided_slice %26 {offsets = [0, 0, 0], sizes = [16, 16, 128], strides = [1, 1, 1]} : vector<18x18x128xf32> to vector<16x16x128xf32>
    %28 = vector.shape_cast %27 : vector<16x16x128xf32> to vector<256x128xf32>
    %29 = vector.extract_strided_slice %26 {offsets = [0, 1, 0], sizes = [16, 16, 128], strides = [1, 1, 1]} : vector<18x18x128xf32> to vector<16x16x128xf32>
    %30 = vector.shape_cast %29 : vector<16x16x128xf32> to vector<256x128xf32>
    %31 = vector.extract_strided_slice %26 {offsets = [0, 2, 0], sizes = [16, 16, 128], strides = [1, 1, 1]} : vector<18x18x128xf32> to vector<16x16x128xf32>
    %32 = vector.shape_cast %31 : vector<16x16x128xf32> to vector<256x128xf32>
    %33 = vector.extract_strided_slice %26 {offsets = [1, 0, 0], sizes = [16, 16, 128], strides = [1, 1, 1]} : vector<18x18x128xf32> to vector<16x16x128xf32>
    %34 = vector.shape_cast %33 : vector<16x16x128xf32> to vector<256x128xf32>
    %35 = vector.extract_strided_slice %26 {offsets = [1, 1, 0], sizes = [16, 16, 128], strides = [1, 1, 1]} : vector<18x18x128xf32> to vector<16x16x128xf32>
    %36 = vector.shape_cast %35 : vector<16x16x128xf32> to vector<256x128xf32>
    %37 = vector.extract_strided_slice %26 {offsets = [1, 2, 0], sizes = [16, 16, 128], strides = [1, 1, 1]} : vector<18x18x128xf32> to vector<16x16x128xf32>
    %38 = vector.shape_cast %37 : vector<16x16x128xf32> to vector<256x128xf32>
    %39 = vector.extract_strided_slice %26 {offsets = [2, 0, 0], sizes = [16, 16, 128], strides = [1, 1, 1]} : vector<18x18x128xf32> to vector<16x16x128xf32>
    %40 = vector.shape_cast %39 : vector<16x16x128xf32> to vector<256x128xf32>
    %41 = vector.extract_strided_slice %26 {offsets = [2, 1, 0], sizes = [16, 16, 128], strides = [1, 1, 1]} : vector<18x18x128xf32> to vector<16x16x128xf32>
    %42 = vector.shape_cast %41 : vector<16x16x128xf32> to vector<256x128xf32>
    %43 = vector.extract_strided_slice %26 {offsets = [2, 2, 0], sizes = [16, 16, 128], strides = [1, 1, 1]} : vector<18x18x128xf32> to vector<16x16x128xf32>
    %44 = vector.shape_cast %43 : vector<16x16x128xf32> to vector<256x128xf32>
    %45 = tpu.concatenate %28, %30, %32, %34, %36, %38, %40, %42, %44 in 1 : vector<256x128xf32>, vector<256x128xf32>, vector<256x128xf32>, vector<256x128xf32>, vector<256x128xf32>, vector<256x128xf32>, vector<256x128xf32>, vector<256x128xf32>, vector<256x128xf32> -> vector<256x1152xf32>
    %c0_10 = arith.constant 0 : index
    %c0_11 = arith.constant 0 : index
    %46 = vector.load %arg2[%c0_10, %c0_11] : memref<1152x128xf32, #tpu.memory_space<vmem>>, vector<1152x128xf32>
    %cst_12 = arith.constant dense<0.000000e+00> : vector<256x128xf32>
    %47 = tpu.matmul %45, %46, %cst_12 {dimension_numbers = #tpu.dot_dimension_numbers<[1], [0], [0], [1], [0, 0, 1, 1], [], []>} : vector<256x1152xf32>, vector<1152x128xf32>, vector<256x128xf32> -> vector<256x128xf32>
    %48 = vector.shape_cast %47 : vector<256x128xf32> to vector<16x16x128xf32>
    %49 = vector.shape_cast %48 : vector<16x16x128xf32> to vector<1x16x16x128xf32>
    %c0_13 = arith.constant 0 : index
    %c0_14 = arith.constant 0 : index
    %c0_15 = arith.constant 0 : index
    %c0_16 = arith.constant 0 : index
    %50 = vector.load %arg5[%c0_13, %c0_14, %c0_15, %c0_16] : memref<1x16x16x128xf32, #tpu.memory_space<vmem>>, vector<1x16x16x128xf32>
    tpu.vector_store %arg5[%c0_13, %c0_14, %c0_15, %c0_16], %49 {strides = array<i32>} : memref<1x16x16x128xf32, #tpu.memory_space<vmem>>, vector<1x16x16x128xf32>,
    %cst_17 = arith.constant dense<0.000000e+00> : vector<128xf32>
    %51 = vector.multi_reduction <add>, %47, %cst_17 [0] : vector<256x128xf32> to vector<128xf32>
    %52 = vector.shape_cast %51 : vector<128xf32> to vector<1x128xf32>
    %c0_18 = arith.constant 0 : index
    %c0_19 = arith.constant 0 : index
    %c0_20 = arith.constant 0 : index
    %53 = vector.load %arg6[%c0_18, %c0_19, %c0_20] : memref<1x2x128xf32, #tpu.memory_space<vmem>>, vector<1x1x128xf32>
    %54 = vector.shape_cast %53 : vector<1x1x128xf32> to vector<1x128xf32>
    %55 = vector.shape_cast %52 : vector<1x128xf32> to vector<1x1x128xf32>
    tpu.vector_store %arg6[%c0_18, %c0_19, %c0_20], %55 {strides = array<i32>} : memref<1x2x128xf32, #tpu.memory_space<vmem>>, vector<1x1x128xf32>,
    %56 = arith.mulf %47, %47 : vector<256x128xf32>
    %cst_21 = arith.constant dense<0.000000e+00> : vector<128xf32>
    %57 = vector.multi_reduction <add>, %56, %cst_21 [0] : vector<256x128xf32> to vector<128xf32>
    %58 = vector.shape_cast %57 : vector<128xf32> to vector<1x128xf32>
    %c0_22 = arith.constant 0 : index
    %c1 = arith.constant 1 : index
    %c0_23 = arith.constant 0 : index
    %59 = vector.load %arg6[%c0_22, %c1, %c0_23] : memref<1x2x128xf32, #tpu.memory_space<vmem>>, vector<1x1x128xf32>
    %60 = vector.shape_cast %59 : vector<1x1x128xf32> to vector<1x128xf32>
    %61 = vector.shape_cast %58 : vector<1x128xf32> to vector<1x1x128xf32>
    tpu.vector_store %arg6[%c0_22, %c1, %c0_23], %61 {strides = array<i32>} : memref<1x2x128xf32, #tpu.memory_space<vmem>>, vector<1x1x128xf32>,
    return
  }
  func.func @transform_0(%arg0: i32) -> (i32, i32, i32, i32) {
    %c0_i32 = arith.constant 0 : i32
    %c0_i32_0 = arith.constant 0 : i32
    %c0_i32_1 = arith.constant 0 : i32
    %c0_i32_2 = arith.constant 0 : i32
    return %arg0, %c0_i32, %c0_i32_0, %c0_i32_1 : i32, i32, i32, i32
  }
  func.func @transform_1(%arg0: i32) -> (i32, i32) {
    %c0_i32 = arith.constant 0 : i32
    %c0_i32_0 = arith.constant 0 : i32
    %c0_i32_1 = arith.constant 0 : i32
    return %c0_i32, %c0_i32_0 : i32, i32
  }
  func.func @transform_2(%arg0: i32) -> (i32, i32) {
    %c0_i32 = arith.constant 0 : i32
    %c0_i32_0 = arith.constant 0 : i32
    %c0_i32_1 = arith.constant 0 : i32
    return %c0_i32, %c0_i32_0 : i32, i32
  }
  func.func @transform_3(%arg0: i32) -> (i32, i32) {
    %c0_i32 = arith.constant 0 : i32
    %c0_i32_0 = arith.constant 0 : i32
    %c0_i32_1 = arith.constant 0 : i32
    return %c0_i32, %c0_i32_0 : i32, i32
  }
  func.func @transform_4(%arg0: i32) -> (i32, i32, i32, i32) {
    %c0_i32 = arith.constant 0 : i32
    %c0_i32_0 = arith.constant 0 : i32
    %c0_i32_1 = arith.constant 0 : i32
    %c0_i32_2 = arith.constant 0 : i32
    return %arg0, %c0_i32, %c0_i32_0, %c0_i32_1 : i32, i32, i32, i32
  }
  func.func @transform_5(%arg0: i32) -> (i32, i32, i32) {
    %c0_i32 = arith.constant 0 : i32
    %c0_i32_0 = arith.constant 0 : i32
    %c0_i32_1 = arith.constant 0 : i32
    return %arg0, %c0_i32, %c0_i32_0 : i32, i32, i32
  }
}

module attributes {stable_mosaic.version = 11 : i64} {
  func.func @_bn_relu_kernel(%arg0: i32, %arg1: memref<512x128xf32, #tpu.memory_space<vmem>>, %arg2: memref<1x128xf32, #tpu.memory_space<vmem>>, %arg3: memref<1x128xf32, #tpu.memory_space<vmem>>, %arg4: memref<512x128xf32, #tpu.memory_space<vmem>>) attributes {dimension_semantics = [#tpu.dimension_semantics<parallel>], iteration_bounds = array<i64: 1>, scalar_prefetch = 0 : i64, scratch_operands = 0 : i64, tpu.core_type = #tpu.core_type<tc>, window_params = [{transform_indices = @transform_0, window_bounds = array<i64: 512, 128>}, {pipeline_mode = #tpu.pipeline_mode<synchronous>, transform_indices = @transform_1, window_bounds = array<i64: 1, 128>}, {pipeline_mode = #tpu.pipeline_mode<synchronous>, transform_indices = @transform_2, window_bounds = array<i64: 1, 128>}, {transform_indices = @transform_3, window_bounds = array<i64: 512, 128>}]} {
    %c0 = arith.constant 0 : index
    %c0_0 = arith.constant 0 : index
    %0 = vector.load %arg1[%c0, %c0_0] : memref<512x128xf32, #tpu.memory_space<vmem>>, vector<512x128xf32>
    %c0_1 = arith.constant 0 : index
    %c0_2 = arith.constant 0 : index
    %1 = vector.load %arg2[%c0_1, %c0_2] : memref<1x128xf32, #tpu.memory_space<vmem>>, vector<1x128xf32>
    %2 = vector.broadcast %1 : vector<1x128xf32> to vector<512x128xf32>
    %3 = arith.mulf %0, %2 : vector<512x128xf32>
    %c0_3 = arith.constant 0 : index
    %c0_4 = arith.constant 0 : index
    %4 = vector.load %arg3[%c0_3, %c0_4] : memref<1x128xf32, #tpu.memory_space<vmem>>, vector<1x128xf32>
    %5 = vector.broadcast %4 : vector<1x128xf32> to vector<512x128xf32>
    %6 = arith.addf %3, %5 : vector<512x128xf32>
    %cst = arith.constant 0.000000e+00 : f32
    %7 = vector.broadcast %cst : f32 to vector<512x128xf32>
    %8 = arith.maximumf %6, %7 : vector<512x128xf32>
    %c0_5 = arith.constant 0 : index
    %c0_6 = arith.constant 0 : index
    %9 = vector.load %arg4[%c0_5, %c0_6] : memref<512x128xf32, #tpu.memory_space<vmem>>, vector<512x128xf32>
    tpu.vector_store %arg4[%c0_5, %c0_6], %8 {strides = array<i32>} : memref<512x128xf32, #tpu.memory_space<vmem>>, vector<512x128xf32>,
    return
  }
  func.func @transform_0(%arg0: i32) -> (i32, i32) {
    %c0_i32 = arith.constant 0 : i32
    %c0_i32_0 = arith.constant 0 : i32
    return %arg0, %c0_i32 : i32, i32
  }
  func.func @transform_1(%arg0: i32) -> (i32, i32) {
    %c0_i32 = arith.constant 0 : i32
    %c0_i32_0 = arith.constant 0 : i32
    %c0_i32_1 = arith.constant 0 : i32
    return %c0_i32, %c0_i32_0 : i32, i32
  }
  func.func @transform_2(%arg0: i32) -> (i32, i32) {
    %c0_i32 = arith.constant 0 : i32
    %c0_i32_0 = arith.constant 0 : i32
    %c0_i32_1 = arith.constant 0 : i32
    return %c0_i32, %c0_i32_0 : i32, i32
  }
  func.func @transform_3(%arg0: i32) -> (i32, i32) {
    %c0_i32 = arith.constant 0 : i32
    %c0_i32_0 = arith.constant 0 : i32
    return %arg0, %c0_i32 : i32, i32
  }
}

</mosaic_0001>

<llo_original>
// kernel: double_conv.5
$region0: #{double_conv.5}
  #allocation0 [shape = 'u32[]', space=smem, size = 0x4, offset = 0x4, fixed_abs, tag = 'smem constant byte address 0x4 - core index']
  #allocation1 [shape = 'u32[144,128]{1,0:T(1,128)}', space=vmem, size = 0x12000, scoped, tag = 'internal scratch']
  %s0 = inlined_call_operand.vmem [shape: f32[512,128], index: 0, kind: input, shape index: {}]
  %s1 = inlined_call_operand.vmem [shape: f32[1,128], index: 1, kind: input, shape index: {}]
  %s2 = inlined_call_operand.vmem [shape: f32[1,128], index: 2, kind: input, shape index: {}]
  %s3 = inlined_call_operand.vmem [shape: f32[512,128], index: 3, kind: output, shape index: {}]
  %s4 = sld [smem:[#allocation0]]
  $region22: #{double_conv.5} parent=0
    _
  %s6 = ssub.s32 1, %s4
  %s7 = scalar_select 0, %s6, %s4
  // Predicated region
  $region2: #{double_conv.5} parent=0 // pred_check
    _
  $region3: #{double_conv.5} parent=0 // pred_check_branch
    %9 = sbr.rel (0) target = $region5
  $region4: #{double_conv.5} parent=0 // pred_region
    _
  $region5: #{double_conv.5} parent=0 // pred_fallthru
    _
  // Predicated region
  $region6: #{double_conv.5} parent=0 // pred_check
    _
  $region7: #{double_conv.5} parent=0 // pred_check_branch
    %11 = sbr.rel (0) target = $region9
  $region8: #{double_conv.5} parent=0 // pred_region
    _
  $region9: #{double_conv.5} parent=0 // pred_fallthru
    _
  // Predicated region
  $region10: #{double_conv.5} parent=0 // pred_check
    _
  $region11: #{double_conv.5} parent=0 // pred_check_branch
    %13 = sbr.rel (0) target = $region13
  $region12: #{double_conv.5} parent=0 // pred_region
    _
  $region13: #{double_conv.5} parent=0 // pred_fallthru
    _
  %v14 = vld [vmem:[%s0] sm:$0xff]
  %v15 = vld [vmem:[%s0 + $0x8] sm:$0xff]
  %v16 = vld [vmem:[%s0 + $0x10] sm:$0xff]
  %v17 = vld [vmem:[%s0 + $0x18] sm:$0xff]
  %v18 = vld [vmem:[%s0 + $0x20] sm:$0xff]
  %v19 = vld [vmem:[%s0 + $0x28] sm:$0xff]
  %v20 = vld [vmem:[%s0 + $0x30] sm:$0xff]
  %v21 = vld [vmem:[%s0 + $0x38] sm:$0xff]
  %v22 = vld [vmem:[%s0 + $0x40] sm:$0xff]
  %v23 = vld [vmem:[%s0 + $0x48] sm:$0xff]
  %v24 = vld [vmem:[%s0 + $0x50] sm:$0xff]
  %v25 = vld [vmem:[%s0 + $0x58] sm:$0xff]
  %v26 = vld [vmem:[%s0 + $0x60] sm:$0xff]
  %v27 = vld [vmem:[%s0 + $0x68] sm:$0xff]
  %v28 = vld [vmem:[%s0 + $0x70] sm:$0xff]
  %v29 = vld [vmem:[%s0 + $0x78] sm:$0xff]
  %v30 = vld [vmem:[%s0 + $0x80] sm:$0xff]
  %v31 = vld [vmem:[%s0 + $0x88] sm:$0xff]
  %v32 = vld [vmem:[%s0 + $0x90] sm:$0xff]
  %v33 = vld [vmem:[%s0 + $0x98] sm:$0xff]
  %v34 = vld [vmem:[%s0 + $0xa0] sm:$0xff]
  %v35 = vld [vmem:[%s0 + $0xa8] sm:$0xff]
  %v36 = vld [vmem:[%s0 + $0xb0] sm:$0xff]
  %v37 = vld [vmem:[%s0 + $0xb8] sm:$0xff]
  %v38 = vld [vmem:[%s0 + $0xc0] sm:$0xff]
  %v39 = vld [vmem:[%s0 + $0xc8] sm:$0xff]
  %v40 = vld [vmem:[%s0 + $0xd0] sm:$0xff]
  %v41 = vld [vmem:[%s0 + $0xd8] sm:$0xff]
  %v42 = vld [vmem:[%s0 + $0xe0] sm:$0xff]
  %v43 = vld [vmem:[%s0 + $0xe8] sm:$0xff]
  %v44 = vld [vmem:[%s0 + $0xf0] sm:$0xff]
  %v45 = vld [vmem:[%s0 + $0xf8] sm:$0xff]
  %v46 = vld [vmem:[%s0 + $0x100] sm:$0xff]
  %v47 = vld [vmem:[%s0 + $0x108] sm:$0xff]
  %v48 = vld [vmem:[%s0 + $0x110] sm:$0xff]
  %v49 = vld [vmem:[%s0 + $0x118] sm:$0xff]
  %v50 = vld [vmem:[%s0 + $0x120] sm:$0xff]
  %v51 = vld [vmem:[%s0 + $0x128] sm:$0xff]
  %v52 = vld [vmem:[%s0 + $0x130] sm:$0xff]
  %v53 = vld [vmem:[%s0 + $0x138] sm:$0xff]
  %v54 = vld [vmem:[%s0 + $0x140] sm:$0xff]
  %v55 = vld [vmem:[%s0 + $0x148] sm:$0xff]
  %v56 = vld [vmem:[%s0 + $0x150] sm:$0xff]
  %v57 = vld [vmem:[%s0 + $0x158] sm:$0xff]
  %v58 = vld [vmem:[%s0 + $0x160] sm:$0xff]
  %v59 = vld [vmem:[%s0 + $0x168] sm:$0xff]
  %v60 = vld [vmem:[%s0 + $0x170] sm:$0xff]
  %v61 = vld [vmem:[%s0 + $0x178] sm:$0xff]
  %v62 = vld [vmem:[%s0 + $0x180] sm:$0xff]
  %v63 = vld [vmem:[%s0 + $0x188] sm:$0xff]
  %v64 = vld [vmem:[%s0 + $0x190] sm:$0xff]
  %v65 = vld [vmem:[%s0 + $0x198] sm:$0xff]
  %v66 = vld [vmem:[%s0 + $0x1a0] sm:$0xff]
  %v67 = vld [vmem:[%s0 + $0x1a8] sm:$0xff]
  %v68 = vld [vmem:[%s0 + $0x1b0] sm:$0xff]
  %v69 = vld [vmem:[%s0 + $0x1b8] sm:$0xff]
  %v70 = vld [vmem:[%s0 + $0x1c0] sm:$0xff]
  %v71 = vld [vmem:[%s0 + $0x1c8] sm:$0xff]
  %v72 = vld [vmem:[%s0 + $0x1d0] sm:$0xff]
  %v73 = vld [vmem:[%s0 + $0x1d8] sm:$0xff]
  %v74 = vld [vmem:[%s0 + $0x1e0] sm:$0xff]
  %v75 = vld [vmem:[%s0 + $0x1e8] sm:$0xff]
  %v76 = vld [vmem:[%s0 + $0x1f0] sm:$0xff]
  %v77 = vld [vmem:[%s0 + $0x1f8] sm:$0xff]
  %v78 = vld [vmem:[%s1] sm:$0x1]
  %v80 = vlaneseq
  %v81 = vshrl.u32 %v80, 7
  %v82 = vsub.s32 0, %v81
  %v83 = vrot.slane %v78, %v82
  %v85 = vmul.f32 %v14, %v83
  %v86 = vmul.f32 %v15, %v83
  %v87 = vmul.f32 %v16, %v83
  %v88 = vmul.f32 %v17, %v83
  %v89 = vmul.f32 %v18, %v83
  %v90 = vmul.f32 %v19, %v83
  %v91 = vmul.f32 %v20, %v83
  %v92 = vmul.f32 %v21, %v83
  %v93 = vmul.f32 %v22, %v83
  %v94 = vmul.f32 %v23, %v83
  %v95 = vmul.f32 %v24, %v83
  %v96 = vmul.f32 %v25, %v83
  %v97 = vmul.f32 %v26, %v83
  %v98 = vmul.f32 %v27, %v83
  %v99 = vmul.f32 %v28, %v83
  %v100 = vmul.f32 %v29, %v83
  %v101 = vmul.f32 %v30, %v83
  %v102 = vmul.f32 %v31, %v83
  %v103 = vmul.f32 %v32, %v83
  %v104 = vmul.f32 %v33, %v83
  %v105 = vmul.f32 %v34, %v83
  %v106 = vmul.f32 %v35, %v83
  %v107 = vmul.f32 %v36, %v83
  %v108 = vmul.f32 %v37, %v83
  %v109 = vmul.f32 %v38, %v83
  %v110 = vmul.f32 %v39, %v83
  %v111 = vmul.f32 %v40, %v83
  %v112 = vmul.f32 %v41, %v83
  %v113 = vmul.f32 %v42, %v83
  %v114 = vmul.f32 %v43, %v83
  %v115 = vmul.f32 %v44, %v83
  %v116 = vmul.f32 %v45, %v83
  %v117 = vmul.f32 %v46, %v83
  %v118 = vmul.f32 %v47, %v83
  %v119 = vmul.f32 %v48, %v83
  %v120 = vmul.f32 %v49, %v83
  %v121 = vmul.f32 %v50, %v83
  %v122 = vmul.f32 %v51, %v83
  %v123 = vmul.f32 %v52, %v83
  %v124 = vmul.f32 %v53, %v83
  %v125 = vmul.f32 %v54, %v83
  %v126 = vmul.f32 %v55, %v83
  %v127 = vmul.f32 %v56, %v83
  %v128 = vmul.f32 %v57, %v83
  %v129 = vmul.f32 %v58, %v83
  %v130 = vmul.f32 %v59, %v83
  %v131 = vmul.f32 %v60, %v83
  %v132 = vmul.f32 %v61, %v83
  %v133 = vmul.f32 %v62, %v83
  %v134 = vmul.f32 %v63, %v83
  %v135 = vmul.f32 %v64, %v83
  %v136 = vmul.f32 %v65, %v83
  %v137 = vmul.f32 %v66, %v83
  %v138 = vmul.f32 %v67, %v83
  %v139 = vmul.f32 %v68, %v83
  %v140 = vmul.f32 %v69, %v83
  %v141 = vmul.f32 %v70, %v83
  %v142 = vmul.f32 %v71, %v83
  %v143 = vmul.f32 %v72, %v83
  %v144 = vmul.f32 %v73, %v83
  %v145 = vmul.f32 %v74, %v83
  %v146 = vmul.f32 %v75, %v83
  %v147 = vmul.f32 %v76, %v83
  %v148 = vmul.f32 %v77, %v83
  %v149 = vld [vmem:[%s2] sm:$0x1]
  %v151 = vlaneseq
  %v152 = vshrl.u32 %v151, 7
  %v153 = vsub.s32 0, %v152
  %v154 = vrot.slane %v149, %v153
  %v156 = vadd.f32 %v85, %v154
  %v157 = vadd.f32 %v86, %v154
  %v158 = vadd.f32 %v87, %v154
  %v159 = vadd.f32 %v88, %v154
  %v160 = vadd.f32 %v89, %v154
  %v161 = vadd.f32 %v90, %v154
  %v162 = vadd.f32 %v91, %v154
  %v163 = vadd.f32 %v92, %v154
  %v164 = vadd.f32 %v93, %v154
  %v165 = vadd.f32 %v94, %v154
  %v166 = vadd.f32 %v95, %v154
  %v167 = vadd.f32 %v96, %v154
  %v168 = vadd.f32 %v97, %v154
  %v169 = vadd.f32 %v98, %v154
  %v170 = vadd.f32 %v99, %v154
  %v171 = vadd.f32 %v100, %v154
  %v172 = vadd.f32 %v101, %v154
  %v173 = vadd.f32 %v102, %v154
  %v174 = vadd.f32 %v103, %v154
  %v175 = vadd.f32 %v104, %v154
  %v176 = vadd.f32 %v105, %v154
  %v177 = vadd.f32 %v106, %v154
  %v178 = vadd.f32 %v107, %v154
  %v179 = vadd.f32 %v108, %v154
  %v180 = vadd.f32 %v109, %v154
  %v181 = vadd.f32 %v110, %v154
  %v182 = vadd.f32 %v111, %v154
  %v183 = vadd.f32 %v112, %v154
  %v184 = vadd.f32 %v113, %v154
  %v185 = vadd.f32 %v114, %v154
  %v186 = vadd.f32 %v115, %v154
  %v187 = vadd.f32 %v116, %v154
  %v188 = vadd.f32 %v117, %v154
  %v189 = vadd.f32 %v118, %v154
  %v190 = vadd.f32 %v119, %v154
  %v191 = vadd.f32 %v120, %v154
  %v192 = vadd.f32 %v121, %v154
  %v193 = vadd.f32 %v122, %v154
  %v194 = vadd.f32 %v123, %v154
  %v195 = vadd.f32 %v124, %v154
  %v196 = vadd.f32 %v125, %v154
  %v197 = vadd.f32 %v126, %v154
  %v198 = vadd.f32 %v127, %v154
  %v199 = vadd.f32 %v128, %v154
  %v200 = vadd.f32 %v129, %v154
  %v201 = vadd.f32 %v130, %v154
  %v202 = vadd.f32 %v131, %v154
  %v203 = vadd.f32 %v132, %v154
  %v204 = vadd.f32 %v133, %v154
  %v205 = vadd.f32 %v134, %v154
  %v206 = vadd.f32 %v135, %v154
  %v207 = vadd.f32 %v136, %v154
  %v208 = vadd.f32 %v137, %v154
  %v209 = vadd.f32 %v138, %v154
  %v210 = vadd.f32 %v139, %v154
  %v211 = vadd.f32 %v140, %v154
  %v212 = vadd.f32 %v141, %v154
  %v213 = vadd.f32 %v142, %v154
  %v214 = vadd.f32 %v143, %v154
  %v215 = vadd.f32 %v144, %v154
  %v216 = vadd.f32 %v145, %v154
  %v217 = vadd.f32 %v146, %v154
  %v218 = vadd.f32 %v147, %v154
  %v219 = vadd.f32 %v148, %v154
  %v220 = vmax.f32 %v156, 0.0
  %v221 = vmax.f32 %v157, 0.0
  %v222 = vmax.f32 %v158, 0.0
  %v223 = vmax.f32 %v159, 0.0
  %v224 = vmax.f32 %v160, 0.0
  %v225 = vmax.f32 %v161, 0.0
  %v226 = vmax.f32 %v162, 0.0
  %v227 = vmax.f32 %v163, 0.0
  %v228 = vmax.f32 %v164, 0.0
  %v229 = vmax.f32 %v165, 0.0
  %v230 = vmax.f32 %v166, 0.0
  %v231 = vmax.f32 %v167, 0.0
  %v232 = vmax.f32 %v168, 0.0
  %v233 = vmax.f32 %v169, 0.0
  %v234 = vmax.f32 %v170, 0.0
  %v235 = vmax.f32 %v171, 0.0
  %v236 = vmax.f32 %v172, 0.0
  %v237 = vmax.f32 %v173, 0.0
  %v238 = vmax.f32 %v174, 0.0
  %v239 = vmax.f32 %v175, 0.0
  %v240 = vmax.f32 %v176, 0.0
  %v241 = vmax.f32 %v177, 0.0
  %v242 = vmax.f32 %v178, 0.0
  %v243 = vmax.f32 %v179, 0.0
  %v244 = vmax.f32 %v180, 0.0
  %v245 = vmax.f32 %v181, 0.0
  %v246 = vmax.f32 %v182, 0.0
  %v247 = vmax.f32 %v183, 0.0
  %v248 = vmax.f32 %v184, 0.0
  %v249 = vmax.f32 %v185, 0.0
  %v250 = vmax.f32 %v186, 0.0
  %v251 = vmax.f32 %v187, 0.0
  %v252 = vmax.f32 %v188, 0.0
  %v253 = vmax.f32 %v189, 0.0
  %v254 = vmax.f32 %v190, 0.0
  %v255 = vmax.f32 %v191, 0.0
  %v256 = vmax.f32 %v192, 0.0
  %v257 = vmax.f32 %v193, 0.0
  %v258 = vmax.f32 %v194, 0.0
  %v259 = vmax.f32 %v195, 0.0
  %v260 = vmax.f32 %v196, 0.0
  %v261 = vmax.f32 %v197, 0.0
  %v262 = vmax.f32 %v198, 0.0
  %v263 = vmax.f32 %v199, 0.0
  %v264 = vmax.f32 %v200, 0.0
  %v265 = vmax.f32 %v201, 0.0
  %v266 = vmax.f32 %v202, 0.0
  %v267 = vmax.f32 %v203, 0.0
  %v268 = vmax.f32 %v204, 0.0
  %v269 = vmax.f32 %v205, 0.0
  %v270 = vmax.f32 %v206, 0.0
  %v271 = vmax.f32 %v207, 0.0
  %v272 = vmax.f32 %v208, 0.0
  %v273 = vmax.f32 %v209, 0.0
  %v274 = vmax.f32 %v210, 0.0
  %v275 = vmax.f32 %v211, 0.0
  %v276 = vmax.f32 %v212, 0.0
  %v277 = vmax.f32 %v213, 0.0
  %v278 = vmax.f32 %v214, 0.0
  %v279 = vmax.f32 %v215, 0.0
  %v280 = vmax.f32 %v216, 0.0
  %v281 = vmax.f32 %v217, 0.0
  %v282 = vmax.f32 %v218, 0.0
  %v283 = vmax.f32 %v219, 0.0
  %284 = vst [vmem:[%s3] sm:$0xff] %v220
  %285 = vst [vmem:[%s3 + $0x8] sm:$0xff] %v221
  %286 = vst [vmem:[%s3 + $0x10] sm:$0xff] %v222
  %287 = vst [vmem:[%s3 + $0x18] sm:$0xff] %v223
  %288 = vst [vmem:[%s3 + $0x20] sm:$0xff] %v224
  %289 = vst [vmem:[%s3 + $0x28] sm:$0xff] %v225
  %290 = vst [vmem:[%s3 + $0x30] sm:$0xff] %v226
  %291 = vst [vmem:[%s3 + $0x38] sm:$0xff] %v227
  %292 = vst [vmem:[%s3 + $0x40] sm:$0xff] %v228
  %293 = vst [vmem:[%s3 + $0x48] sm:$0xff] %v229
  %294 = vst [vmem:[%s3 + $0x50] sm:$0xff] %v230
  %295 = vst [vmem:[%s3 + $0x58] sm:$0xff] %v231
  %296 = vst [vmem:[%s3 + $0x60] sm:$0xff] %v232
  %297 = vst [vmem:[%s3 + $0x68] sm:$0xff] %v233
  %298 = vst [vmem:[%s3 + $0x70] sm:$0xff] %v234
  %299 = vst [vmem:[%s3 + $0x78] sm:$0xff] %v235
  %300 = vst [vmem:[%s3 + $0x80] sm:$0xff] %v236
  %301 = vst [vmem:[%s3 + $0x88] sm:$0xff] %v237
  %302 = vst [vmem:[%s3 + $0x90] sm:$0xff] %v238
  %303 = vst [vmem:[%s3 + $0x98] sm:$0xff] %v239
  %304 = vst [vmem:[%s3 + $0xa0] sm:$0xff] %v240
  %305 = vst [vmem:[%s3 + $0xa8] sm:$0xff] %v241
  %306 = vst [vmem:[%s3 + $0xb0] sm:$0xff] %v242
  %307 = vst [vmem:[%s3 + $0xb8] sm:$0xff] %v243
  %308 = vst [vmem:[%s3 + $0xc0] sm:$0xff] %v244
  %309 = vst [vmem:[%s3 + $0xc8] sm:$0xff] %v245
  %310 = vst [vmem:[%s3 + $0xd0] sm:$0xff] %v246
  %311 = vst [vmem:[%s3 + $0xd8] sm:$0xff] %v247
  %312 = vst [vmem:[%s3 + $0xe0] sm:$0xff] %v248
  %313 = vst [vmem:[%s3 + $0xe8] sm:$0xff] %v249
  %314 = vst [vmem:[%s3 + $0xf0] sm:$0xff] %v250
  %315 = vst [vmem:[%s3 + $0xf8] sm:$0xff] %v251
  %316 = vst [vmem:[%s3 + $0x100] sm:$0xff] %v252
  %317 = vst [vmem:[%s3 + $0x108] sm:$0xff] %v253
  %318 = vst [vmem:[%s3 + $0x110] sm:$0xff] %v254
  %319 = vst [vmem:[%s3 + $0x118] sm:$0xff] %v255
  %320 = vst [vmem:[%s3 + $0x120] sm:$0xff] %v256
  %321 = vst [vmem:[%s3 + $0x128] sm:$0xff] %v257
  %322 = vst [vmem:[%s3 + $0x130] sm:$0xff] %v258
  %323 = vst [vmem:[%s3 + $0x138] sm:$0xff] %v259
  %324 = vst [vmem:[%s3 + $0x140] sm:$0xff] %v260
  %325 = vst [vmem:[%s3 + $0x148] sm:$0xff] %v261
  %326 = vst [vmem:[%s3 + $0x150] sm:$0xff] %v262
  %327 = vst [vmem:[%s3 + $0x158] sm:$0xff] %v263
  %328 = vst [vmem:[%s3 + $0x160] sm:$0xff] %v264
  %329 = vst [vmem:[%s3 + $0x168] sm:$0xff] %v265
  %330 = vst [vmem:[%s3 + $0x170] sm:$0xff] %v266
  %331 = vst [vmem:[%s3 + $0x178] sm:$0xff] %v267
  %332 = vst [vmem:[%s3 + $0x180] sm:$0xff] %v268
  %333 = vst [vmem:[%s3 + $0x188] sm:$0xff] %v269
  %334 = vst [vmem:[%s3 + $0x190] sm:$0xff] %v270
  %335 = vst [vmem:[%s3 + $0x198] sm:$0xff] %v271
  %336 = vst [vmem:[%s3 + $0x1a0] sm:$0xff] %v272
  %337 = vst [vmem:[%s3 + $0x1a8] sm:$0xff] %v273
  %338 = vst [vmem:[%s3 + $0x1b0] sm:$0xff] %v274
  %339 = vst [vmem:[%s3 + $0x1b8] sm:$0xff] %v275
  %340 = vst [vmem:[%s3 + $0x1c0] sm:$0xff] %v276
  %341 = vst [vmem:[%s3 + $0x1c8] sm:$0xff] %v277
  %342 = vst [vmem:[%s3 + $0x1d0] sm:$0xff] %v278
  %343 = vst [vmem:[%s3 + $0x1d8] sm:$0xff] %v279
  %344 = vst [vmem:[%s3 + $0x1e0] sm:$0xff] %v280
  %345 = vst [vmem:[%s3 + $0x1e8] sm:$0xff] %v281
  %346 = vst [vmem:[%s3 + $0x1f0] sm:$0xff] %v282
  %347 = vst [vmem:[%s3 + $0x1f8] sm:$0xff] %v283
  // Predicated region
  $region14: #{double_conv.5} parent=0 // pred_check
    _
  $region15: #{double_conv.5} parent=0 // pred_check_branch
    %349 = sbr.rel (0) target = $region17
  $region16: #{double_conv.5} parent=0 // pred_region
    _
  $region17: #{double_conv.5} parent=0 // pred_fallthru
    _
  // Predicated region
  $region18: #{double_conv.5} parent=0 // pred_check
    _
  $region19: #{double_conv.5} parent=0 // pred_check_branch
    %351 = sbr.rel (0) target = $region21
  $region20: #{double_conv.5} parent=0 // pred_region
    _
  $region21: #{double_conv.5} parent=0 // pred_fallthru
    _

// kernel: double_conv.3
$region0: #{double_conv.3}
  #allocation0 [shape = 'u32[]', space=smem, size = 0x4, offset = 0x4, fixed_abs, tag = 'smem constant byte address 0x4 - core index']
  #allocation1 [shape = 'u32[144,128]{1,0:T(1,128)}', space=vmem, size = 0x12000, scoped, tag = 'internal scratch']
  %s0 = inlined_call_operand.vmem [shape: f32[2,18,18,128], index: 0, kind: input, shape index: {}]
  %s1 = inlined_call_operand.vmem [shape: f32[1152,128], index: 1, kind: input, shape index: {}]
  %s2 = inlined_call_operand.vmem [shape: f32[1,128], index: 2, kind: input, shape index: {}, may-alias: {2,3}]
  %s3 = inlined_call_operand.vmem [shape: f32[1,128], index: 3, kind: input, shape index: {}, may-alias: {2,3}]
  %s4 = inlined_call_operand.vmem [shape: f32[2,18,18,128], index: 4, kind: output, shape index: {0}]
  %s5 = inlined_call_operand.vmem [shape: f32[2,2,128], index: 5, kind: output, shape index: {1}]
  %6 = xla_tuple %s4, %s5
  %s7 = sld [smem:[#allocation0]]
  $region57: #{double_conv.3} parent=0
    _
  %s9 = ssub.s32 1, %s7
  %s10 = scalar_select 0, %s9, %s7
  loop: start=0, step=1, limit=4
  $region2: #{double_conv.3} parent=0 // loop_pre_header
    _
  $region3: #{double_conv.3} parent=0 // loop_header
    %s12 = sphi 0, %s16
    %p13 = scmp.ge.s32.totalorder %s12, 4
    %s22 = sphi 0, %s24
    %s25 = sphi 0, %s22
    %s26 = sphi 0, %s25
    %s42 = sphi 0, %s26
    %s46 = sphi 0, %s46
    %s48 = sphi 0, %s46
    %s49 = sphi 0, %s48
    %s63 = sphi 0, %s49
    %s67 = sphi 0, %s67
    %s69 = sphi 0, %s67
    %s70 = sphi 0, %s69
    %s84 = sphi 0, %s70
    %s88 = sphi 0, %s88
    %s90 = sphi 0, %s88
    %s91 = sphi 0, %s90
    %s105 = sphi 0, %s91
    %s111 = sphi 0, %s113
    %s114 = sphi 0, %s111
    %s115 = sphi 0, %s114
    %s131 = sphi 0, %s115
    %s137 = sphi 0, %s139
    %s140 = sphi 0, %s137
    %s141 = sphi 0, %s140
    %s157 = sphi 0, %s141
  $region4: #{double_conv.3} parent=0 // loop_header_branch
    %15 = sbr.rel (%p13) target = $region8
  $region5: #{double_conv.3} parent=0 // loop_body
    %s17 = ssub.s32 %s12, 1
    %s18 = ssub.s32 %s12, 2
    %s19 = sadd.s32 %s12, 1
    %s20 = ssub.s32 %s12, %s19
    %p21 = scmp.eq.s32.totalorder %s20, 0
    %s23 = sadd.s32 %s22, 1
    %s24 = scalar_select %p21, %s22, %s23
    %p27 = pneg %p21
    %p28 = scmp.eq.s32.totalorder %s12, 1
    %p29 = por %p27, %p28
    %p30 = scmp.ne.s32.totalorder %s22, %s25
    %p31 = scmp.eq.s32.totalorder %s12, 0
    %p32 = por %p30, %p31
    %p33 = scmp.ne.s32.totalorder %s22, %s25
    %p34 = scmp.eq.s32.totalorder %s17, 1
    %p35 = por %p33, %p34
    %p36 = scmp.ne.s32.totalorder %s25, %s26
    %p37 = scmp.eq.s32.totalorder %s17, 0
    %p38 = por %p36, %p37
    %p39 = scmp.ne.s32.totalorder %s25, %s26
    %p40 = scmp.eq.s32.totalorder %s18, 1
    %p41 = por %p39, %p40
    %p43 = scmp.ne.s32.totalorder %s26, %s42
    %p44 = scmp.eq.s32.totalorder %s18, 0
    %p45 = por %p43, %p44
    %s47 = sadd.s32 %s46, 1
    %p50 = scmp.eq.s32.totalorder %s12, 1
    %p51 = scmp.ne.s32.totalorder %s46, %s48
    %p52 = scmp.eq.s32.totalorder %s12, 0
    %p53 = por %p51, %p52
    %p54 = scmp.ne.s32.totalorder %s46, %s48
    %p55 = scmp.eq.s32.totalorder %s17, 1
    %p56 = por %p54, %p55
    %p57 = scmp.ne.s32.totalorder %s48, %s49
    %p58 = scmp.eq.s32.totalorder %s17, 0
    %p59 = por %p57, %p58
    %p60 = scmp.ne.s32.totalorder %s48, %s49
    %p61 = scmp.eq.s32.totalorder %s18, 1
    %p62 = por %p60, %p61
    %p64 = scmp.ne.s32.totalorder %s49, %s63
    %p65 = scmp.eq.s32.totalorder %s18, 0
    %p66 = por %p64, %p65
    %s68 = sadd.s32 %s67, 1
    %p71 = scmp.eq.s32.totalorder %s12, 1
    %p72 = scmp.ne.s32.totalorder %s67, %s69
    %p73 = scmp.eq.s32.totalorder %s12, 0
    %p74 = por %p72, %p73
    %p75 = scmp.ne.s32.totalorder %s67, %s69
    %p76 = scmp.eq.s32.totalorder %s17, 1
    %p77 = por %p75, %p76
    %p78 = scmp.ne.s32.totalorder %s69, %s70
    %p79 = scmp.eq.s32.totalorder %s17, 0
    %p80 = por %p78, %p79
    %p81 = scmp.ne.s32.totalorder %s69, %s70
    %p82 = scmp.eq.s32.totalorder %s18, 1
    %p83 = por %p81, %p82
    %p85 = scmp.ne.s32.totalorder %s70, %s84
    %p86 = scmp.eq.s32.totalorder %s18, 0
    %p87 = por %p85, %p86
    %s89 = sadd.s32 %s88, 1
    %p92 = scmp.eq.s32.totalorder %s12, 1
    %p93 = scmp.ne.s32.totalorder %s88, %s90
    %p94 = scmp.eq.s32.totalorder %s12, 0
    %p95 = por %p93, %p94
    %p96 = scmp.ne.s32.totalorder %s88, %s90
    %p97 = scmp.eq.s32.totalorder %s17, 1
    %p98 = por %p96, %p97
    %p99 = scmp.ne.s32.totalorder %s90, %s91
    %p100 = scmp.eq.s32.totalorder %s17, 0
    %p101 = por %p99, %p100
    %p102 = scmp.ne.s32.totalorder %s90, %s91
    %p103 = scmp.eq.s32.totalorder %s18, 1
    %p104 = por %p102, %p103
    %p106 = scmp.ne.s32.totalorder %s91, %s105
    %p107 = scmp.eq.s32.totalorder %s18, 0
    %p108 = por %p106, %p107
    %s109 = ssub.s32 %s12, %s19
    %p110 = scmp.eq.s32.totalorder %s109, 0
    %s112 = sadd.s32 %s111, 1
    %s113 = scalar_select %p110, %s111, %s112
    %p116 = pneg %p110
    %p117 = scmp.eq.s32.totalorder %s12, 1
    %p118 = por %p116, %p117
    %p119 = scmp.ne.s32.totalorder %s111, %s114
    %p120 = scmp.eq.s32.totalorder %s12, 0
    %p121 = por %p119, %p120
    %p122 = scmp.ne.s32.totalorder %s111, %s114
    %p123 = scmp.eq.s32.totalorder %s17, 1
    %p124 = por %p122, %p123
    %p125 = scmp.ne.s32.totalorder %s114, %s115
    %p126 = scmp.eq.s32.totalorder %s17, 0
    %p127 = por %p125, %p126
    %p128 = scmp.ne.s32.totalorder %s114, %s115
    %p129 = scmp.eq.s32.totalorder %s18, 1
    %p130 = por %p128, %p129
    %p132 = scmp.ne.s32.totalorder %s115, %s131
    %p133 = scmp.eq.s32.totalorder %s18, 0
    %p134 = por %p132, %p133
    %s135 = ssub.s32 %s12, %s19
    %p136 = scmp.eq.s32.totalorder %s135, 0
    %s138 = sadd.s32 %s137, 1
    %s139 = scalar_select %p136, %s137, %s138
    %p142 = pneg %p136
    %p143 = scmp.eq.s32.totalorder %s12, 1
    %p144 = por %p142, %p143
    %p145 = scmp.ne.s32.totalorder %s137, %s140
    %p146 = scmp.eq.s32.totalorder %s12, 0
    %p147 = por %p145, %p146
    %p148 = scmp.ne.s32.totalorder %s137, %s140
    %p149 = scmp.eq.s32.totalorder %s17, 1
    %p150 = por %p148, %p149
    %p151 = scmp.ne.s32.totalorder %s140, %s141
    %p152 = scmp.eq.s32.totalorder %s17, 0
    %p153 = por %p151, %p152
    %p154 = scmp.ne.s32.totalorder %s140, %s141
    %p155 = scmp.eq.s32.totalorder %s18, 1
    %p156 = por %p154, %p155
    %p158 = scmp.ne.s32.totalorder %s141, %s157
    %p159 = scmp.eq.s32.totalorder %s18, 0
    %p160 = por %p158, %p159
    %p161 = scmp.le.s32.totalorder 1, %s12
    %p162 = scmp.lt.s32.totalorder %s12, 3
    %p163 = pnand %p161, %p162
    %p164 = pneg %p163
    // Predicated region
    $region9: #{double_conv.3} parent=5 // pred_check
      _
    $region10: #{double_conv.3} parent=5 // pred_check_branch
      %166 = sbr.rel (%p163) target = $region12
    $region11: #{double_conv.3} parent=5 // pred_region
      %s167 = ssub.s32 %s12, 1
      // Predicated region
      $region13: #{double_conv.3} parent=11 // pred_check
        %p168 = pneg %p59
      $region14: #{double_conv.3} parent=11 // pred_check_branch
        %170 = sbr.rel (%p168) target = $region16
      $region15: #{double_conv.3} parent=11 // pred_region
        _
      $region16: #{double_conv.3} parent=11 // pred_fallthru
        _
      // Predicated region
      $region17: #{double_conv.3} parent=11 // pred_check
        %p171 = pneg %p80
      $region18: #{double_conv.3} parent=11 // pred_check_branch
        %173 = sbr.rel (%p171) target = $region20
      $region19: #{double_conv.3} parent=11 // pred_region
        _
      $region20: #{double_conv.3} parent=11 // pred_fallthru
        _
      // Predicated region
      $region21: #{double_conv.3} parent=11 // pred_check
        %p174 = pneg %p101
      $region22: #{double_conv.3} parent=11 // pred_check_branch
        %176 = sbr.rel (%p174) target = $region24
      $region23: #{double_conv.3} parent=11 // pred_region
        _
      $region24: #{double_conv.3} parent=11 // pred_fallthru
        _
    $region12: #{double_conv.3} parent=5 // pred_fallthru
      _
    %p177 = scmp.lt.s32.totalorder %s12, 2
    // Predicated region
    $region25: #{double_conv.3} parent=5 // pred_check
      %p178 = pneg %p177
    $region26: #{double_conv.3} parent=5 // pred_check_branch
      %180 = sbr.rel (%p178) target = $region28
    $region27: #{double_conv.3} parent=5 // pred_region
      // Predicated region
      $region29: #{double_conv.3} parent=27 // pred_check
        %p181 = pneg %p32
      $region30: #{double_conv.3} parent=27 // pred_check_branch
        %183 = sbr.rel (%p181) target = $region32
      $region31: #{double_conv.3} parent=27 // pred_region
        %p184 = scmp.lt.s32.totalorder %s12, 1
        %s185 = scalar_select %p184, %s12, 1
        %s186 = smul.addr %s185, 54
        %s187 = smul.addr %s186, 8
        %s188 = scalar_lea.vmem %s0, %s187
      $region32: #{double_conv.3} parent=27 // pred_fallthru
        _
    $region28: #{double_conv.3} parent=5 // pred_fallthru
      _
    %p189 = scmp.le.s32.totalorder 1, %s12
    %p190 = scmp.lt.s32.totalorder %s12, 3
    %p191 = pnand %p189, %p190
    %p192 = pneg %p191
    // Predicated region
    $region33: #{double_conv.3} parent=5 // pred_check
      _
    $region34: #{double_conv.3} parent=5 // pred_check_branch
      %194 = sbr.rel (%p191) target = $region36
    $region35: #{double_conv.3} parent=5 // pred_region
      %s195 = ssub.s32 %s12, 1
      %p196 = scmp.lt.s32.totalorder %s17, 1
      %s197 = scalar_select %p196, %s17, 1
      %s198 = smul.addr %s197, 54
      %s199 = smul.addr %s198, 8
      %s200 = scalar_lea.vmem %s0, %s199
      %p201 = pneg %p38
      %p202 = pneg %p35
      %p203 = pneg %p59
      %p204 = pneg %p56
      %p205 = pneg %p80
      %p206 = pneg %p77
      %p207 = pneg %p101
      %p208 = pneg %p98
      %p209 = pneg %p127
      %p210 = pneg %p124
      %p211 = scmp.lt.s32.totalorder %s17, 1
      %s212 = scalar_select %p211, %s17, 1
      %s213 = smul.addr %s212, 54
      %s214 = smul.addr %s213, 8
      %s215 = scalar_lea.vmem %s4, %s214
      %p216 = pneg %p153
      %p217 = pneg %p150
      %p218 = scmp.lt.s32.totalorder %s17, 1
      %s219 = scalar_select %p218, %s17, 1
      %s220 = smul.addr %s219, 2
      %s221 = scalar_lea.vmem %s5, %s220
      %p222 = scmp.lt.s32.totalorder %s17, 1
      %s223 = scalar_select %p222, %s17, 1
      %s224 = smul.addr %s223, 54
      %s225 = smul.addr %s224, 8
      %s226 = scalar_lea.vmem %s0, %s225
      %p227 = scmp.lt.s32.totalorder %s17, 1
      %s228 = scalar_select %p227, %s17, 1
      %s229 = smul.addr %s228, 54
      %s230 = smul.addr %s229, 8
      %s231 = scalar_lea.vmem %s4, %s230
      %p232 = scmp.lt.s32.totalorder %s17, 1
      %s233 = scalar_select %p232, %s17, 1
      %s234 = smul.addr %s233, 2
      %s235 = scalar_lea.vmem %s5, %s234
      %v236 = vld [vmem:[%s226] sm:$0xff]
      %v237 = vld [vmem:[%s226 + $0x8] sm:$0xff]
      %v238 = vld [vmem:[%s226 + $0x10] sm:$0x3]
      %v239 = vld [vmem:[%s226 + $0x18] sm:$0xff]
      %v240 = vld [vmem:[%s226 + $0x20] sm:$0xff]
      %v241 = vld [vmem:[%s226 + $0x28] sm:$0x3]
      %v242 = vld [vmem:[%s226 + $0x30] sm:$0xff]
      %v243 = vld [vmem:[%s226 + $0x38] sm:$0xff]
      %v244 = vld [vmem:[%s226 + $0x40] sm:$0x3]
      %v245 = vld [vmem:[%s226 + $0x48] sm:$0xff]
      %v246 = vld [vmem:[%s226 + $0x50] sm:$0xff]
      %v247 = vld [vmem:[%s226 + $0x58] sm:$0x3]
      %v248 = vld [vmem:[%s226 + $0x60] sm:$0xff]
      %v249 = vld [vmem:[%s226 + $0x68] sm:$0xff]
      %v250 = vld [vmem:[%s226 + $0x70] sm:$0x3]
      %v251 = vld [vmem:[%s226 + $0x78] sm:$0xff]
      %v252 = vld [vmem:[%s226 + $0x80] sm:$0xff]
      %v253 = vld [vmem:[%s226 + $0x88] sm:$0x3]
      %v254 = vld [vmem:[%s226 + $0x90] sm:$0xff]
      %v255 = vld [vmem:[%s226 + $0x98] sm:$0xff]
      %v256 = vld [vmem:[%s226 + $0xa0] sm:$0x3]
      %v257 = vld [vmem:[%s226 + $0xa8] sm:$0xff]
      %v258 = vld [vmem:[%s226 + $0xb0] sm:$0xff]
      %v259 = vld [vmem:[%s226 + $0xb8] sm:$0x3]
      %v260 = vld [vmem:[%s226 + $0xc0] sm:$0xff]
      %v261 = vld [vmem:[%s226 + $0xc8] sm:$0xff]
      %v262 = vld [vmem:[%s226 + $0xd0] sm:$0x3]
      %v263 = vld [vmem:[%s226 + $0xd8] sm:$0xff]
      %v264 = vld [vmem:[%s226 + $0xe0] sm:$0xff]
      %v265 = vld [vmem:[%s226 + $0xe8] sm:$0x3]
      %v266 = vld [vmem:[%s226 + $0xf0] sm:$0xff]
      %v267 = vld [vmem:[%s226 + $0xf8] sm:$0xff]
      %v268 = vld [vmem:[%s226 + $0x100] sm:$0x3]
      %v269 = vld [vmem:[%s226 + $0x108] sm:$0xff]
      %v270 = vld [vmem:[%s226 + $0x110] sm:$0xff]
      %v271 = vld [vmem:[%s226 + $0x118] sm:$0x3]
      %v272 = vld [vmem:[%s226 + $0x120] sm:$0xff]
      %v273 = vld [vmem:[%s226 + $0x128] sm:$0xff]
      %v274 = vld [vmem:[%s226 + $0x130] sm:$0x3]
      %v275 = vld [vmem:[%s226 + $0x138] sm:$0xff]
      %v276 = vld [vmem:[%s226 + $0x140] sm:$0xff]
      %v277 = vld [vmem:[%s226 + $0x148] sm:$0x3]
      %v278 = vld [vmem:[%s226 + $0x150] sm:$0xff]
      %v279 = vld [vmem:[%s226 + $0x158] sm:$0xff]
      %v280 = vld [vmem:[%s226 + $0x160] sm:$0x3]
      %v281 = vld [vmem:[%s226 + $0x168] sm:$0xff]
      %v282 = vld [vmem:[%s226 + $0x170] sm:$0xff]
      %v283 = vld [vmem:[%s226 + $0x178] sm:$0x3]
      %v284 = vld [vmem:[%s226 + $0x180] sm:$0xff]
      %v285 = vld [vmem:[%s226 + $0x188] sm:$0xff]
      %v286 = vld [vmem:[%s226 + $0x190] sm:$0x3]
      %v287 = vld [vmem:[%s226 + $0x198] sm:$0xff]
      %v288 = vld [vmem:[%s226 + $0x1a0] sm:$0xff]
      %v289 = vld [vmem:[%s226 + $0x1a8] sm:$0x3]
      %vm338 = vcmask 1046528
      %v339 = vrot.slane %v236, 1
      %v340 = vrot.slane %v237, 1
      %v341 = vsel %vm338, %v339, %v340
      %v342 = vrot.slane %v238, 1
      %v343 = vsel %vm338, %v340, %v342
      %v344 = vrot.slane %v239, 1
      %v345 = vrot.slane %v240, 1
      %v346 = vsel %vm338, %v344, %v345
      %v347 = vrot.slane %v241, 1
      %v348 = vsel %vm338, %v345, %v347
      %v349 = vrot.slane %v242, 1
      %v350 = vrot.slane %v243, 1
      %v351 = vsel %vm338, %v349, %v350
      %v352 = vrot.slane %v244, 1
      %v353 = vsel %vm338, %v350, %v352
      %v354 = vrot.slane %v245, 1
      %v355 = vrot.slane %v246, 1
      %v356 = vsel %vm338, %v354, %v355
      %v357 = vrot.slane %v247, 1
      %v358 = vsel %vm338, %v355, %v357
      %v359 = vrot.slane %v248, 1
      %v360 = vrot.slane %v249, 1
      %v361 = vsel %vm338, %v359, %v360
      %v362 = vrot.slane %v250, 1
      %v363 = vsel %vm338, %v360, %v362
      %v364 = vrot.slane %v251, 1
      %v365 = vrot.slane %v252, 1
      %v366 = vsel %vm338, %v364, %v365
      %v367 = vrot.slane %v253, 1
      %v368 = vsel %vm338, %v365, %v367
      %v369 = vrot.slane %v254, 1
      %v370 = vrot.slane %v255, 1
      %v371 = vsel %vm338, %v369, %v370
      %v372 = vrot.slane %v256, 1
      %v373 = vsel %vm338, %v370, %v372
      %v374 = vrot.slane %v257, 1
      %v375 = vrot.slane %v258, 1
      %v376 = vsel %vm338, %v374, %v375
      %v377 = vrot.slane %v259, 1
      %v378 = vsel %vm338, %v375, %v377
      %v379 = vrot.slane %v260, 1
      %v380 = vrot.slane %v261, 1
      %v381 = vsel %vm338, %v379, %v380
      %v382 = vrot.slane %v262, 1
      %v383 = vsel %vm338, %v380, %v382
      %v384 = vrot.slane %v263, 1
      %v385 = vrot.slane %v264, 1
      %v386 = vsel %vm338, %v384, %v385
      %v387 = vrot.slane %v265, 1
      %v388 = vsel %vm338, %v385, %v387
      %v389 = vrot.slane %v266, 1
      %v390 = vrot.slane %v267, 1
      %v391 = vsel %vm338, %v389, %v390
      %v392 = vrot.slane %v268, 1
      %v393 = vsel %vm338, %v390, %v392
      %v394 = vrot.slane %v269, 1
      %v395 = vrot.slane %v270, 1
      %v396 = vsel %vm338, %v394, %v395
      %v397 = vrot.slane %v271, 1
      %v398 = vsel %vm338, %v395, %v397
      %v399 = vrot.slane %v272, 1
      %v400 = vrot.slane %v273, 1
      %v401 = vsel %vm338, %v399, %v400
      %v402 = vrot.slane %v274, 1
      %v403 = vsel %vm338, %v400, %v402
      %v404 = vrot.slane %v275, 1
      %v405 = vrot.slane %v276, 1
      %v406 = vsel %vm338, %v404, %v405
      %v407 = vrot.slane %v277, 1
      %v408 = vsel %vm338, %v405, %v407
      %v409 = vrot.slane %v278, 1
      %v410 = vrot.slane %v279, 1
      %v411 = vsel %vm338, %v409, %v410
      %v412 = vrot.slane %v280, 1
      %v413 = vsel %vm338, %v410, %v412
      %v414 = vrot.slane %v281, 1
      %v415 = vrot.slane %v282, 1
      %v416 = vsel %vm338, %v414, %v415
      %v417 = vrot.slane %v283, 1
      %v418 = vsel %vm338, %v415, %v417
      %vm451 = vcmask 1045504
      %v452 = vrot.slane %v236, 2
      %v453 = vrot.slane %v237, 2
      %v454 = vsel %vm451, %v452, %v453
      %v455 = vrot.slane %v238, 2
      %v456 = vsel %vm451, %v453, %v455
      %v457 = vrot.slane %v239, 2
      %v458 = vrot.slane %v240, 2
      %v459 = vsel %vm451, %v457, %v458
      %v460 = vrot.slane %v241, 2
      %v461 = vsel %vm451, %v458, %v460
      %v462 = vrot.slane %v242, 2
      %v463 = vrot.slane %v243, 2
      %v464 = vsel %vm451, %v462, %v463
      %v465 = vrot.slane %v244, 2
      %v466 = vsel %vm451, %v463, %v465
      %v467 = vrot.slane %v245, 2
      %v468 = vrot.slane %v246, 2
      %v469 = vsel %vm451, %v467, %v468
      %v470 = vrot.slane %v247, 2
      %v471 = vsel %vm451, %v468, %v470
      %v472 = vrot.slane %v248, 2
      %v473 = vrot.slane %v249, 2
      %v474 = vsel %vm451, %v472, %v473
      %v475 = vrot.slane %v250, 2
      %v476 = vsel %vm451, %v473, %v475
      %v477 = vrot.slane %v251, 2
      %v478 = vrot.slane %v252, 2
      %v479 = vsel %vm451, %v477, %v478
      %v480 = vrot.slane %v253, 2
      %v481 = vsel %vm451, %v478, %v480
      %v482 = vrot.slane %v254, 2
      %v483 = vrot.slane %v255, 2
      %v484 = vsel %vm451, %v482, %v483
      %v485 = vrot.slane %v256, 2
      %v486 = vsel %vm451, %v483, %v485
      %v487 = vrot.slane %v257, 2
      %v488 = vrot.slane %v258, 2
      %v489 = vsel %vm451, %v487, %v488
      %v490 = vrot.slane %v259, 2
      %v491 = vsel %vm451, %v488, %v490
      %v492 = vrot.slane %v260, 2
      %v493 = vrot.slane %v261, 2
      %v494 = vsel %vm451, %v492, %v493
      %v495 = vrot.slane %v262, 2
      %v496 = vsel %vm451, %v493, %v495
      %v497 = vrot.slane %v263, 2
      %v498 = vrot.slane %v264, 2
      %v499 = vsel %vm451, %v497, %v498
      %v500 = vrot.slane %v265, 2
      %v501 = vsel %vm451, %v498, %v500
      %v502 = vrot.slane %v266, 2
      %v503 = vrot.slane %v267, 2
      %v504 = vsel %vm451, %v502, %v503
      %v505 = vrot.slane %v268, 2
      %v506 = vsel %vm451, %v503, %v505
      %v507 = vrot.slane %v269, 2
      %v508 = vrot.slane %v270, 2
      %v509 = vsel %vm451, %v507, %v508
      %v510 = vrot.slane %v271, 2
      %v511 = vsel %vm451, %v508, %v510
      %v512 = vrot.slane %v272, 2
      %v513 = vrot.slane %v273, 2
      %v514 = vsel %vm451, %v512, %v513
      %v515 = vrot.slane %v274, 2
      %v516 = vsel %vm451, %v513, %v515
      %v517 = vrot.slane %v275, 2
      %v518 = vrot.slane %v276, 2
      %v519 = vsel %vm451, %v517, %v518
      %v520 = vrot.slane %v277, 2
      %v521 = vsel %vm451, %v518, %v520
      %v522 = vrot.slane %v278, 2
      %v523 = vrot.slane %v279, 2
      %v524 = vsel %vm451, %v522, %v523
      %v525 = vrot.slane %v280, 2
      %v526 = vsel %vm451, %v523, %v525
      %v527 = vrot.slane %v281, 2
      %v528 = vrot.slane %v282, 2
      %v529 = vsel %vm451, %v527, %v528
      %v530 = vrot.slane %v283, 2
      %v531 = vsel %vm451, %v528, %v530
      %v567 = vrot.slane %v284, 1
      %v568 = vrot.slane %v285, 1
      %v569 = vsel %vm338, %v567, %v568
      %v570 = vrot.slane %v286, 1
      %v571 = vsel %vm338, %v568, %v570
      %v574 = vrot.slane %v284, 2
      %v575 = vrot.slane %v285, 2
      %v576 = vsel %vm451, %v574, %v575
      %v577 = vrot.slane %v286, 2
      %v578 = vsel %vm451, %v575, %v577
      %v584 = vrot.slane %v287, 1
      %v585 = vrot.slane %v288, 1
      %v586 = vsel %vm338, %v584, %v585
      %v587 = vrot.slane %v289, 1
      %v588 = vsel %vm338, %v585, %v587
      %v591 = vrot.slane %v287, 2
      %v592 = vrot.slane %v288, 2
      %v593 = vsel %vm451, %v591, %v592
      %v594 = vrot.slane %v289, 2
      %v595 = vsel %vm451, %v592, %v594
      %v598 = vld [vmem:[%s1] sm:$0xff]
      %v599 = vld [vmem:[%s1 + $0x8] sm:$0xff]
      %v600 = vld [vmem:[%s1 + $0x10] sm:$0xff]
      %v601 = vld [vmem:[%s1 + $0x18] sm:$0xff]
      %v602 = vld [vmem:[%s1 + $0x20] sm:$0xff]
      %v603 = vld [vmem:[%s1 + $0x28] sm:$0xff]
      %v604 = vld [vmem:[%s1 + $0x30] sm:$0xff]
      %v605 = vld [vmem:[%s1 + $0x38] sm:$0xff]
      %v606 = vld [vmem:[%s1 + $0x40] sm:$0xff]
      %v607 = vld [vmem:[%s1 + $0x48] sm:$0xff]
      %v608 = vld [vmem:[%s1 + $0x50] sm:$0xff]
      %v609 = vld [vmem:[%s1 + $0x58] sm:$0xff]
      %v610 = vld [vmem:[%s1 + $0x60] sm:$0xff]
      %v611 = vld [vmem:[%s1 + $0x68] sm:$0xff]
      %v612 = vld [vmem:[%s1 + $0x70] sm:$0xff]
      %v613 = vld [vmem:[%s1 + $0x78] sm:$0xff]
      %v614 = vld [vmem:[%s1 + $0x80] sm:$0xff]
      %v615 = vld [vmem:[%s1 + $0x88] sm:$0xff]
      %v616 = vld [vmem:[%s1 + $0x90] sm:$0xff]
      %v617 = vld [vmem:[%s1 + $0x98] sm:$0xff]
      %v618 = vld [vmem:[%s1 + $0xa0] sm:$0xff]
      %v619 = vld [vmem:[%s1 + $0xa8] sm:$0xff]
      %v620 = vld [vmem:[%s1 + $0xb0] sm:$0xff]
      %v621 = vld [vmem:[%s1 + $0xb8] sm:$0xff]
      %v622 = vld [vmem:[%s1 + $0xc0] sm:$0xff]
      %v623 = vld [vmem:[%s1 + $0xc8] sm:$0xff]
      %v624 = vld [vmem:[%s1 + $0xd0] sm:$0xff]
      %v625 = vld [vmem:[%s1 + $0xd8] sm:$0xff]
      %v626 = vld [vmem:[%s1 + $0xe0] sm:$0xff]
      %v627 = vld [vmem:[%s1 + $0xe8] sm:$0xff]
      %v628 = vld [vmem:[%s1 + $0xf0] sm:$0xff]
      %v629 = vld [vmem:[%s1 + $0xf8] sm:$0xff]
      %v630 = vld [vmem:[%s1 + $0x100] sm:$0xff]
      %v631 = vld [vmem:[%s1 + $0x108] sm:$0xff]
      %v632 = vld [vmem:[%s1 + $0x110] sm:$0xff]
      %v633 = vld [vmem:[%s1 + $0x118] sm:$0xff]
      %v634 = vld [vmem:[%s1 + $0x120] sm:$0xff]
      %v635 = vld [vmem:[%s1 + $0x128] sm:$0xff]
      %v636 = vld [vmem:[%s1 + $0x130] sm:$0xff]
      %v637 = vld [vmem:[%s1 + $0x138] sm:$0xff]
      %v638 = vld [vmem:[%s1 + $0x140] sm:$0xff]
      %v639 = vld [vmem:[%s1 + $0x148] sm:$0xff]
      %v640 = vld [vmem:[%s1 + $0x150] sm:$0xff]
      %v641 = vld [vmem:[%s1 + $0x158] sm:$0xff]
      %v642 = vld [vmem:[%s1 + $0x160] sm:$0xff]
      %v643 = vld [vmem:[%s1 + $0x168] sm:$0xff]
      %v644 = vld [vmem:[%s1 + $0x170] sm:$0xff]
      %v645 = vld [vmem:[%s1 + $0x178] sm:$0xff]
      %v646 = vld [vmem:[%s1 + $0x180] sm:$0xff]
      %v647 = vld [vmem:[%s1 + $0x188] sm:$0xff]
      %v648 = vld [vmem:[%s1 + $0x190] sm:$0xff]
      %v649 = vld [vmem:[%s1 + $0x198] sm:$0xff]
      %v650 = vld [vmem:[%s1 + $0x1a0] sm:$0xff]
      %v651 = vld [vmem:[%s1 + $0x1a8] sm:$0xff]
      %v652 = vld [vmem:[%s1 + $0x1b0] sm:$0xff]
      %v653 = vld [vmem:[%s1 + $0x1b8] sm:$0xff]
      %v654 = vld [vmem:[%s1 + $0x1c0] sm:$0xff]
      %v655 = vld [vmem:[%s1 + $0x1c8] sm:$0xff]
      %v656 = vld [vmem:[%s1 + $0x1d0] sm:$0xff]
      %v657 = vld [vmem:[%s1 + $0x1d8] sm:$0xff]
      %v658 = vld [vmem:[%s1 + $0x1e0] sm:$0xff]
      %v659 = vld [vmem:[%s1 + $0x1e8] sm:$0xff]
      %v660 = vld [vmem:[%s1 + $0x1f0] sm:$0xff]
      %v661 = vld [vmem:[%s1 + $0x1f8] sm:$0xff]
      %v662 = vld [vmem:[%s1 + $0x200] sm:$0xff]
      %v663 = vld [vmem:[%s1 + $0x208] sm:$0xff]
      %v664 = vld [vmem:[%s1 + $0x210] sm:$0xff]
      %v665 = vld [vmem:[%s1 + $0x218] sm:$0xff]
      %v666 = vld [vmem:[%s1 + $0x220] sm:$0xff]
      %v667 = vld [vmem:[%s1 + $0x228] sm:$0xff]
      %v668 = vld [vmem:[%s1 + $0x230] sm:$0xff]
      %v669 = vld [vmem:[%s1 + $0x238] sm:$0xff]
      %v670 = vld [vmem:[%s1 + $0x240] sm:$0xff]
      %v671 = vld [vmem:[%s1 + $0x248] sm:$0xff]
      %v672 = vld [vmem:[%s1 + $0x250] sm:$0xff]
      %v673 = vld [vmem:[%s1 + $0x258] sm:$0xff]
      %v674 = vld [vmem:[%s1 + $0x260] sm:$0xff]
      %v675 = vld [vmem:[%s1 + $0x268] sm:$0xff]
      %v676 = vld [vmem:[%s1 + $0x270] sm:$0xff]
      %v677 = vld [vmem:[%s1 + $0x278] sm:$0xff]
      %v678 = vld [vmem:[%s1 + $0x280] sm:$0xff]
      %v679 = vld [vmem:[%s1 + $0x288] sm:$0xff]
      %v680 = vld [vmem:[%s1 + $0x290] sm:$0xff]
      %v681 = vld [vmem:[%s1 + $0x298] sm:$0xff]
      %v682 = vld [vmem:[%s1 + $0x2a0] sm:$0xff]
      %v683 = vld [vmem:[%s1 + $0x2a8] sm:$0xff]
      %v684 = vld [vmem:[%s1 + $0x2b0] sm:$0xff]
      %v685 = vld [vmem:[%s1 + $0x2b8] sm:$0xff]
      %v686 = vld [vmem:[%s1 + $0x2c0] sm:$0xff]
      %v687 = vld [vmem:[%s1 + $0x2c8] sm:$0xff]
      %v688 = vld [vmem:[%s1 + $0x2d0] sm:$0xff]
      %v689 = vld [vmem:[%s1 + $0x2d8] sm:$0xff]
      %v690 = vld [vmem:[%s1 + $0x2e0] sm:$0xff]
      %v691 = vld [vmem:[%s1 + $0x2e8] sm:$0xff]
      %v692 = vld [vmem:[%s1 + $0x2f0] sm:$0xff]
      %v693 = vld [vmem:[%s1 + $0x2f8] sm:$0xff]
      %v694 = vld [vmem:[%s1 + $0x300] sm:$0xff]
      %v695 = vld [vmem:[%s1 + $0x308] sm:$0xff]
      %v696 = vld [vmem:[%s1 + $0x310] sm:$0xff]
      %v697 = vld [vmem:[%s1 + $0x318] sm:$0xff]
      %v698 = vld [vmem:[%s1 + $0x320] sm:$0xff]
      %v699 = vld [vmem:[%s1 + $0x328] sm:$0xff]
      %v700 = vld [vmem:[%s1 + $0x330] sm:$0xff]
      %v701 = vld [vmem:[%s1 + $0x338] sm:$0xff]
      %v702 = vld [vmem:[%s1 + $0x340] sm:$0xff]
      %v703 = vld [vmem:[%s1 + $0x348] sm:$0xff]
      %v704 = vld [vmem:[%s1 + $0x350] sm:$0xff]
      %v705 = vld [vmem:[%s1 + $0x358] sm:$0xff]
      %v706 = vld [vmem:[%s1 + $0x360] sm:$0xff]
      %v707 = vld [vmem:[%s1 + $0x368] sm:$0xff]
      %v708 = vld [vmem:[%s1 + $0x370] sm:$0xff]
      %v709 = vld [vmem:[%s1 + $0x378] sm:$0xff]
      %v710 = vld [vmem:[%s1 + $0x380] sm:$0xff]
      %v711 = vld [vmem:[%s1 + $0x388] sm:$0xff]
      %v712 = vld [vmem:[%s1 + $0x390] sm:$0xff]
      %v713 = vld [vmem:[%s1 + $0x398] sm:$0xff]
      %v714 = vld [vmem:[%s1 + $0x3a0] sm:$0xff]
      %v715 = vld [vmem:[%s1 + $0x3a8] sm:$0xff]
      %v716 = vld [vmem:[%s1 + $0x3b0] sm:$0xff]
      %v717 = vld [vmem:[%s1 + $0x3b8] sm:$0xff]
      %v718 = vld [vmem:[%s1 + $0x3c0] sm:$0xff]
      %v719 = vld [vmem:[%s1 + $0x3c8] sm:$0xff]
      %v720 = vld [vmem:[%s1 + $0x3d0] sm:$0xff]
      %v721 = vld [vmem:[%s1 + $0x3d8] sm:$0xff]
      %v722 = vld [vmem:[%s1 + $0x3e0] sm:$0xff]
      %v723 = vld [vmem:[%s1 + $0x3e8] sm:$0xff]
      %v724 = vld [vmem:[%s1 + $0x3f0] sm:$0xff]
      %v725 = vld [vmem:[%s1 + $0x3f8] sm:$0xff]
      %v726 = vld [vmem:[%s1 + $0x400] sm:$0xff]
      %v727 = vld [vmem:[%s1 + $0x408] sm:$0xff]
      %v728 = vld [vmem:[%s1 + $0x410] sm:$0xff]
      %v729 = vld [vmem:[%s1 + $0x418] sm:$0xff]
      %v730 = vld [vmem:[%s1 + $0x420] sm:$0xff]
      %v731 = vld [vmem:[%s1 + $0x428] sm:$0xff]
      %v732 = vld [vmem:[%s1 + $0x430] sm:$0xff]
      %v733 = vld [vmem:[%s1 + $0x438] sm:$0xff]
      %v734 = vld [vmem:[%s1 + $0x440] sm:$0xff]
      %v735 = vld [vmem:[%s1 + $0x448] sm:$0xff]
      %v736 = vld [vmem:[%s1 + $0x450] sm:$0xff]
      %v737 = vld [vmem:[%s1 + $0x458] sm:$0xff]
      %v738 = vld [vmem:[%s1 + $0x460] sm:$0xff]
      %v739 = vld [vmem:[%s1 + $0x468] sm:$0xff]
      %v740 = vld [vmem:[%s1 + $0x470] sm:$0xff]
      %v741 = vld [vmem:[%s1 + $0x478] sm:$0xff]
      %742 = vmatprep.subr.mxu0 0.0
      %743 = vmatpush1.msra.mxu0 %v613
      %744 = vmatprep.subr.mxu0 0.0
      %745 = vmatpush1.msra.mxu0 %v612
      %746 = vmatprep.subr.mxu0 0.0
      %747 = vmatpush1.msra.mxu0 %v611
      %748 = vmatprep.subr.mxu0 0.0
      %749 = vmatpush1.msra.mxu0 %v610
      %750 = vmatprep.subr.mxu0 0.0
      %751 = vmatpush1.msra.mxu0 %v609
      %752 = vmatprep.subr.mxu0 0.0
      %753 = vmatpush1.msra.mxu0 %v608
      %754 = vmatprep.subr.mxu0 0.0
      %755 = vmatpush1.msra.mxu0 %v607
      %756 = vmatprep.subr.mxu0 0.0
      %757 = vmatpush1.msra.mxu0 %v606
      %758 = vmatprep.subr.mxu0 0.0
      %759 = vmatpush1.msra.mxu0 %v605
      %760 = vmatprep.subr.mxu0 0.0
      %761 = vmatpush1.msra.mxu0 %v604
      %762 = vmatprep.subr.mxu0 0.0
      %763 = vmatpush1.msra.mxu0 %v603
      %764 = vmatprep.subr.mxu0 0.0
      %765 = vmatpush1.msra.mxu0 %v602
      %766 = vmatprep.subr.mxu0 0.0
      %767 = vmatpush1.msra.mxu0 %v601
      %768 = vmatprep.subr.mxu0 0.0
      %769 = vmatpush1.msra.mxu0 %v600
      %770 = vmatprep.subr.mxu0 0.0
      %771 = vmatpush1.msra.mxu0 %v599
      %772 = vmatprep.subr.mxu0 0.0
      %773 = vmatpush1.msra.mxu0 %v598
      %774 = vmatprep.subr.mxu0 0.0
      %775 = vmatpush2.msra.mxu0 %v629
      %776 = vmatprep.subr.mxu0 0.0
      %777 = vmatpush2.msra.mxu0 %v628
      %778 = vmatprep.subr.mxu0 0.0
      %779 = vmatpush2.msra.mxu0 %v627
      %780 = vmatprep.subr.mxu0 0.0
      %781 = vmatpush2.msra.mxu0 %v626
      %782 = vmatprep.subr.mxu0 0.0
      %783 = vmatpush2.msra.mxu0 %v625
      %784 = vmatprep.subr.mxu0 0.0
      %785 = vmatpush2.msra.mxu0 %v624
      %786 = vmatprep.subr.mxu0 0.0
      %787 = vmatpush2.msra.mxu0 %v623
      %788 = vmatprep.subr.mxu0 0.0
      %789 = vmatpush2.msra.mxu0 %v622
      %790 = vmatprep.subr.mxu0 0.0
      %791 = vmatpush2.msra.mxu0 %v621
      %792 = vmatprep.subr.mxu0 0.0
      %793 = vmatpush2.msra.mxu0 %v620
      %794 = vmatprep.subr.mxu0 0.0
      %795 = vmatpush2.msra.mxu0 %v619
      %796 = vmatprep.subr.mxu0 0.0
      %797 = vmatpush2.msra.mxu0 %v618
      %798 = vmatprep.subr.mxu0 0.0
      %799 = vmatpush2.msra.mxu0 %v617
      %800 = vmatprep.subr.mxu0 0.0
      %801 = vmatpush2.msra.mxu0 %v616
      %802 = vmatprep.subr.mxu0 0.0
      %803 = vmatpush2.msra.mxu0 %v615
      %804 = vmatprep.subr.mxu0 0.0
      %805 = vmatpush2.msra.mxu0 %v614
      %806 = vmatprep.mubr.f32.mxu0 %v341
      %807 = vmatmul.mubr.f32.gmra.mxu0 %v236
      %v808 = vpop.f32.mrf.mxu0
      %v809 = vadd.f32 0.0, %v808
      %v810 = vpop.f32.mrf.mxu0
      %811 = vmatprep.mubr.f32.mxu0 %v343
      %812 = vmatmul.mubr.f32.gmra.mxu0 %v237
      %v813 = vpop.f32.mrf.mxu0
      %v814 = vadd.f32 0.0, %v813
      %v815 = vpop.f32.mrf.mxu0
      %816 = vmatprep.mubr.f32.mxu0 %v346
      %817 = vmatmul.mubr.f32.gmra.mxu0 %v239
      %v818 = vpop.f32.mrf.mxu0
      %v819 = vadd.f32 0.0, %v818
      %v820 = vpop.f32.mrf.mxu0
      %821 = vmatprep.mubr.f32.mxu0 %v348
      %822 = vmatmul.mubr.f32.gmra.mxu0 %v240
      %v823 = vpop.f32.mrf.mxu0
      %v824 = vadd.f32 0.0, %v823
      %v825 = vpop.f32.mrf.mxu0
      %826 = vmatprep.mubr.f32.mxu0 %v351
      %827 = vmatmul.mubr.f32.gmra.mxu0 %v242
      %v828 = vpop.f32.mrf.mxu0
      %v829 = vadd.f32 0.0, %v828
      %v830 = vpop.f32.mrf.mxu0
      %831 = vmatprep.mubr.f32.mxu0 %v353
      %832 = vmatmul.mubr.f32.gmra.mxu0 %v243
      %v833 = vpop.f32.mrf.mxu0
      %v834 = vadd.f32 0.0, %v833
      %v835 = vpop.f32.mrf.mxu0
      %836 = vmatprep.mubr.f32.mxu0 %v356
      %837 = vmatmul.mubr.f32.gmra.mxu0 %v245
      %v838 = vpop.f32.mrf.mxu0
      %v839 = vadd.f32 0.0, %v838
      %v840 = vpop.f32.mrf.mxu0
      %841 = vmatprep.mubr.f32.mxu0 %v358
      %842 = vmatmul.mubr.f32.gmra.mxu0 %v246
      %v843 = vpop.f32.mrf.mxu0
      %v844 = vadd.f32 0.0, %v843
      %v845 = vpop.f32.mrf.mxu0
      %846 = vmatprep.mubr.f32.mxu0 %v361
      %847 = vmatmul.mubr.f32.gmra.mxu0 %v248
      %v848 = vpop.f32.mrf.mxu0
      %v849 = vadd.f32 0.0, %v848
      %v850 = vpop.f32.mrf.mxu0
      %851 = vmatprep.mubr.f32.mxu0 %v363
      %852 = vmatmul.mubr.f32.gmra.mxu0 %v249
      %v853 = vpop.f32.mrf.mxu0
      %v854 = vadd.f32 0.0, %v853
      %v855 = vpop.f32.mrf.mxu0
      %856 = vmatprep.mubr.f32.mxu0 %v366
      %857 = vmatmul.mubr.f32.gmra.mxu0 %v251
      %v858 = vpop.f32.mrf.mxu0
      %v859 = vadd.f32 0.0, %v858
      %v860 = vpop.f32.mrf.mxu0
      %861 = vmatprep.mubr.f32.mxu0 %v368
      %862 = vmatmul.mubr.f32.gmra.mxu0 %v252
      %v863 = vpop.f32.mrf.mxu0
      %v864 = vadd.f32 0.0, %v863
      %v865 = vpop.f32.mrf.mxu0
      %866 = vmatprep.mubr.f32.mxu0 %v371
      %867 = vmatmul.mubr.f32.gmra.mxu0 %v254
      %v868 = vpop.f32.mrf.mxu0
      %v869 = vadd.f32 0.0, %v868
      %v870 = vpop.f32.mrf.mxu0
      %871 = vmatprep.mubr.f32.mxu0 %v373
      %872 = vmatmul.mubr.f32.gmra.mxu0 %v255
      %v873 = vpop.f32.mrf.mxu0
      %v874 = vadd.f32 0.0, %v873
      %v875 = vpop.f32.mrf.mxu0
      %876 = vmatprep.mubr.f32.mxu0 %v376
      %877 = vmatmul.mubr.f32.gmra.mxu0 %v257
      %v878 = vpop.f32.mrf.mxu0
      %v879 = vadd.f32 0.0, %v878
      %v880 = vpop.f32.mrf.mxu0
      %881 = vmatprep.mubr.f32.mxu0 %v378
      %882 = vmatmul.mubr.f32.gmra.mxu0 %v258
      %v883 = vpop.f32.mrf.mxu0
      %v884 = vadd.f32 0.0, %v883
      %v885 = vpop.f32.mrf.mxu0
      %886 = vmatprep.mubr.f32.mxu0 %v381
      %887 = vmatmul.mubr.f32.gmra.mxu0 %v260
      %v888 = vpop.f32.mrf.mxu0
      %v889 = vadd.f32 0.0, %v888
      %v890 = vpop.f32.mrf.mxu0
      %891 = vmatprep.mubr.f32.mxu0 %v383
      %892 = vmatmul.mubr.f32.gmra.mxu0 %v261
      %v893 = vpop.f32.mrf.mxu0
      %v894 = vadd.f32 0.0, %v893
      %v895 = vpop.f32.mrf.mxu0
      %896 = vmatprep.mubr.f32.mxu0 %v386
      %897 = vmatmul.mubr.f32.gmra.mxu0 %v263
      %v898 = vpop.f32.mrf.mxu0
      %v899 = vadd.f32 0.0, %v898
      %v900 = vpop.f32.mrf.mxu0
      %901 = vmatprep.mubr.f32.mxu0 %v388
      %902 = vmatmul.mubr.f32.gmra.mxu0 %v264
      %v903 = vpop.f32.mrf.mxu0
      %v904 = vadd.f32 0.0, %v903
      %v905 = vpop.f32.mrf.mxu0
      %906 = vmatprep.mubr.f32.mxu0 %v391
      %907 = vmatmul.mubr.f32.gmra.mxu0 %v266
      %v908 = vpop.f32.mrf.mxu0
      %v909 = vadd.f32 0.0, %v908
      %v910 = vpop.f32.mrf.mxu0
      %911 = vmatprep.mubr.f32.mxu0 %v393
      %912 = vmatmul.mubr.f32.gmra.mxu0 %v267
      %v913 = vpop.f32.mrf.mxu0
      %v914 = vadd.f32 0.0, %v913
      %v915 = vpop.f32.mrf.mxu0
      %916 = vmatprep.mubr.f32.mxu0 %v396
      %917 = vmatmul.mubr.f32.gmra.mxu0 %v269
      %v918 = vpop.f32.mrf.mxu0
      %v919 = vadd.f32 0.0, %v918
      %v920 = vpop.f32.mrf.mxu0
      %921 = vmatprep.mubr.f32.mxu0 %v398
      %922 = vmatmul.mubr.f32.gmra.mxu0 %v270
      %v923 = vpop.f32.mrf.mxu0
      %v924 = vadd.f32 0.0, %v923
      %v925 = vpop.f32.mrf.mxu0
      %926 = vmatprep.mubr.f32.mxu0 %v401
      %927 = vmatmul.mubr.f32.gmra.mxu0 %v272
      %v928 = vpop.f32.mrf.mxu0
      %v929 = vadd.f32 0.0, %v928
      %v930 = vpop.f32.mrf.mxu0
      %931 = vmatprep.mubr.f32.mxu0 %v403
      %932 = vmatmul.mubr.f32.gmra.mxu0 %v273
      %v933 = vpop.f32.mrf.mxu0
      %v934 = vadd.f32 0.0, %v933
      %v935 = vpop.f32.mrf.mxu0
      %936 = vmatprep.mubr.f32.mxu0 %v406
      %937 = vmatmul.mubr.f32.gmra.mxu0 %v275
      %v938 = vpop.f32.mrf.mxu0
      %v939 = vadd.f32 0.0, %v938
      %v940 = vpop.f32.mrf.mxu0
      %941 = vmatprep.mubr.f32.mxu0 %v408
      %942 = vmatmul.mubr.f32.gmra.mxu0 %v276
      %v943 = vpop.f32.mrf.mxu0
      %v944 = vadd.f32 0.0, %v943
      %v945 = vpop.f32.mrf.mxu0
      %946 = vmatprep.mubr.f32.mxu0 %v411
      %947 = vmatmul.mubr.f32.gmra.mxu0 %v278
      %v948 = vpop.f32.mrf.mxu0
      %v949 = vadd.f32 0.0, %v948
      %v950 = vpop.f32.mrf.mxu0
      %951 = vmatprep.mubr.f32.mxu0 %v413
      %952 = vmatmul.mubr.f32.gmra.mxu0 %v279
      %v953 = vpop.f32.mrf.mxu0
      %v954 = vadd.f32 0.0, %v953
      %v955 = vpop.f32.mrf.mxu0
      %956 = vmatprep.mubr.f32.mxu0 %v416
      %957 = vmatmul.mubr.f32.gmra.mxu0 %v281
      %v958 = vpop.f32.mrf.mxu0
      %v959 = vadd.f32 0.0, %v958
      %v960 = vpop.f32.mrf.mxu0
      %961 = vmatprep.mubr.f32.mxu0 %v418
      %962 = vmatmul.mubr.f32.gmra.mxu0 %v282
      %v963 = vpop.f32.mrf.mxu0
      %v964 = vadd.f32 0.0, %v963
      %v965 = vpop.f32.mrf.mxu0
      %966 = vdwg.mxu0
      %967 = vmatprep.subr.mxu0 0.0
      %968 = vmatpush1.msra.mxu0 %v645
      %969 = vmatprep.subr.mxu0 0.0
      %970 = vmatpush1.msra.mxu0 %v644
      %971 = vmatprep.subr.mxu0 0.0
      %972 = vmatpush1.msra.mxu0 %v643
      %973 = vmatprep.subr.mxu0 0.0
      %974 = vmatpush1.msra.mxu0 %v642
      %975 = vmatprep.subr.mxu0 0.0
      %976 = vmatpush1.msra.mxu0 %v641
      %977 = vmatprep.subr.mxu0 0.0
      %978 = vmatpush1.msra.mxu0 %v640
      %979 = vmatprep.subr.mxu0 0.0
      %980 = vmatpush1.msra.mxu0 %v639
      %981 = vmatprep.subr.mxu0 0.0
      %982 = vmatpush1.msra.mxu0 %v638
      %983 = vmatprep.subr.mxu0 0.0
      %984 = vmatpush1.msra.mxu0 %v637
      %985 = vmatprep.subr.mxu0 0.0
      %986 = vmatpush1.msra.mxu0 %v636
      %987 = vmatprep.subr.mxu0 0.0
      %988 = vmatpush1.msra.mxu0 %v635
      %989 = vmatprep.subr.mxu0 0.0
      %990 = vmatpush1.msra.mxu0 %v634
      %991 = vmatprep.subr.mxu0 0.0
      %992 = vmatpush1.msra.mxu0 %v633
      %993 = vmatprep.subr.mxu0 0.0
      %994 = vmatpush1.msra.mxu0 %v632
      %995 = vmatprep.subr.mxu0 0.0
      %996 = vmatpush1.msra.mxu0 %v631
      %997 = vmatprep.subr.mxu0 0.0
      %998 = vmatpush1.msra.mxu0 %v630
      %999 = vmatprep.subr.mxu0 0.0
      %1000 = vmatpush2.msra.mxu0 %v661
      %1001 = vmatprep.subr.mxu0 0.0
      %1002 = vmatpush2.msra.mxu0 %v660
      %1003 = vmatprep.subr.mxu0 0.0
      %1004 = vmatpush2.msra.mxu0 %v659
      %1005 = vmatprep.subr.mxu0 0.0
      %1006 = vmatpush2.msra.mxu0 %v658
      %1007 = vmatprep.subr.mxu0 0.0
      %1008 = vmatpush2.msra.mxu0 %v657
      %1009 = vmatprep.subr.mxu0 0.0
      %1010 = vmatpush2.msra.mxu0 %v656
      %1011 = vmatprep.subr.mxu0 0.0
      %1012 = vmatpush2.msra.mxu0 %v655
      %1013 = vmatprep.subr.mxu0 0.0
      %1014 = vmatpush2.msra.mxu0 %v654
      %1015 = vmatprep.subr.mxu0 0.0
      %1016 = vmatpush2.msra.mxu0 %v653
      %1017 = vmatprep.subr.mxu0 0.0
      %1018 = vmatpush2.msra.mxu0 %v652
      %1019 = vmatprep.subr.mxu0 0.0
      %1020 = vmatpush2.msra.mxu0 %v651
      %1021 = vmatprep.subr.mxu0 0.0
      %1022 = vmatpush2.msra.mxu0 %v650
      %1023 = vmatprep.subr.mxu0 0.0
      %1024 = vmatpush2.msra.mxu0 %v649
      %1025 = vmatprep.subr.mxu0 0.0
      %1026 = vmatpush2.msra.mxu0 %v648
      %1027 = vmatprep.subr.mxu0 0.0
      %1028 = vmatpush2.msra.mxu0 %v647
      %1029 = vmatprep.subr.mxu0 0.0
      %1030 = vmatpush2.msra.mxu0 %v646
      %1031 = vmatprep.mubr.f32.mxu0 %v239
      %1032 = vmatmul.mubr.f32.gmra.mxu0 %v454
      %v1033 = vpop.f32.mrf.mxu0
      %v1034 = vadd.f32 %v809, %v1033
      %v1035 = vpop.f32.mrf.mxu0
      %1036 = vmatprep.mubr.f32.mxu0 %v240
      %1037 = vmatmul.mubr.f32.gmra.mxu0 %v456
      %v1038 = vpop.f32.mrf.mxu0
      %v1039 = vadd.f32 %v814, %v1038
      %v1040 = vpop.f32.mrf.mxu0
      %1041 = vmatprep.mubr.f32.mxu0 %v242
      %1042 = vmatmul.mubr.f32.gmra.mxu0 %v459
      %v1043 = vpop.f32.mrf.mxu0
      %v1044 = vadd.f32 %v819, %v1043
      %v1045 = vpop.f32.mrf.mxu0
      %1046 = vmatprep.mubr.f32.mxu0 %v243
      %1047 = vmatmul.mubr.f32.gmra.mxu0 %v461
      %v1048 = vpop.f32.mrf.mxu0
      %v1049 = vadd.f32 %v824, %v1048
      %v1050 = vpop.f32.mrf.mxu0
      %1051 = vmatprep.mubr.f32.mxu0 %v245
      %1052 = vmatmul.mubr.f32.gmra.mxu0 %v464
      %v1053 = vpop.f32.mrf.mxu0
      %v1054 = vadd.f32 %v829, %v1053
      %v1055 = vpop.f32.mrf.mxu0
      %1056 = vmatprep.mubr.f32.mxu0 %v246
      %1057 = vmatmul.mubr.f32.gmra.mxu0 %v466
      %v1058 = vpop.f32.mrf.mxu0
      %v1059 = vadd.f32 %v834, %v1058
      %v1060 = vpop.f32.mrf.mxu0
      %1061 = vmatprep.mubr.f32.mxu0 %v248
      %1062 = vmatmul.mubr.f32.gmra.mxu0 %v469
      %v1063 = vpop.f32.mrf.mxu0
      %v1064 = vadd.f32 %v839, %v1063
      %v1065 = vpop.f32.mrf.mxu0
      %1066 = vmatprep.mubr.f32.mxu0 %v249
      %1067 = vmatmul.mubr.f32.gmra.mxu0 %v471
      %v1068 = vpop.f32.mrf.mxu0
      %v1069 = vadd.f32 %v844, %v1068
      %v1070 = vpop.f32.mrf.mxu0
      %1071 = vmatprep.mubr.f32.mxu0 %v251
      %1072 = vmatmul.mubr.f32.gmra.mxu0 %v474
      %v1073 = vpop.f32.mrf.mxu0
      %v1074 = vadd.f32 %v849, %v1073
      %v1075 = vpop.f32.mrf.mxu0
      %1076 = vmatprep.mubr.f32.mxu0 %v252
      %1077 = vmatmul.mubr.f32.gmra.mxu0 %v476
      %v1078 = vpop.f32.mrf.mxu0
      %v1079 = vadd.f32 %v854, %v1078
      %v1080 = vpop.f32.mrf.mxu0
      %1081 = vmatprep.mubr.f32.mxu0 %v254
      %1082 = vmatmul.mubr.f32.gmra.mxu0 %v479
      %v1083 = vpop.f32.mrf.mxu0
      %v1084 = vadd.f32 %v859, %v1083
      %v1085 = vpop.f32.mrf.mxu0
      %1086 = vmatprep.mubr.f32.mxu0 %v255
      %1087 = vmatmul.mubr.f32.gmra.mxu0 %v481
      %v1088 = vpop.f32.mrf.mxu0
      %v1089 = vadd.f32 %v864, %v1088
      %v1090 = vpop.f32.mrf.mxu0
      %1091 = vmatprep.mubr.f32.mxu0 %v257
      %1092 = vmatmul.mubr.f32.gmra.mxu0 %v484
      %v1093 = vpop.f32.mrf.mxu0
      %v1094 = vadd.f32 %v869, %v1093
      %v1095 = vpop.f32.mrf.mxu0
      %1096 = vmatprep.mubr.f32.mxu0 %v258
      %1097 = vmatmul.mubr.f32.gmra.mxu0 %v486
      %v1098 = vpop.f32.mrf.mxu0
      %v1099 = vadd.f32 %v874, %v1098
      %v1100 = vpop.f32.mrf.mxu0
      %1101 = vmatprep.mubr.f32.mxu0 %v260
      %1102 = vmatmul.mubr.f32.gmra.mxu0 %v489
      %v1103 = vpop.f32.mrf.mxu0
      %v1104 = vadd.f32 %v879, %v1103
      %v1105 = vpop.f32.mrf.mxu0
      %1106 = vmatprep.mubr.f32.mxu0 %v261
      %1107 = vmatmul.mubr.f32.gmra.mxu0 %v491
      %v1108 = vpop.f32.mrf.mxu0
      %v1109 = vadd.f32 %v884, %v1108
      %v1110 = vpop.f32.mrf.mxu0
      %1111 = vmatprep.mubr.f32.mxu0 %v263
      %1112 = vmatmul.mubr.f32.gmra.mxu0 %v494
      %v1113 = vpop.f32.mrf.mxu0
      %v1114 = vadd.f32 %v889, %v1113
      %v1115 = vpop.f32.mrf.mxu0
      %1116 = vmatprep.mubr.f32.mxu0 %v264
      %1117 = vmatmul.mubr.f32.gmra.mxu0 %v496
      %v1118 = vpop.f32.mrf.mxu0
      %v1119 = vadd.f32 %v894, %v1118
      %v1120 = vpop.f32.mrf.mxu0
      %1121 = vmatprep.mubr.f32.mxu0 %v266
      %1122 = vmatmul.mubr.f32.gmra.mxu0 %v499
      %v1123 = vpop.f32.mrf.mxu0
      %v1124 = vadd.f32 %v899, %v1123
      %v1125 = vpop.f32.mrf.mxu0
      %1126 = vmatprep.mubr.f32.mxu0 %v267
      %1127 = vmatmul.mubr.f32.gmra.mxu0 %v501
      %v1128 = vpop.f32.mrf.mxu0
      %v1129 = vadd.f32 %v904, %v1128
      %v1130 = vpop.f32.mrf.mxu0
      %1131 = vmatprep.mubr.f32.mxu0 %v269
      %1132 = vmatmul.mubr.f32.gmra.mxu0 %v504
      %v1133 = vpop.f32.mrf.mxu0
      %v1134 = vadd.f32 %v909, %v1133
      %v1135 = vpop.f32.mrf.mxu0
      %1136 = vmatprep.mubr.f32.mxu0 %v270
      %1137 = vmatmul.mubr.f32.gmra.mxu0 %v506
      %v1138 = vpop.f32.mrf.mxu0
      %v1139 = vadd.f32 %v914, %v1138
      %v1140 = vpop.f32.mrf.mxu0
      %1141 = vmatprep.mubr.f32.mxu0 %v272
      %1142 = vmatmul.mubr.f32.gmra.mxu0 %v509
      %v1143 = vpop.f32.mrf.mxu0
      %v1144 = vadd.f32 %v919, %v1143
      %v1145 = vpop.f32.mrf.mxu0
      %1146 = vmatprep.mubr.f32.mxu0 %v273
      %1147 = vmatmul.mubr.f32.gmra.mxu0 %v511
      %v1148 = vpop.f32.mrf.mxu0
      %v1149 = vadd.f32 %v924, %v1148
      %v1150 = vpop.f32.mrf.mxu0
      %1151 = vmatprep.mubr.f32.mxu0 %v275
      %1152 = vmatmul.mubr.f32.gmra.mxu0 %v514
      %v1153 = vpop.f32.mrf.mxu0
      %v1154 = vadd.f32 %v929, %v1153
      %v1155 = vpop.f32.mrf.mxu0
      %1156 = vmatprep.mubr.f32.mxu0 %v276
      %1157 = vmatmul.mubr.f32.gmra.mxu0 %v516
      %v1158 = vpop.f32.mrf.mxu0
      %v1159 = vadd.f32 %v934, %v1158
      %v1160 = vpop.f32.mrf.mxu0
      %1161 = vmatprep.mubr.f32.mxu0 %v278
      %1162 = vmatmul.mubr.f32.gmra.mxu0 %v519
      %v1163 = vpop.f32.mrf.mxu0
      %v1164 = vadd.f32 %v939, %v1163
      %v1165 = vpop.f32.mrf.mxu0
      %1166 = vmatprep.mubr.f32.mxu0 %v279
      %1167 = vmatmul.mubr.f32.gmra.mxu0 %v521
      %v1168 = vpop.f32.mrf.mxu0
      %v1169 = vadd.f32 %v944, %v1168
      %v1170 = vpop.f32.mrf.mxu0
      %1171 = vmatprep.mubr.f32.mxu0 %v281
      %1172 = vmatmul.mubr.f32.gmra.mxu0 %v524
      %v1173 = vpop.f32.mrf.mxu0
      %v1174 = vadd.f32 %v949, %v1173
      %v1175 = vpop.f32.mrf.mxu0
      %1176 = vmatprep.mubr.f32.mxu0 %v282
      %1177 = vmatmul.mubr.f32.gmra.mxu0 %v526
      %v1178 = vpop.f32.mrf.mxu0
      %v1179 = vadd.f32 %v954, %v1178
      %v1180 = vpop.f32.mrf.mxu0
      %1181 = vmatprep.mubr.f32.mxu0 %v284
      %1182 = vmatmul.mubr.f32.gmra.mxu0 %v529
      %v1183 = vpop.f32.mrf.mxu0
      %v1184 = vadd.f32 %v959, %v1183
      %v1185 = vpop.f32.mrf.mxu0
      %1186 = vmatprep.mubr.f32.mxu0 %v285
      %1187 = vmatmul.mubr.f32.gmra.mxu0 %v531
      %v1188 = vpop.f32.mrf.mxu0
      %v1189 = vadd.f32 %v964, %v1188
      %v1190 = vpop.f32.mrf.mxu0
      %1191 = vdwg.mxu0
      %1192 = vmatprep.subr.mxu0 0.0
      %1193 = vmatpush1.msra.mxu0 %v677
      %1194 = vmatprep.subr.mxu0 0.0
      %1195 = vmatpush1.msra.mxu0 %v676
      %1196 = vmatprep.subr.mxu0 0.0
      %1197 = vmatpush1.msra.mxu0 %v675
      %1198 = vmatprep.subr.mxu0 0.0
      %1199 = vmatpush1.msra.mxu0 %v674
      %1200 = vmatprep.subr.mxu0 0.0
      %1201 = vmatpush1.msra.mxu0 %v673
      %1202 = vmatprep.subr.mxu0 0.0
      %1203 = vmatpush1.msra.mxu0 %v672
      %1204 = vmatprep.subr.mxu0 0.0
      %1205 = vmatpush1.msra.mxu0 %v671
      %1206 = vmatprep.subr.mxu0 0.0
      %1207 = vmatpush1.msra.mxu0 %v670
      %1208 = vmatprep.subr.mxu0 0.0
      %1209 = vmatpush1.msra.mxu0 %v669
      %1210 = vmatprep.subr.mxu0 0.0
      %1211 = vmatpush1.msra.mxu0 %v668
      %1212 = vmatprep.subr.mxu0 0.0
      %1213 = vmatpush1.msra.mxu0 %v667
      %1214 = vmatprep.subr.mxu0 0.0
      %1215 = vmatpush1.msra.mxu0 %v666
      %1216 = vmatprep.subr.mxu0 0.0
      %1217 = vmatpush1.msra.mxu0 %v665
      %1218 = vmatprep.subr.mxu0 0.0
      %1219 = vmatpush1.msra.mxu0 %v664
      %1220 = vmatprep.subr.mxu0 0.0
      %1221 = vmatpush1.msra.mxu0 %v663
      %1222 = vmatprep.subr.mxu0 0.0
      %1223 = vmatpush1.msra.mxu0 %v662
      %1224 = vmatprep.subr.mxu0 0.0
      %1225 = vmatpush2.msra.mxu0 %v693
      %1226 = vmatprep.subr.mxu0 0.0
      %1227 = vmatpush2.msra.mxu0 %v692
      %1228 = vmatprep.subr.mxu0 0.0
      %1229 = vmatpush2.msra.mxu0 %v691
      %1230 = vmatprep.subr.mxu0 0.0
      %1231 = vmatpush2.msra.mxu0 %v690
      %1232 = vmatprep.subr.mxu0 0.0
      %1233 = vmatpush2.msra.mxu0 %v689
      %1234 = vmatprep.subr.mxu0 0.0
      %1235 = vmatpush2.msra.mxu0 %v688
      %1236 = vmatprep.subr.mxu0 0.0
      %1237 = vmatpush2.msra.mxu0 %v687
      %1238 = vmatprep.subr.mxu0 0.0
      %1239 = vmatpush2.msra.mxu0 %v686
      %1240 = vmatprep.subr.mxu0 0.0
      %1241 = vmatpush2.msra.mxu0 %v685
      %1242 = vmatprep.subr.mxu0 0.0
      %1243 = vmatpush2.msra.mxu0 %v684
      %1244 = vmatprep.subr.mxu0 0.0
      %1245 = vmatpush2.msra.mxu0 %v683
      %1246 = vmatprep.subr.mxu0 0.0
      %1247 = vmatpush2.msra.mxu0 %v682
      %1248 = vmatprep.subr.mxu0 0.0
      %1249 = vmatpush2.msra.mxu0 %v681
      %1250 = vmatprep.subr.mxu0 0.0
      %1251 = vmatpush2.msra.mxu0 %v680
      %1252 = vmatprep.subr.mxu0 0.0
      %1253 = vmatpush2.msra.mxu0 %v679
      %1254 = vmatprep.subr.mxu0 0.0
      %1255 = vmatpush2.msra.mxu0 %v678
      %1256 = vmatprep.mubr.f32.mxu0 %v459
      %1257 = vmatmul.mubr.f32.gmra.mxu0 %v346
      %v1258 = vpop.f32.mrf.mxu0
      %v1259 = vadd.f32 %v1034, %v1258
      %v1260 = vpop.f32.mrf.mxu0
      %1261 = vmatprep.mubr.f32.mxu0 %v461
      %1262 = vmatmul.mubr.f32.gmra.mxu0 %v348
      %v1263 = vpop.f32.mrf.mxu0
      %v1264 = vadd.f32 %v1039, %v1263
      %v1265 = vpop.f32.mrf.mxu0
      %1266 = vmatprep.mubr.f32.mxu0 %v464
      %1267 = vmatmul.mubr.f32.gmra.mxu0 %v351
      %v1268 = vpop.f32.mrf.mxu0
      %v1269 = vadd.f32 %v1044, %v1268
      %v1270 = vpop.f32.mrf.mxu0
      %1271 = vmatprep.mubr.f32.mxu0 %v466
      %1272 = vmatmul.mubr.f32.gmra.mxu0 %v353
      %v1273 = vpop.f32.mrf.mxu0
      %v1274 = vadd.f32 %v1049, %v1273
      %v1275 = vpop.f32.mrf.mxu0
      %1276 = vmatprep.mubr.f32.mxu0 %v469
      %1277 = vmatmul.mubr.f32.gmra.mxu0 %v356
      %v1278 = vpop.f32.mrf.mxu0
      %v1279 = vadd.f32 %v1054, %v1278
      %v1280 = vpop.f32.mrf.mxu0
      %1281 = vmatprep.mubr.f32.mxu0 %v471
      %1282 = vmatmul.mubr.f32.gmra.mxu0 %v358
      %v1283 = vpop.f32.mrf.mxu0
      %v1284 = vadd.f32 %v1059, %v1283
      %v1285 = vpop.f32.mrf.mxu0
      %1286 = vmatprep.mubr.f32.mxu0 %v474
      %1287 = vmatmul.mubr.f32.gmra.mxu0 %v361
      %v1288 = vpop.f32.mrf.mxu0
      %v1289 = vadd.f32 %v1064, %v1288
      %v1290 = vpop.f32.mrf.mxu0
      %1291 = vmatprep.mubr.f32.mxu0 %v476
      %1292 = vmatmul.mubr.f32.gmra.mxu0 %v363
      %v1293 = vpop.f32.mrf.mxu0
      %v1294 = vadd.f32 %v1069, %v1293
      %v1295 = vpop.f32.mrf.mxu0
      %1296 = vmatprep.mubr.f32.mxu0 %v479
      %1297 = vmatmul.mubr.f32.gmra.mxu0 %v366
      %v1298 = vpop.f32.mrf.mxu0
      %v1299 = vadd.f32 %v1074, %v1298
      %v1300 = vpop.f32.mrf.mxu0
      %1301 = vmatprep.mubr.f32.mxu0 %v481
      %1302 = vmatmul.mubr.f32.gmra.mxu0 %v368
      %v1303 = vpop.f32.mrf.mxu0
      %v1304 = vadd.f32 %v1079, %v1303
      %v1305 = vpop.f32.mrf.mxu0
      %1306 = vmatprep.mubr.f32.mxu0 %v484
      %1307 = vmatmul.mubr.f32.gmra.mxu0 %v371
      %v1308 = vpop.f32.mrf.mxu0
      %v1309 = vadd.f32 %v1084, %v1308
      %v1310 = vpop.f32.mrf.mxu0
      %1311 = vmatprep.mubr.f32.mxu0 %v486
      %1312 = vmatmul.mubr.f32.gmra.mxu0 %v373
      %v1313 = vpop.f32.mrf.mxu0
      %v1314 = vadd.f32 %v1089, %v1313
      %v1315 = vpop.f32.mrf.mxu0
      %1316 = vmatprep.mubr.f32.mxu0 %v489
      %1317 = vmatmul.mubr.f32.gmra.mxu0 %v376
      %v1318 = vpop.f32.mrf.mxu0
      %v1319 = vadd.f32 %v1094, %v1318
      %v1320 = vpop.f32.mrf.mxu0
      %1321 = vmatprep.mubr.f32.mxu0 %v491
      %1322 = vmatmul.mubr.f32.gmra.mxu0 %v378
      %v1323 = vpop.f32.mrf.mxu0
      %v1324 = vadd.f32 %v1099, %v1323
      %v1325 = vpop.f32.mrf.mxu0
      %1326 = vmatprep.mubr.f32.mxu0 %v494
      %1327 = vmatmul.mubr.f32.gmra.mxu0 %v381
      %v1328 = vpop.f32.mrf.mxu0
      %v1329 = vadd.f32 %v1104, %v1328
      %v1330 = vpop.f32.mrf.mxu0
      %1331 = vmatprep.mubr.f32.mxu0 %v496
      %1332 = vmatmul.mubr.f32.gmra.mxu0 %v383
      %v1333 = vpop.f32.mrf.mxu0
      %v1334 = vadd.f32 %v1109, %v1333
      %v1335 = vpop.f32.mrf.mxu0
      %1336 = vmatprep.mubr.f32.mxu0 %v499
      %1337 = vmatmul.mubr.f32.gmra.mxu0 %v386
      %v1338 = vpop.f32.mrf.mxu0
      %v1339 = vadd.f32 %v1114, %v1338
      %v1340 = vpop.f32.mrf.mxu0
      %1341 = vmatprep.mubr.f32.mxu0 %v501
      %1342 = vmatmul.mubr.f32.gmra.mxu0 %v388
      %v1343 = vpop.f32.mrf.mxu0
      %v1344 = vadd.f32 %v1119, %v1343
      %v1345 = vpop.f32.mrf.mxu0
      %1346 = vmatprep.mubr.f32.mxu0 %v504
      %1347 = vmatmul.mubr.f32.gmra.mxu0 %v391
      %v1348 = vpop.f32.mrf.mxu0
      %v1349 = vadd.f32 %v1124, %v1348
      %v1350 = vpop.f32.mrf.mxu0
      %1351 = vmatprep.mubr.f32.mxu0 %v506
      %1352 = vmatmul.mubr.f32.gmra.mxu0 %v393
      %v1353 = vpop.f32.mrf.mxu0
      %v1354 = vadd.f32 %v1129, %v1353
      %v1355 = vpop.f32.mrf.mxu0
      %1356 = vmatprep.mubr.f32.mxu0 %v509
      %1357 = vmatmul.mubr.f32.gmra.mxu0 %v396
      %v1358 = vpop.f32.mrf.mxu0
      %v1359 = vadd.f32 %v1134, %v1358
      %v1360 = vpop.f32.mrf.mxu0
      %1361 = vmatprep.mubr.f32.mxu0 %v511
      %1362 = vmatmul.mubr.f32.gmra.mxu0 %v398
      %v1363 = vpop.f32.mrf.mxu0
      %v1364 = vadd.f32 %v1139, %v1363
      %v1365 = vpop.f32.mrf.mxu0
      %1366 = vmatprep.mubr.f32.mxu0 %v514
      %1367 = vmatmul.mubr.f32.gmra.mxu0 %v401
      %v1368 = vpop.f32.mrf.mxu0
      %v1369 = vadd.f32 %v1144, %v1368
      %v1370 = vpop.f32.mrf.mxu0
      %1371 = vmatprep.mubr.f32.mxu0 %v516
      %1372 = vmatmul.mubr.f32.gmra.mxu0 %v403
      %v1373 = vpop.f32.mrf.mxu0
      %v1374 = vadd.f32 %v1149, %v1373
      %v1375 = vpop.f32.mrf.mxu0
      %1376 = vmatprep.mubr.f32.mxu0 %v519
      %1377 = vmatmul.mubr.f32.gmra.mxu0 %v406
      %v1378 = vpop.f32.mrf.mxu0
      %v1379 = vadd.f32 %v1154, %v1378
      %v1380 = vpop.f32.mrf.mxu0
      %1381 = vmatprep.mubr.f32.mxu0 %v521
      %1382 = vmatmul.mubr.f32.gmra.mxu0 %v408
      %v1383 = vpop.f32.mrf.mxu0
      %v1384 = vadd.f32 %v1159, %v1383
      %v1385 = vpop.f32.mrf.mxu0
      %1386 = vmatprep.mubr.f32.mxu0 %v524
      %1387 = vmatmul.mubr.f32.gmra.mxu0 %v411
      %v1388 = vpop.f32.mrf.mxu0
      %v1389 = vadd.f32 %v1164, %v1388
      %v1390 = vpop.f32.mrf.mxu0
      %1391 = vmatprep.mubr.f32.mxu0 %v526
      %1392 = vmatmul.mubr.f32.gmra.mxu0 %v413
      %v1393 = vpop.f32.mrf.mxu0
      %v1394 = vadd.f32 %v1169, %v1393
      %v1395 = vpop.f32.mrf.mxu0
      %1396 = vmatprep.mubr.f32.mxu0 %v529
      %1397 = vmatmul.mubr.f32.gmra.mxu0 %v416
      %v1398 = vpop.f32.mrf.mxu0
      %v1399 = vadd.f32 %v1174, %v1398
      %v1400 = vpop.f32.mrf.mxu0
      %1401 = vmatprep.mubr.f32.mxu0 %v531
      %1402 = vmatmul.mubr.f32.gmra.mxu0 %v418
      %v1403 = vpop.f32.mrf.mxu0
      %v1404 = vadd.f32 %v1179, %v1403
      %v1405 = vpop.f32.mrf.mxu0
      %1406 = vmatprep.mubr.f32.mxu0 %v576
      %1407 = vmatmul.mubr.f32.gmra.mxu0 %v569
      %v1408 = vpop.f32.mrf.mxu0
      %v1409 = vadd.f32 %v1184, %v1408
      %v1410 = vpop.f32.mrf.mxu0
      %1411 = vmatprep.mubr.f32.mxu0 %v578
      %1412 = vmatmul.mubr.f32.gmra.mxu0 %v571
      %v1413 = vpop.f32.mrf.mxu0
      %v1414 = vadd.f32 %v1189, %v1413
      %v1415 = vpop.f32.mrf.mxu0
      %1416 = vdwg.mxu0
      %1417 = vmatprep.subr.mxu0 0.0
      %1418 = vmatpush1.msra.mxu0 %v709
      %1419 = vmatprep.subr.mxu0 0.0
      %1420 = vmatpush1.msra.mxu0 %v708
      %1421 = vmatprep.subr.mxu0 0.0
      %1422 = vmatpush1.msra.mxu0 %v707
      %1423 = vmatprep.subr.mxu0 0.0
      %1424 = vmatpush1.msra.mxu0 %v706
      %1425 = vmatprep.subr.mxu0 0.0
      %1426 = vmatpush1.msra.mxu0 %v705
      %1427 = vmatprep.subr.mxu0 0.0
      %1428 = vmatpush1.msra.mxu0 %v704
      %1429 = vmatprep.subr.mxu0 0.0
      %1430 = vmatpush1.msra.mxu0 %v703
      %1431 = vmatprep.subr.mxu0 0.0
      %1432 = vmatpush1.msra.mxu0 %v702
      %1433 = vmatprep.subr.mxu0 0.0
      %1434 = vmatpush1.msra.mxu0 %v701
      %1435 = vmatprep.subr.mxu0 0.0
      %1436 = vmatpush1.msra.mxu0 %v700
      %1437 = vmatprep.subr.mxu0 0.0
      %1438 = vmatpush1.msra.mxu0 %v699
      %1439 = vmatprep.subr.mxu0 0.0
      %1440 = vmatpush1.msra.mxu0 %v698
      %1441 = vmatprep.subr.mxu0 0.0
      %1442 = vmatpush1.msra.mxu0 %v697
      %1443 = vmatprep.subr.mxu0 0.0
      %1444 = vmatpush1.msra.mxu0 %v696
      %1445 = vmatprep.subr.mxu0 0.0
      %1446 = vmatpush1.msra.mxu0 %v695
      %1447 = vmatprep.subr.mxu0 0.0
      %1448 = vmatpush1.msra.mxu0 %v694
      %1449 = vmatprep.subr.mxu0 0.0
      %1450 = vmatpush2.msra.mxu0 %v725
      %1451 = vmatprep.subr.mxu0 0.0
      %1452 = vmatpush2.msra.mxu0 %v724
      %1453 = vmatprep.subr.mxu0 0.0
      %1454 = vmatpush2.msra.mxu0 %v723
      %1455 = vmatprep.subr.mxu0 0.0
      %1456 = vmatpush2.msra.mxu0 %v722
      %1457 = vmatprep.subr.mxu0 0.0
      %1458 = vmatpush2.msra.mxu0 %v721
      %1459 = vmatprep.subr.mxu0 0.0
      %1460 = vmatpush2.msra.mxu0 %v720
      %1461 = vmatprep.subr.mxu0 0.0
      %1462 = vmatpush2.msra.mxu0 %v719
      %1463 = vmatprep.subr.mxu0 0.0
      %1464 = vmatpush2.msra.mxu0 %v718
      %1465 = vmatprep.subr.mxu0 0.0
      %1466 = vmatpush2.msra.mxu0 %v717
      %1467 = vmatprep.subr.mxu0 0.0
      %1468 = vmatpush2.msra.mxu0 %v716
      %1469 = vmatprep.subr.mxu0 0.0
      %1470 = vmatpush2.msra.mxu0 %v715
      %1471 = vmatprep.subr.mxu0 0.0
      %1472 = vmatpush2.msra.mxu0 %v714
      %1473 = vmatprep.subr.mxu0 0.0
      %1474 = vmatpush2.msra.mxu0 %v713
      %1475 = vmatprep.subr.mxu0 0.0
      %1476 = vmatpush2.msra.mxu0 %v712
      %1477 = vmatprep.subr.mxu0 0.0
      %1478 = vmatpush2.msra.mxu0 %v711
      %1479 = vmatprep.subr.mxu0 0.0
      %1480 = vmatpush2.msra.mxu0 %v710
      %1481 = vmatprep.mubr.f32.mxu0 %v351
      %1482 = vmatmul.mubr.f32.gmra.mxu0 %v242
      %v1483 = vpop.f32.mrf.mxu0
      %v1484 = vadd.f32 %v1259, %v1483
      %v1485 = vpop.f32.mrf.mxu0
      %1486 = vmatprep.mubr.f32.mxu0 %v353
      %1487 = vmatmul.mubr.f32.gmra.mxu0 %v243
      %v1488 = vpop.f32.mrf.mxu0
      %v1489 = vadd.f32 %v1264, %v1488
      %v1490 = vpop.f32.mrf.mxu0
      %1491 = vmatprep.mubr.f32.mxu0 %v356
      %1492 = vmatmul.mubr.f32.gmra.mxu0 %v245
      %v1493 = vpop.f32.mrf.mxu0
      %v1494 = vadd.f32 %v1269, %v1493
      %v1495 = vpop.f32.mrf.mxu0
      %1496 = vmatprep.mubr.f32.mxu0 %v358
      %1497 = vmatmul.mubr.f32.gmra.mxu0 %v246
      %v1498 = vpop.f32.mrf.mxu0
      %v1499 = vadd.f32 %v1274, %v1498
      %v1500 = vpop.f32.mrf.mxu0
      %1501 = vmatprep.mubr.f32.mxu0 %v361
      %1502 = vmatmul.mubr.f32.gmra.mxu0 %v248
      %v1503 = vpop.f32.mrf.mxu0
      %v1504 = vadd.f32 %v1279, %v1503
      %v1505 = vpop.f32.mrf.mxu0
      %1506 = vmatprep.mubr.f32.mxu0 %v363
      %1507 = vmatmul.mubr.f32.gmra.mxu0 %v249
      %v1508 = vpop.f32.mrf.mxu0
      %v1509 = vadd.f32 %v1284, %v1508
      %v1510 = vpop.f32.mrf.mxu0
      %1511 = vmatprep.mubr.f32.mxu0 %v366
      %1512 = vmatmul.mubr.f32.gmra.mxu0 %v251
      %v1513 = vpop.f32.mrf.mxu0
      %v1514 = vadd.f32 %v1289, %v1513
      %v1515 = vpop.f32.mrf.mxu0
      %1516 = vmatprep.mubr.f32.mxu0 %v368
      %1517 = vmatmul.mubr.f32.gmra.mxu0 %v252
      %v1518 = vpop.f32.mrf.mxu0
      %v1519 = vadd.f32 %v1294, %v1518
      %v1520 = vpop.f32.mrf.mxu0
      %1521 = vmatprep.mubr.f32.mxu0 %v371
      %1522 = vmatmul.mubr.f32.gmra.mxu0 %v254
      %v1523 = vpop.f32.mrf.mxu0
      %v1524 = vadd.f32 %v1299, %v1523
      %v1525 = vpop.f32.mrf.mxu0
      %1526 = vmatprep.mubr.f32.mxu0 %v373
      %1527 = vmatmul.mubr.f32.gmra.mxu0 %v255
      %v1528 = vpop.f32.mrf.mxu0
      %v1529 = vadd.f32 %v1304, %v1528
      %v1530 = vpop.f32.mrf.mxu0
      %1531 = vmatprep.mubr.f32.mxu0 %v376
      %1532 = vmatmul.mubr.f32.gmra.mxu0 %v257
      %v1533 = vpop.f32.mrf.mxu0
      %v1534 = vadd.f32 %v1309, %v1533
      %v1535 = vpop.f32.mrf.mxu0
      %1536 = vmatprep.mubr.f32.mxu0 %v378
      %1537 = vmatmul.mubr.f32.gmra.mxu0 %v258
      %v1538 = vpop.f32.mrf.mxu0
      %v1539 = vadd.f32 %v1314, %v1538
      %v1540 = vpop.f32.mrf.mxu0
      %1541 = vmatprep.mubr.f32.mxu0 %v381
      %1542 = vmatmul.mubr.f32.gmra.mxu0 %v260
      %v1543 = vpop.f32.mrf.mxu0
      %v1544 = vadd.f32 %v1319, %v1543
      %v1545 = vpop.f32.mrf.mxu0
      %1546 = vmatprep.mubr.f32.mxu0 %v383
      %1547 = vmatmul.mubr.f32.gmra.mxu0 %v261
      %v1548 = vpop.f32.mrf.mxu0
      %v1549 = vadd.f32 %v1324, %v1548
      %v1550 = vpop.f32.mrf.mxu0
      %1551 = vmatprep.mubr.f32.mxu0 %v386
      %1552 = vmatmul.mubr.f32.gmra.mxu0 %v263
      %v1553 = vpop.f32.mrf.mxu0
      %v1554 = vadd.f32 %v1329, %v1553
      %v1555 = vpop.f32.mrf.mxu0
      %1556 = vmatprep.mubr.f32.mxu0 %v388
      %1557 = vmatmul.mubr.f32.gmra.mxu0 %v264
      %v1558 = vpop.f32.mrf.mxu0
      %v1559 = vadd.f32 %v1334, %v1558
      %v1560 = vpop.f32.mrf.mxu0
      %1561 = vmatprep.mubr.f32.mxu0 %v391
      %1562 = vmatmul.mubr.f32.gmra.mxu0 %v266
      %v1563 = vpop.f32.mrf.mxu0
      %v1564 = vadd.f32 %v1339, %v1563
      %v1565 = vpop.f32.mrf.mxu0
      %1566 = vmatprep.mubr.f32.mxu0 %v393
      %1567 = vmatmul.mubr.f32.gmra.mxu0 %v267
      %v1568 = vpop.f32.mrf.mxu0
      %v1569 = vadd.f32 %v1344, %v1568
      %v1570 = vpop.f32.mrf.mxu0
      %1571 = vmatprep.mubr.f32.mxu0 %v396
      %1572 = vmatmul.mubr.f32.gmra.mxu0 %v269
      %v1573 = vpop.f32.mrf.mxu0
      %v1574 = vadd.f32 %v1349, %v1573
      %v1575 = vpop.f32.mrf.mxu0
      %1576 = vmatprep.mubr.f32.mxu0 %v398
      %1577 = vmatmul.mubr.f32.gmra.mxu0 %v270
      %v1578 = vpop.f32.mrf.mxu0
      %v1579 = vadd.f32 %v1354, %v1578
      %v1580 = vpop.f32.mrf.mxu0
      %1581 = vmatprep.mubr.f32.mxu0 %v401
      %1582 = vmatmul.mubr.f32.gmra.mxu0 %v272
      %v1583 = vpop.f32.mrf.mxu0
      %v1584 = vadd.f32 %v1359, %v1583
      %v1585 = vpop.f32.mrf.mxu0
      %1586 = vmatprep.mubr.f32.mxu0 %v403
      %1587 = vmatmul.mubr.f32.gmra.mxu0 %v273
      %v1588 = vpop.f32.mrf.mxu0
      %v1589 = vadd.f32 %v1364, %v1588
      %v1590 = vpop.f32.mrf.mxu0
      %1591 = vmatprep.mubr.f32.mxu0 %v406
      %1592 = vmatmul.mubr.f32.gmra.mxu0 %v275
      %v1593 = vpop.f32.mrf.mxu0
      %v1594 = vadd.f32 %v1369, %v1593
      %v1595 = vpop.f32.mrf.mxu0
      %1596 = vmatprep.mubr.f32.mxu0 %v408
      %1597 = vmatmul.mubr.f32.gmra.mxu0 %v276
      %v1598 = vpop.f32.mrf.mxu0
      %v1599 = vadd.f32 %v1374, %v1598
      %v1600 = vpop.f32.mrf.mxu0
      %1601 = vmatprep.mubr.f32.mxu0 %v411
      %1602 = vmatmul.mubr.f32.gmra.mxu0 %v278
      %v1603 = vpop.f32.mrf.mxu0
      %v1604 = vadd.f32 %v1379, %v1603
      %v1605 = vpop.f32.mrf.mxu0
      %1606 = vmatprep.mubr.f32.mxu0 %v413
      %1607 = vmatmul.mubr.f32.gmra.mxu0 %v279
      %v1608 = vpop.f32.mrf.mxu0
      %v1609 = vadd.f32 %v1384, %v1608
      %v1610 = vpop.f32.mrf.mxu0
      %1611 = vmatprep.mubr.f32.mxu0 %v416
      %1612 = vmatmul.mubr.f32.gmra.mxu0 %v281
      %v1613 = vpop.f32.mrf.mxu0
      %v1614 = vadd.f32 %v1389, %v1613
      %v1615 = vpop.f32.mrf.mxu0
      %1616 = vmatprep.mubr.f32.mxu0 %v418
      %1617 = vmatmul.mubr.f32.gmra.mxu0 %v282
      %v1618 = vpop.f32.mrf.mxu0
      %v1619 = vadd.f32 %v1394, %v1618
      %v1620 = vpop.f32.mrf.mxu0
      %1621 = vmatprep.mubr.f32.mxu0 %v569
      %1622 = vmatmul.mubr.f32.gmra.mxu0 %v284
      %v1623 = vpop.f32.mrf.mxu0
      %v1624 = vadd.f32 %v1399, %v1623
      %v1625 = vpop.f32.mrf.mxu0
      %1626 = vmatprep.mubr.f32.mxu0 %v571
      %1627 = vmatmul.mubr.f32.gmra.mxu0 %v285
      %v1628 = vpop.f32.mrf.mxu0
      %v1629 = vadd.f32 %v1404, %v1628
      %v1630 = vpop.f32.mrf.mxu0
      %1631 = vmatprep.mubr.f32.mxu0 %v586
      %1632 = vmatmul.mubr.f32.gmra.mxu0 %v287
      %v1633 = vpop.f32.mrf.mxu0
      %v1634 = vadd.f32 %v1409, %v1633
      %v1635 = vpop.f32.mrf.mxu0
      %1636 = vmatprep.mubr.f32.mxu0 %v588
      %1637 = vmatmul.mubr.f32.gmra.mxu0 %v288
      %v1638 = vpop.f32.mrf.mxu0
      %v1639 = vadd.f32 %v1414, %v1638
      %v1640 = vpop.f32.mrf.mxu0
      %1641 = vdwg.mxu0
      %1642 = vmatprep.subr.mxu0 0.0
      %1643 = vmatpush1.msra.mxu0 %v741
      %1644 = vmatprep.subr.mxu0 0.0
      %1645 = vmatpush1.msra.mxu0 %v740
      %1646 = vmatprep.subr.mxu0 0.0
      %1647 = vmatpush1.msra.mxu0 %v739
      %1648 = vmatprep.subr.mxu0 0.0
      %1649 = vmatpush1.msra.mxu0 %v738
      %1650 = vmatprep.subr.mxu0 0.0
      %1651 = vmatpush1.msra.mxu0 %v737
      %1652 = vmatprep.subr.mxu0 0.0
      %1653 = vmatpush1.msra.mxu0 %v736
      %1654 = vmatprep.subr.mxu0 0.0
      %1655 = vmatpush1.msra.mxu0 %v735
      %1656 = vmatprep.subr.mxu0 0.0
      %1657 = vmatpush1.msra.mxu0 %v734
      %1658 = vmatprep.subr.mxu0 0.0
      %1659 = vmatpush1.msra.mxu0 %v733
      %1660 = vmatprep.subr.mxu0 0.0
      %1661 = vmatpush1.msra.mxu0 %v732
      %1662 = vmatprep.subr.mxu0 0.0
      %1663 = vmatpush1.msra.mxu0 %v731
      %1664 = vmatprep.subr.mxu0 0.0
      %1665 = vmatpush1.msra.mxu0 %v730
      %1666 = vmatprep.subr.mxu0 0.0
      %1667 = vmatpush1.msra.mxu0 %v729
      %1668 = vmatprep.subr.mxu0 0.0
      %1669 = vmatpush1.msra.mxu0 %v728
      %1670 = vmatprep.subr.mxu0 0.0
      %1671 = vmatpush1.msra.mxu0 %v727
      %1672 = vmatprep.subr.mxu0 0.0
      %1673 = vmatpush1.msra.mxu0 %v726
      %1674 = vmatprep.subr.mxu0 0.0
      %1675 = vmatpush2.msra.mxu0 0.0
      %1676 = vmatprep.subr.mxu0 0.0
      %1677 = vmatpush2.msra.mxu0 0.0
      %1678 = vmatprep.subr.mxu0 0.0
      %1679 = vmatpush2.msra.mxu0 0.0
      %1680 = vmatprep.subr.mxu0 0.0
      %1681 = vmatpush2.msra.mxu0 0.0
      %1682 = vmatprep.subr.mxu0 0.0
      %1683 = vmatpush2.msra.mxu0 0.0
      %1684 = vmatprep.subr.mxu0 0.0
      %1685 = vmatpush2.msra.mxu0 0.0
      %1686 = vmatprep.subr.mxu0 0.0
      %1687 = vmatpush2.msra.mxu0 0.0
      %1688 = vmatprep.subr.mxu0 0.0
      %1689 = vmatpush2.msra.mxu0 0.0
      %1690 = vmatprep.subr.mxu0 0.0
      %1691 = vmatpush2.msra.mxu0 0.0
      %1692 = vmatprep.subr.mxu0 0.0
      %1693 = vmatpush2.msra.mxu0 0.0
      %1694 = vmatprep.subr.mxu0 0.0
      %1695 = vmatpush2.msra.mxu0 0.0
      %1696 = vmatprep.subr.mxu0 0.0
      %1697 = vmatpush2.msra.mxu0 0.0
      %1698 = vmatprep.subr.mxu0 0.0
      %1699 = vmatpush2.msra.mxu0 0.0
      %1700 = vmatprep.subr.mxu0 0.0
      %1701 = vmatpush2.msra.mxu0 0.0
      %1702 = vmatprep.subr.mxu0 0.0
      %1703 = vmatpush2.msra.mxu0 0.0
      %1704 = vmatprep.subr.mxu0 0.0
      %1705 = vmatpush2.msra.mxu0 0.0
      %1706 = vmatprep.mubr.f32.mxu0 0.0
      %1707 = vmatmul.mubr.f32.gmra.mxu0 %v464
      %v1708 = vpop.f32.mrf.mxu0
      %v1709 = vadd.f32 %v1484, %v1708
      %v1710 = vpop.f32.mrf.mxu0
      %1711 = vmatprep.mubr.f32.mxu0 0.0
      %1712 = vmatmul.mubr.f32.gmra.mxu0 %v466
      %v1713 = vpop.f32.mrf.mxu0
      %v1714 = vadd.f32 %v1489, %v1713
      %v1715 = vpop.f32.mrf.mxu0
      %1716 = vmatprep.mubr.f32.mxu0 0.0
      %1717 = vmatmul.mubr.f32.gmra.mxu0 %v469
      %v1718 = vpop.f32.mrf.mxu0
      %v1719 = vadd.f32 %v1494, %v1718
      %v1720 = vpop.f32.mrf.mxu0
      %1721 = vmatprep.mubr.f32.mxu0 0.0
      %1722 = vmatmul.mubr.f32.gmra.mxu0 %v471
      %v1723 = vpop.f32.mrf.mxu0
      %v1724 = vadd.f32 %v1499, %v1723
      %v1725 = vpop.f32.mrf.mxu0
      %1726 = vmatprep.mubr.f32.mxu0 0.0
      %1727 = vmatmul.mubr.f32.gmra.mxu0 %v474
      %v1728 = vpop.f32.mrf.mxu0
      %v1729 = vadd.f32 %v1504, %v1728
      %v1730 = vpop.f32.mrf.mxu0
      %1731 = vmatprep.mubr.f32.mxu0 0.0
      %1732 = vmatmul.mubr.f32.gmra.mxu0 %v476
      %v1733 = vpop.f32.mrf.mxu0
      %v1734 = vadd.f32 %v1509, %v1733
      %v1735 = vpop.f32.mrf.mxu0
      %1736 = vmatprep.mubr.f32.mxu0 0.0
      %1737 = vmatmul.mubr.f32.gmra.mxu0 %v479
      %v1738 = vpop.f32.mrf.mxu0
      %v1739 = vadd.f32 %v1514, %v1738
      %v1740 = vpop.f32.mrf.mxu0
      %1741 = vmatprep.mubr.f32.mxu0 0.0
      %1742 = vmatmul.mubr.f32.gmra.mxu0 %v481
      %v1743 = vpop.f32.mrf.mxu0
      %v1744 = vadd.f32 %v1519, %v1743
      %v1745 = vpop.f32.mrf.mxu0
      %1746 = vmatprep.mubr.f32.mxu0 0.0
      %1747 = vmatmul.mubr.f32.gmra.mxu0 %v484
      %v1748 = vpop.f32.mrf.mxu0
      %v1749 = vadd.f32 %v1524, %v1748
      %v1750 = vpop.f32.mrf.mxu0
      %1751 = vmatprep.mubr.f32.mxu0 0.0
      %1752 = vmatmul.mubr.f32.gmra.mxu0 %v486
      %v1753 = vpop.f32.mrf.mxu0
      %v1754 = vadd.f32 %v1529, %v1753
      %v1755 = vpop.f32.mrf.mxu0
      %1756 = vmatprep.mubr.f32.mxu0 0.0
      %1757 = vmatmul.mubr.f32.gmra.mxu0 %v489
      %v1758 = vpop.f32.mrf.mxu0
      %v1759 = vadd.f32 %v1534, %v1758
      %v1760 = vpop.f32.mrf.mxu0
      %1761 = vmatprep.mubr.f32.mxu0 0.0
      %1762 = vmatmul.mubr.f32.gmra.mxu0 %v491
      %v1763 = vpop.f32.mrf.mxu0
      %v1764 = vadd.f32 %v1539, %v1763
      %v1765 = vpop.f32.mrf.mxu0
      %1766 = vmatprep.mubr.f32.mxu0 0.0
      %1767 = vmatmul.mubr.f32.gmra.mxu0 %v494
      %v1768 = vpop.f32.mrf.mxu0
      %v1769 = vadd.f32 %v1544, %v1768
      %v1770 = vpop.f32.mrf.mxu0
      %1771 = vmatprep.mubr.f32.mxu0 0.0
      %1772 = vmatmul.mubr.f32.gmra.mxu0 %v496
      %v1773 = vpop.f32.mrf.mxu0
      %v1774 = vadd.f32 %v1549, %v1773
      %v1775 = vpop.f32.mrf.mxu0
      %1776 = vmatprep.mubr.f32.mxu0 0.0
      %1777 = vmatmul.mubr.f32.gmra.mxu0 %v499
      %v1778 = vpop.f32.mrf.mxu0
      %v1779 = vadd.f32 %v1554, %v1778
      %v1780 = vpop.f32.mrf.mxu0
      %1781 = vmatprep.mubr.f32.mxu0 0.0
      %1782 = vmatmul.mubr.f32.gmra.mxu0 %v501
      %v1783 = vpop.f32.mrf.mxu0
      %v1784 = vadd.f32 %v1559, %v1783
      %v1785 = vpop.f32.mrf.mxu0
      %1786 = vmatprep.mubr.f32.mxu0 0.0
      %1787 = vmatmul.mubr.f32.gmra.mxu0 %v504
      %v1788 = vpop.f32.mrf.mxu0
      %v1789 = vadd.f32 %v1564, %v1788
      %v1790 = vpop.f32.mrf.mxu0
      %1791 = vmatprep.mubr.f32.mxu0 0.0
      %1792 = vmatmul.mubr.f32.gmra.mxu0 %v506
      %v1793 = vpop.f32.mrf.mxu0
      %v1794 = vadd.f32 %v1569, %v1793
      %v1795 = vpop.f32.mrf.mxu0
      %1796 = vmatprep.mubr.f32.mxu0 0.0
      %1797 = vmatmul.mubr.f32.gmra.mxu0 %v509
      %v1798 = vpop.f32.mrf.mxu0
      %v1799 = vadd.f32 %v1574, %v1798
      %v1800 = vpop.f32.mrf.mxu0
      %1801 = vmatprep.mubr.f32.mxu0 0.0
      %1802 = vmatmul.mubr.f32.gmra.mxu0 %v511
      %v1803 = vpop.f32.mrf.mxu0
      %v1804 = vadd.f32 %v1579, %v1803
      %v1805 = vpop.f32.mrf.mxu0
      %1806 = vmatprep.mubr.f32.mxu0 0.0
      %1807 = vmatmul.mubr.f32.gmra.mxu0 %v514
      %v1808 = vpop.f32.mrf.mxu0
      %v1809 = vadd.f32 %v1584, %v1808
      %v1810 = vpop.f32.mrf.mxu0
      %1811 = vmatprep.mubr.f32.mxu0 0.0
      %1812 = vmatmul.mubr.f32.gmra.mxu0 %v516
      %v1813 = vpop.f32.mrf.mxu0
      %v1814 = vadd.f32 %v1589, %v1813
      %v1815 = vpop.f32.mrf.mxu0
      %1816 = vmatprep.mubr.f32.mxu0 0.0
      %1817 = vmatmul.mubr.f32.gmra.mxu0 %v519
      %v1818 = vpop.f32.mrf.mxu0
      %v1819 = vadd.f32 %v1594, %v1818
      %v1820 = vpop.f32.mrf.mxu0
      %1821 = vmatprep.mubr.f32.mxu0 0.0
      %1822 = vmatmul.mubr.f32.gmra.mxu0 %v521
      %v1823 = vpop.f32.mrf.mxu0
      %v1824 = vadd.f32 %v1599, %v1823
      %v1825 = vpop.f32.mrf.mxu0
      %1826 = vmatprep.mubr.f32.mxu0 0.0
      %1827 = vmatmul.mubr.f32.gmra.mxu0 %v524
      %v1828 = vpop.f32.mrf.mxu0
      %v1829 = vadd.f32 %v1604, %v1828
      %v1830 = vpop.f32.mrf.mxu0
      %1831 = vmatprep.mubr.f32.mxu0 0.0
      %1832 = vmatmul.mubr.f32.gmra.mxu0 %v526
      %v1833 = vpop.f32.mrf.mxu0
      %v1834 = vadd.f32 %v1609, %v1833
      %v1835 = vpop.f32.mrf.mxu0
      %1836 = vmatprep.mubr.f32.mxu0 0.0
      %1837 = vmatmul.mubr.f32.gmra.mxu0 %v529
      %v1838 = vpop.f32.mrf.mxu0
      %v1839 = vadd.f32 %v1614, %v1838
      %v1840 = vpop.f32.mrf.mxu0
      %1841 = vmatprep.mubr.f32.mxu0 0.0
      %1842 = vmatmul.mubr.f32.gmra.mxu0 %v531
      %v1843 = vpop.f32.mrf.mxu0
      %v1844 = vadd.f32 %v1619, %v1843
      %v1845 = vpop.f32.mrf.mxu0
      %1846 = vmatprep.mubr.f32.mxu0 0.0
      %1847 = vmatmul.mubr.f32.gmra.mxu0 %v576
      %v1848 = vpop.f32.mrf.mxu0
      %v1849 = vadd.f32 %v1624, %v1848
      %v1850 = vpop.f32.mrf.mxu0
      %1851 = vmatprep.mubr.f32.mxu0 0.0
      %1852 = vmatmul.mubr.f32.gmra.mxu0 %v578
      %v1853 = vpop.f32.mrf.mxu0
      %v1854 = vadd.f32 %v1629, %v1853
      %v1855 = vpop.f32.mrf.mxu0
      %1856 = vmatprep.mubr.f32.mxu0 0.0
      %1857 = vmatmul.mubr.f32.gmra.mxu0 %v593
      %v1858 = vpop.f32.mrf.mxu0
      %v1859 = vadd.f32 %v1634, %v1858
      %v1860 = vpop.f32.mrf.mxu0
      %1861 = vmatprep.mubr.f32.mxu0 0.0
      %1862 = vmatmul.mubr.f32.gmra.mxu0 %v595
      %v1863 = vpop.f32.mrf.mxu0
      %v1864 = vadd.f32 %v1639, %v1863
      %v1865 = vpop.f32.mrf.mxu0
      %1866 = vdwg.mxu0
      %1867 = vst [vmem:[%s231] sm:$0xff] 0.0
      %1868 = vst [vmem:[%s231 + $0x8] sm:$0xff] 0.0
      %1869 = vst [vmem:[%s231 + $0x10] sm:$0x3] 0.0
      %1870 = vst [vmem:[%s231 + $0x18] sm:$0xff] 0.0
      %1871 = vst [vmem:[%s231 + $0x20] sm:$0xff] 0.0
      %1872 = vst [vmem:[%s231 + $0x28] sm:$0x3] 0.0
      %1873 = vst [vmem:[%s231 + $0x30] sm:$0xff] 0.0
      %1874 = vst [vmem:[%s231 + $0x38] sm:$0xff] 0.0
      %1875 = vst [vmem:[%s231 + $0x40] sm:$0x3] 0.0
      %1876 = vst [vmem:[%s231 + $0x48] sm:$0xff] 0.0
      %1877 = vst [vmem:[%s231 + $0x50] sm:$0xff] 0.0
      %1878 = vst [vmem:[%s231 + $0x58] sm:$0x3] 0.0
      %1879 = vst [vmem:[%s231 + $0x60] sm:$0xff] 0.0
      %1880 = vst [vmem:[%s231 + $0x68] sm:$0xff] 0.0
      %1881 = vst [vmem:[%s231 + $0x70] sm:$0x3] 0.0
      %1882 = vst [vmem:[%s231 + $0x78] sm:$0xff] 0.0
      %1883 = vst [vmem:[%s231 + $0x80] sm:$0xff] 0.0
      %1884 = vst [vmem:[%s231 + $0x88] sm:$0x3] 0.0
      %1885 = vst [vmem:[%s231 + $0x90] sm:$0xff] 0.0
      %1886 = vst [vmem:[%s231 + $0x98] sm:$0xff] 0.0
      %1887 = vst [vmem:[%s231 + $0xa0] sm:$0x3] 0.0
      %1888 = vst [vmem:[%s231 + $0xa8] sm:$0xff] 0.0
      %1889 = vst [vmem:[%s231 + $0xb0] sm:$0xff] 0.0
      %1890 = vst [vmem:[%s231 + $0xb8] sm:$0x3] 0.0
      %1891 = vst [vmem:[%s231 + $0xc0] sm:$0xff] 0.0
      %1892 = vst [vmem:[%s231 + $0xc8] sm:$0xff] 0.0
      %1893 = vst [vmem:[%s231 + $0xd0] sm:$0x3] 0.0
      %1894 = vst [vmem:[%s231 + $0xd8] sm:$0xff] 0.0
      %1895 = vst [vmem:[%s231 + $0xe0] sm:$0xff] 0.0
      %1896 = vst [vmem:[%s231 + $0xe8] sm:$0x3] 0.0
      %1897 = vst [vmem:[%s231 + $0xf0] sm:$0xff] 0.0
      %1898 = vst [vmem:[%s231 + $0xf8] sm:$0xff] 0.0
      %1899 = vst [vmem:[%s231 + $0x100] sm:$0x3] 0.0
      %1900 = vst [vmem:[%s231 + $0x108] sm:$0xff] 0.0
      %1901 = vst [vmem:[%s231 + $0x110] sm:$0xff] 0.0
      %1902 = vst [vmem:[%s231 + $0x118] sm:$0x3] 0.0
      %1903 = vst [vmem:[%s231 + $0x120] sm:$0xff] 0.0
      %1904 = vst [vmem:[%s231 + $0x128] sm:$0xff] 0.0
      %1905 = vst [vmem:[%s231 + $0x130] sm:$0x3] 0.0
      %1906 = vst [vmem:[%s231 + $0x138] sm:$0xff] 0.0
      %1907 = vst [vmem:[%s231 + $0x140] sm:$0xff] 0.0
      %1908 = vst [vmem:[%s231 + $0x148] sm:$0x3] 0.0
      %1909 = vst [vmem:[%s231 + $0x150] sm:$0xff] 0.0
      %1910 = vst [vmem:[%s231 + $0x158] sm:$0xff] 0.0
      %1911 = vst [vmem:[%s231 + $0x160] sm:$0x3] 0.0
      %1912 = vst [vmem:[%s231 + $0x168] sm:$0xff] 0.0
      %1913 = vst [vmem:[%s231 + $0x170] sm:$0xff] 0.0
      %1914 = vst [vmem:[%s231 + $0x178] sm:$0x3] 0.0
      %1915 = vst [vmem:[%s231 + $0x180] sm:$0xff] 0.0
      %1916 = vst [vmem:[%s231 + $0x188] sm:$0xff] 0.0
      %1917 = vst [vmem:[%s231 + $0x190] sm:$0x3] 0.0
      %1918 = vst [vmem:[%s231 + $0x198] sm:$0xff] 0.0
      %1919 = vst [vmem:[%s231 + $0x1a0] sm:$0xff] 0.0
      %1920 = vst [vmem:[%s231 + $0x1a8] sm:$0x3] 0.0
      %s1921 = scalar_lea.vmem %s231, 24
      %1922 = vst [vmem:[%s1921 + $0x1] sm:$0xff] %v1709
      %1923 = vst [vmem:[%s1921 + $0x9] sm:$0xff] %v1714
      %1924 = vst [vmem:[%s1921 + $0x19] sm:$0xff] %v1719
      %1925 = vst [vmem:[%s1921 + $0x21] sm:$0xff] %v1724
      %1926 = vst [vmem:[%s1921 + $0x31] sm:$0xff] %v1729
      %1927 = vst [vmem:[%s1921 + $0x39] sm:$0xff] %v1734
      %1928 = vst [vmem:[%s1921 + $0x49] sm:$0xff] %v1739
      %1929 = vst [vmem:[%s1921 + $0x51] sm:$0xff] %v1744
      %1930 = vst [vmem:[%s1921 + $0x61] sm:$0xff] %v1749
      %1931 = vst [vmem:[%s1921 + $0x69] sm:$0xff] %v1754
      %1932 = vst [vmem:[%s1921 + $0x79] sm:$0xff] %v1759
      %1933 = vst [vmem:[%s1921 + $0x81] sm:$0xff] %v1764
      %1934 = vst [vmem:[%s1921 + $0x91] sm:$0xff] %v1769
      %1935 = vst [vmem:[%s1921 + $0x99] sm:$0xff] %v1774
      %1936 = vst [vmem:[%s1921 + $0xa9] sm:$0xff] %v1779
      %1937 = vst [vmem:[%s1921 + $0xb1] sm:$0xff] %v1784
      %1938 = vst [vmem:[%s1921 + $0xc1] sm:$0xff] %v1789
      %1939 = vst [vmem:[%s1921 + $0xc9] sm:$0xff] %v1794
      %1940 = vst [vmem:[%s1921 + $0xd9] sm:$0xff] %v1799
      %1941 = vst [vmem:[%s1921 + $0xe1] sm:$0xff] %v1804
      %1942 = vst [vmem:[%s1921 + $0xf1] sm:$0xff] %v1809
      %1943 = vst [vmem:[%s1921 + $0xf9] sm:$0xff] %v1814
      %1944 = vst [vmem:[%s1921 + $0x109] sm:$0xff] %v1819
      %1945 = vst [vmem:[%s1921 + $0x111] sm:$0xff] %v1824
      %1946 = vst [vmem:[%s1921 + $0x121] sm:$0xff] %v1829
      %1947 = vst [vmem:[%s1921 + $0x129] sm:$0xff] %v1834
      %1948 = vst [vmem:[%s1921 + $0x139] sm:$0xff] %v1839
      %1949 = vst [vmem:[%s1921 + $0x141] sm:$0xff] %v1844
      %1950 = vst [vmem:[%s1921 + $0x151] sm:$0xff] %v1849
      %1951 = vst [vmem:[%s1921 + $0x159] sm:$0xff] %v1854
      %1952 = vst [vmem:[%s1921 + $0x169] sm:$0xff] %v1859
      %1953 = vst [vmem:[%s1921 + $0x171] sm:$0xff] %v1864
      %v1954 = vadd.f32 %v1709, %v1714
      %v1955 = vadd.f32 %v1954, %v1719
      %v1956 = vadd.f32 %v1955, %v1724
      %v1957 = vadd.f32 %v1956, %v1729
      %v1958 = vadd.f32 %v1957, %v1734
      %v1959 = vadd.f32 %v1958, %v1739
      %v1960 = vadd.f32 %v1959, %v1744
      %v1961 = vadd.f32 %v1960, %v1749
      %v1962 = vadd.f32 %v1961, %v1754
      %v1963 = vadd.f32 %v1962, %v1759
      %v1964 = vadd.f32 %v1963, %v1764
      %v1965 = vadd.f32 %v1964, %v1769
      %v1966 = vadd.f32 %v1965, %v1774
      %v1967 = vadd.f32 %v1966, %v1779
      %v1968 = vadd.f32 %v1967, %v1784
      %v1969 = vadd.f32 %v1968, %v1789
      %v1970 = vadd.f32 %v1969, %v1794
      %v1971 = vadd.f32 %v1970, %v1799
      %v1972 = vadd.f32 %v1971, %v1804
      %v1973 = vadd.f32 %v1972, %v1809
      %v1974 = vadd.f32 %v1973, %v1814
      %v1975 = vadd.f32 %v1974, %v1819
      %v1976 = vadd.f32 %v1975, %v1824
      %v1977 = vadd.f32 %v1976, %v1829
      %v1978 = vadd.f32 %v1977, %v1834
      %v1979 = vadd.f32 %v1978, %v1839
      %v1980 = vadd.f32 %v1979, %v1844
      %v1981 = vadd.f32 %v1980, %v1849
      %v1982 = vadd.f32 %v1981, %v1854
      %v1983 = vadd.f32 %v1982, %v1859
      %v1984 = vadd.f32 %v1983, %v1864
      %v1985 = vrot.slane %v1984, 4
      %v1986 = vadd.f32 %v1984, %v1985
      %v1987 = vrot.slane %v1986, 2
      %v1988 = vadd.f32 %v1986, %v1987
      %v1989 = vrot.slane %v1988, 1
      %v1990 = vadd.f32 %v1988, %v1989
      %1991 = vst [vmem:[%s235] sm:$0x1] %v1990
      %v1992 = vmul.f32 %v1709, %v1709
      %v1993 = vmul.f32 %v1714, %v1714
      %v1994 = vmul.f32 %v1719, %v1719
      %v1995 = vmul.f32 %v1724, %v1724
      %v1996 = vmul.f32 %v1729, %v1729
      %v1997 = vmul.f32 %v1734, %v1734
      %v1998 = vmul.f32 %v1739, %v1739
      %v1999 = vmul.f32 %v1744, %v1744
      %v2000 = vmul.f32 %v1749, %v1749
      %v2001 = vmul.f32 %v1754, %v1754
      %v2002 = vmul.f32 %v1759, %v1759
      %v2003 = vmul.f32 %v1764, %v1764
      %v2004 = vmul.f32 %v1769, %v1769
      %v2005 = vmul.f32 %v1774, %v1774
      %v2006 = vmul.f32 %v1779, %v1779
      %v2007 = vmul.f32 %v1784, %v1784
      %v2008 = vmul.f32 %v1789, %v1789
      %v2009 = vmul.f32 %v1794, %v1794
      %v2010 = vmul.f32 %v1799, %v1799
      %v2011 = vmul.f32 %v1804, %v1804
      %v2012 = vmul.f32 %v1809, %v1809
      %v2013 = vmul.f32 %v1814, %v1814
      %v2014 = vmul.f32 %v1819, %v1819
      %v2015 = vmul.f32 %v1824, %v1824
      %v2016 = vmul.f32 %v1829, %v1829
      %v2017 = vmul.f32 %v1834, %v1834
      %v2018 = vmul.f32 %v1839, %v1839
      %v2019 = vmul.f32 %v1844, %v1844
      %v2020 = vmul.f32 %v1849, %v1849
      %v2021 = vmul.f32 %v1854, %v1854
      %v2022 = vmul.f32 %v1859, %v1859
      %v2023 = vmul.f32 %v1864, %v1864
      %v2024 = vadd.f32 %v1992, %v1993
      %v2025 = vadd.f32 %v2024, %v1994
      %v2026 = vadd.f32 %v2025, %v1995
      %v2027 = vadd.f32 %v2026, %v1996
      %v2028 = vadd.f32 %v2027, %v1997
      %v2029 = vadd.f32 %v2028, %v1998
      %v2030 = vadd.f32 %v2029, %v1999
      %v2031 = vadd.f32 %v2030, %v2000
      %v2032 = vadd.f32 %v2031, %v2001
      %v2033 = vadd.f32 %v2032, %v2002
      %v2034 = vadd.f32 %v2033, %v2003
      %v2035 = vadd.f32 %v2034, %v2004
      %v2036 = vadd.f32 %v2035, %v2005
      %v2037 = vadd.f32 %v2036, %v2006
      %v2038 = vadd.f32 %v2037, %v2007
      %v2039 = vadd.f32 %v2038, %v2008
      %v2040 = vadd.f32 %v2039, %v2009
      %v2041 = vadd.f32 %v2040, %v2010
      %v2042 = vadd.f32 %v2041, %v2011
      %v2043 = vadd.f32 %v2042, %v2012
      %v2044 = vadd.f32 %v2043, %v2013
      %v2045 = vadd.f32 %v2044, %v2014
      %v2046 = vadd.f32 %v2045, %v2015
      %v2047 = vadd.f32 %v2046, %v2016
      %v2048 = vadd.f32 %v2047, %v2017
      %v2049 = vadd.f32 %v2048, %v2018
      %v2050 = vadd.f32 %v2049, %v2019
      %v2051 = vadd.f32 %v2050, %v2020
      %v2052 = vadd.f32 %v2051, %v2021
      %v2053 = vadd.f32 %v2052, %v2022
      %v2054 = vadd.f32 %v2053, %v2023
      %v2055 = vrot.slane %v2054, 4
      %v2056 = vadd.f32 %v2054, %v2055
      %v2057 = vrot.slane %v2056, 2
      %v2058 = vadd.f32 %v2056, %v2057
      %v2059 = vrot.slane %v2058, 1
      %v2060 = vadd.f32 %v2058, %v2059
      %2061 = vst [vmem:[%s235 + $0x1] sm:$0x1] %v2060
      %p2062 = scmp.lt.s32.totalorder %s17, 1
      %s2063 = scalar_select %p2062, %s17, 1
      %s2064 = smul.addr %s2063, 54
      %s2065 = smul.addr %s2064, 8
      %s2066 = scalar_lea.vmem %s4, %s2065
      %p2067 = scmp.lt.s32.totalorder %s17, 1
      %s2068 = scalar_select %p2067, %s17, 1
      %s2069 = smul.addr %s2068, 2
      %s2070 = scalar_lea.vmem %s5, %s2069
      // Predicated region
      $region37: #{double_conv.3} parent=35 // pred_check
        %p2071 = pneg %p124
      $region38: #{double_conv.3} parent=35 // pred_check_branch
        %2073 = sbr.rel (%p2071) target = $region40
      $region39: #{double_conv.3} parent=35 // pred_region
        _
      $region40: #{double_conv.3} parent=35 // pred_fallthru
        _
      // Predicated region
      $region41: #{double_conv.3} parent=35 // pred_check
        %p2074 = pneg %p150
      $region42: #{double_conv.3} parent=35 // pred_check_branch
        %2076 = sbr.rel (%p2074) target = $region44
      $region43: #{double_conv.3} parent=35 // pred_region
        _
      $region44: #{double_conv.3} parent=35 // pred_fallthru
        _
    $region36: #{double_conv.3} parent=5 // pred_fallthru
      _
    %p2077 = scmp.le.s32.totalorder 2, %s12
    // Predicated region
    $region45: #{double_conv.3} parent=5 // pred_check
      %p2078 = pneg %p2077
    $region46: #{double_conv.3} parent=5 // pred_check_branch
      %2080 = sbr.rel (%p2078) target = $region48
    $region47: #{double_conv.3} parent=5 // pred_region
      %s2081 = ssub.s32 %s12, 2
      // Predicated region
      $region49: #{double_conv.3} parent=47 // pred_check
        %p2082 = pneg %p130
      $region50: #{double_conv.3} parent=47 // pred_check_branch
        %2084 = sbr.rel (%p2082) target = $region52
      $region51: #{double_conv.3} parent=47 // pred_region
        %p2085 = scmp.lt.s32.totalorder %s18, 1
        %s2086 = scalar_select %p2085, %s18, 1
        %s2087 = smul.addr %s2086, 54
        %s2088 = smul.addr %s2087, 8
        %s2089 = scalar_lea.vmem %s4, %s2088
      $region52: #{double_conv.3} parent=47 // pred_fallthru
        _
      // Predicated region
      $region53: #{double_conv.3} parent=47 // pred_check
        %p2090 = pneg %p156
      $region54: #{double_conv.3} parent=47 // pred_check_branch
        %2092 = sbr.rel (%p2090) target = $region56
      $region55: #{double_conv.3} parent=47 // pred_region
        %p2093 = scmp.lt.s32.totalorder %s18, 1
        %s2094 = scalar_select %p2093, %s18, 1
        %s2095 = smul.addr %s2094, 2
        %s2096 = scalar_lea.vmem %s5, %s2095
      $region56: #{double_conv.3} parent=47 // pred_fallthru
        _
    $region48: #{double_conv.3} parent=5 // pred_fallthru
      _
  $region6: #{double_conv.3} parent=0 // loop_footer
    %s16 = sadd.s32 1, %s12
  $region7: #{double_conv.3} parent=0 // loop_footer_branch
    %11 = sbr.rel target = $region3
  $region8: #{double_conv.3} parent=0 // loop_exit
    _

// kernel: double_conv.4
$region0: #{double_conv.4}
  #allocation0 [shape = 'u32[]', space=smem, size = 0x4, offset = 0x4, fixed_abs, tag = 'smem constant byte address 0x4 - core index']
  #allocation1 [shape = 'u32[144,128]{1,0:T(1,128)}', space=vmem, size = 0x12000, scoped, tag = 'internal scratch']
  %s0 = inlined_call_operand.vmem [shape: f32[2,18,18,128], index: 0, kind: input, shape index: {}]
  %s1 = inlined_call_operand.vmem [shape: f32[1152,128], index: 1, kind: input, shape index: {}]
  %s2 = inlined_call_operand.vmem [shape: f32[1,128], index: 2, kind: input, shape index: {}]
  %s3 = inlined_call_operand.vmem [shape: f32[1,128], index: 3, kind: input, shape index: {}]
  %s4 = inlined_call_operand.vmem [shape: f32[2,16,16,128], index: 4, kind: output, shape index: {0}]
  %s5 = inlined_call_operand.vmem [shape: f32[2,2,128], index: 5, kind: output, shape index: {1}]
  %6 = xla_tuple %s4, %s5
  %s7 = sld [smem:[#allocation0]]
  $region57: #{double_conv.4} parent=0
    _
  %s9 = ssub.s32 1, %s7
  %s10 = scalar_select 0, %s9, %s7
  loop: start=0, step=1, limit=4
  $region2: #{double_conv.4} parent=0 // loop_pre_header
    _
  $region3: #{double_conv.4} parent=0 // loop_header
    %s12 = sphi 0, %s16
    %p13 = scmp.ge.s32.totalorder %s12, 4
    %s22 = sphi 0, %s24
    %s25 = sphi 0, %s22
    %s26 = sphi 0, %s25
    %s42 = sphi 0, %s26
    %s46 = sphi 0, %s46
    %s48 = sphi 0, %s46
    %s49 = sphi 0, %s48
    %s63 = sphi 0, %s49
    %s67 = sphi 0, %s67
    %s69 = sphi 0, %s67
    %s70 = sphi 0, %s69
    %s84 = sphi 0, %s70
    %s88 = sphi 0, %s88
    %s90 = sphi 0, %s88
    %s91 = sphi 0, %s90
    %s105 = sphi 0, %s91
    %s111 = sphi 0, %s113
    %s114 = sphi 0, %s111
    %s115 = sphi 0, %s114
    %s131 = sphi 0, %s115
    %s137 = sphi 0, %s139
    %s140 = sphi 0, %s137
    %s141 = sphi 0, %s140
    %s157 = sphi 0, %s141
  $region4: #{double_conv.4} parent=0 // loop_header_branch
    %15 = sbr.rel (%p13) target = $region8
  $region5: #{double_conv.4} parent=0 // loop_body
    %s17 = ssub.s32 %s12, 1
    %s18 = ssub.s32 %s12, 2
    %s19 = sadd.s32 %s12, 1
    %s20 = ssub.s32 %s12, %s19
    %p21 = scmp.eq.s32.totalorder %s20, 0
    %s23 = sadd.s32 %s22, 1
    %s24 = scalar_select %p21, %s22, %s23
    %p27 = pneg %p21
    %p28 = scmp.eq.s32.totalorder %s12, 1
    %p29 = por %p27, %p28
    %p30 = scmp.ne.s32.totalorder %s22, %s25
    %p31 = scmp.eq.s32.totalorder %s12, 0
    %p32 = por %p30, %p31
    %p33 = scmp.ne.s32.totalorder %s22, %s25
    %p34 = scmp.eq.s32.totalorder %s17, 1
    %p35 = por %p33, %p34
    %p36 = scmp.ne.s32.totalorder %s25, %s26
    %p37 = scmp.eq.s32.totalorder %s17, 0
    %p38 = por %p36, %p37
    %p39 = scmp.ne.s32.totalorder %s25, %s26
    %p40 = scmp.eq.s32.totalorder %s18, 1
    %p41 = por %p39, %p40
    %p43 = scmp.ne.s32.totalorder %s26, %s42
    %p44 = scmp.eq.s32.totalorder %s18, 0
    %p45 = por %p43, %p44
    %s47 = sadd.s32 %s46, 1
    %p50 = scmp.eq.s32.totalorder %s12, 1
    %p51 = scmp.ne.s32.totalorder %s46, %s48
    %p52 = scmp.eq.s32.totalorder %s12, 0
    %p53 = por %p51, %p52
    %p54 = scmp.ne.s32.totalorder %s46, %s48
    %p55 = scmp.eq.s32.totalorder %s17, 1
    %p56 = por %p54, %p55
    %p57 = scmp.ne.s32.totalorder %s48, %s49
    %p58 = scmp.eq.s32.totalorder %s17, 0
    %p59 = por %p57, %p58
    %p60 = scmp.ne.s32.totalorder %s48, %s49
    %p61 = scmp.eq.s32.totalorder %s18, 1
    %p62 = por %p60, %p61
    %p64 = scmp.ne.s32.totalorder %s49, %s63
    %p65 = scmp.eq.s32.totalorder %s18, 0
    %p66 = por %p64, %p65
    %s68 = sadd.s32 %s67, 1
    %p71 = scmp.eq.s32.totalorder %s12, 1
    %p72 = scmp.ne.s32.totalorder %s67, %s69
    %p73 = scmp.eq.s32.totalorder %s12, 0
    %p74 = por %p72, %p73
    %p75 = scmp.ne.s32.totalorder %s67, %s69
    %p76 = scmp.eq.s32.totalorder %s17, 1
    %p77 = por %p75, %p76
    %p78 = scmp.ne.s32.totalorder %s69, %s70
    %p79 = scmp.eq.s32.totalorder %s17, 0
    %p80 = por %p78, %p79
    %p81 = scmp.ne.s32.totalorder %s69, %s70
    %p82 = scmp.eq.s32.totalorder %s18, 1
    %p83 = por %p81, %p82
    %p85 = scmp.ne.s32.totalorder %s70, %s84
    %p86 = scmp.eq.s32.totalorder %s18, 0
    %p87 = por %p85, %p86
    %s89 = sadd.s32 %s88, 1
    %p92 = scmp.eq.s32.totalorder %s12, 1
    %p93 = scmp.ne.s32.totalorder %s88, %s90
    %p94 = scmp.eq.s32.totalorder %s12, 0
    %p95 = por %p93, %p94
    %p96 = scmp.ne.s32.totalorder %s88, %s90
    %p97 = scmp.eq.s32.totalorder %s17, 1
    %p98 = por %p96, %p97
    %p99 = scmp.ne.s32.totalorder %s90, %s91
    %p100 = scmp.eq.s32.totalorder %s17, 0
    %p101 = por %p99, %p100
    %p102 = scmp.ne.s32.totalorder %s90, %s91
    %p103 = scmp.eq.s32.totalorder %s18, 1
    %p104 = por %p102, %p103
    %p106 = scmp.ne.s32.totalorder %s91, %s105
    %p107 = scmp.eq.s32.totalorder %s18, 0
    %p108 = por %p106, %p107
    %s109 = ssub.s32 %s12, %s19
    %p110 = scmp.eq.s32.totalorder %s109, 0
    %s112 = sadd.s32 %s111, 1
    %s113 = scalar_select %p110, %s111, %s112
    %p116 = pneg %p110
    %p117 = scmp.eq.s32.totalorder %s12, 1
    %p118 = por %p116, %p117
    %p119 = scmp.ne.s32.totalorder %s111, %s114
    %p120 = scmp.eq.s32.totalorder %s12, 0
    %p121 = por %p119, %p120
    %p122 = scmp.ne.s32.totalorder %s111, %s114
    %p123 = scmp.eq.s32.totalorder %s17, 1
    %p124 = por %p122, %p123
    %p125 = scmp.ne.s32.totalorder %s114, %s115
    %p126 = scmp.eq.s32.totalorder %s17, 0
    %p127 = por %p125, %p126
    %p128 = scmp.ne.s32.totalorder %s114, %s115
    %p129 = scmp.eq.s32.totalorder %s18, 1
    %p130 = por %p128, %p129
    %p132 = scmp.ne.s32.totalorder %s115, %s131
    %p133 = scmp.eq.s32.totalorder %s18, 0
    %p134 = por %p132, %p133
    %s135 = ssub.s32 %s12, %s19
    %p136 = scmp.eq.s32.totalorder %s135, 0
    %s138 = sadd.s32 %s137, 1
    %s139 = scalar_select %p136, %s137, %s138
    %p142 = pneg %p136
    %p143 = scmp.eq.s32.totalorder %s12, 1
    %p144 = por %p142, %p143
    %p145 = scmp.ne.s32.totalorder %s137, %s140
    %p146 = scmp.eq.s32.totalorder %s12, 0
    %p147 = por %p145, %p146
    %p148 = scmp.ne.s32.totalorder %s137, %s140
    %p149 = scmp.eq.s32.totalorder %s17, 1
    %p150 = por %p148, %p149
    %p151 = scmp.ne.s32.totalorder %s140, %s141
    %p152 = scmp.eq.s32.totalorder %s17, 0
    %p153 = por %p151, %p152
    %p154 = scmp.ne.s32.totalorder %s140, %s141
    %p155 = scmp.eq.s32.totalorder %s18, 1
    %p156 = por %p154, %p155
    %p158 = scmp.ne.s32.totalorder %s141, %s157
    %p159 = scmp.eq.s32.totalorder %s18, 0
    %p160 = por %p158, %p159
    %p161 = scmp.le.s32.totalorder 1, %s12
    %p162 = scmp.lt.s32.totalorder %s12, 3
    %p163 = pnand %p161, %p162
    %p164 = pneg %p163
    // Predicated region
    $region9: #{double_conv.4} parent=5 // pred_check
      _
    $region10: #{double_conv.4} parent=5 // pred_check_branch
      %166 = sbr.rel (%p163) target = $region12
    $region11: #{double_conv.4} parent=5 // pred_region
      %s167 = ssub.s32 %s12, 1
      // Predicated region
      $region13: #{double_conv.4} parent=11 // pred_check
        %p168 = pneg %p59
      $region14: #{double_conv.4} parent=11 // pred_check_branch
        %170 = sbr.rel (%p168) target = $region16
      $region15: #{double_conv.4} parent=11 // pred_region
        _
      $region16: #{double_conv.4} parent=11 // pred_fallthru
        _
      // Predicated region
      $region17: #{double_conv.4} parent=11 // pred_check
        %p171 = pneg %p80
      $region18: #{double_conv.4} parent=11 // pred_check_branch
        %173 = sbr.rel (%p171) target = $region20
      $region19: #{double_conv.4} parent=11 // pred_region
        _
      $region20: #{double_conv.4} parent=11 // pred_fallthru
        _
      // Predicated region
      $region21: #{double_conv.4} parent=11 // pred_check
        %p174 = pneg %p101
      $region22: #{double_conv.4} parent=11 // pred_check_branch
        %176 = sbr.rel (%p174) target = $region24
      $region23: #{double_conv.4} parent=11 // pred_region
        _
      $region24: #{double_conv.4} parent=11 // pred_fallthru
        _
    $region12: #{double_conv.4} parent=5 // pred_fallthru
      _
    %p177 = scmp.lt.s32.totalorder %s12, 2
    // Predicated region
    $region25: #{double_conv.4} parent=5 // pred_check
      %p178 = pneg %p177
    $region26: #{double_conv.4} parent=5 // pred_check_branch
      %180 = sbr.rel (%p178) target = $region28
    $region27: #{double_conv.4} parent=5 // pred_region
      // Predicated region
      $region29: #{double_conv.4} parent=27 // pred_check
        %p181 = pneg %p32
      $region30: #{double_conv.4} parent=27 // pred_check_branch
        %183 = sbr.rel (%p181) target = $region32
      $region31: #{double_conv.4} parent=27 // pred_region
        %p184 = scmp.lt.s32.totalorder %s12, 1
        %s185 = scalar_select %p184, %s12, 1
        %s186 = smul.addr %s185, 54
        %s187 = smul.addr %s186, 8
        %s188 = scalar_lea.vmem %s0, %s187
      $region32: #{double_conv.4} parent=27 // pred_fallthru
        _
    $region28: #{double_conv.4} parent=5 // pred_fallthru
      _
    %p189 = scmp.le.s32.totalorder 1, %s12
    %p190 = scmp.lt.s32.totalorder %s12, 3
    %p191 = pnand %p189, %p190
    %p192 = pneg %p191
    // Predicated region
    $region33: #{double_conv.4} parent=5 // pred_check
      _
    $region34: #{double_conv.4} parent=5 // pred_check_branch
      %194 = sbr.rel (%p191) target = $region36
    $region35: #{double_conv.4} parent=5 // pred_region
      %s195 = ssub.s32 %s12, 1
      %p196 = scmp.lt.s32.totalorder %s17, 1
      %s197 = scalar_select %p196, %s17, 1
      %s198 = smul.addr %s197, 54
      %s199 = smul.addr %s198, 8
      %s200 = scalar_lea.vmem %s0, %s199
      %p201 = pneg %p38
      %p202 = pneg %p35
      %p203 = pneg %p59
      %p204 = pneg %p56
      %p205 = pneg %p80
      %p206 = pneg %p77
      %p207 = pneg %p101
      %p208 = pneg %p98
      %p209 = pneg %p127
      %p210 = pneg %p124
      %p211 = scmp.lt.s32.totalorder %s17, 1
      %s212 = scalar_select %p211, %s17, 1
      %s213 = smul.addr %s212, 32
      %s214 = smul.addr %s213, 8
      %s215 = scalar_lea.vmem %s4, %s214
      %p216 = pneg %p153
      %p217 = pneg %p150
      %p218 = scmp.lt.s32.totalorder %s17, 1
      %s219 = scalar_select %p218, %s17, 1
      %s220 = smul.addr %s219, 2
      %s221 = scalar_lea.vmem %s5, %s220
      %p222 = scmp.lt.s32.totalorder %s17, 1
      %s223 = scalar_select %p222, %s17, 1
      %s224 = smul.addr %s223, 54
      %s225 = smul.addr %s224, 8
      %s226 = scalar_lea.vmem %s0, %s225
      %p227 = scmp.lt.s32.totalorder %s17, 1
      %s228 = scalar_select %p227, %s17, 1
      %s229 = smul.addr %s228, 32
      %s230 = smul.addr %s229, 8
      %s231 = scalar_lea.vmem %s4, %s230
      %p232 = scmp.lt.s32.totalorder %s17, 1
      %s233 = scalar_select %p232, %s17, 1
      %s234 = smul.addr %s233, 2
      %s235 = scalar_lea.vmem %s5, %s234
      %v236 = vld [vmem:[%s226] sm:$0xff]
      %v237 = vld [vmem:[%s226 + $0x8] sm:$0xff]
      %v238 = vld [vmem:[%s226 + $0x10] sm:$0x3]
      %v239 = vld [vmem:[%s226 + $0x18] sm:$0xff]
      %v240 = vld [vmem:[%s226 + $0x20] sm:$0xff]
      %v241 = vld [vmem:[%s226 + $0x28] sm:$0x3]
      %v242 = vld [vmem:[%s226 + $0x30] sm:$0xff]
      %v243 = vld [vmem:[%s226 + $0x38] sm:$0xff]
      %v244 = vld [vmem:[%s226 + $0x40] sm:$0x3]
      %v245 = vld [vmem:[%s226 + $0x48] sm:$0xff]
      %v246 = vld [vmem:[%s226 + $0x50] sm:$0xff]
      %v247 = vld [vmem:[%s226 + $0x58] sm:$0x3]
      %v248 = vld [vmem:[%s226 + $0x60] sm:$0xff]
      %v249 = vld [vmem:[%s226 + $0x68] sm:$0xff]
      %v250 = vld [vmem:[%s226 + $0x70] sm:$0x3]
      %v251 = vld [vmem:[%s226 + $0x78] sm:$0xff]
      %v252 = vld [vmem:[%s226 + $0x80] sm:$0xff]
      %v253 = vld [vmem:[%s226 + $0x88] sm:$0x3]
      %v254 = vld [vmem:[%s226 + $0x90] sm:$0xff]
      %v255 = vld [vmem:[%s226 + $0x98] sm:$0xff]
      %v256 = vld [vmem:[%s226 + $0xa0] sm:$0x3]
      %v257 = vld [vmem:[%s226 + $0xa8] sm:$0xff]
      %v258 = vld [vmem:[%s226 + $0xb0] sm:$0xff]
      %v259 = vld [vmem:[%s226 + $0xb8] sm:$0x3]
      %v260 = vld [vmem:[%s226 + $0xc0] sm:$0xff]
      %v261 = vld [vmem:[%s226 + $0xc8] sm:$0xff]
      %v262 = vld [vmem:[%s226 + $0xd0] sm:$0x3]
      %v263 = vld [vmem:[%s226 + $0xd8] sm:$0xff]
      %v264 = vld [vmem:[%s226 + $0xe0] sm:$0xff]
      %v265 = vld [vmem:[%s226 + $0xe8] sm:$0x3]
      %v266 = vld [vmem:[%s226 + $0xf0] sm:$0xff]
      %v267 = vld [vmem:[%s226 + $0xf8] sm:$0xff]
      %v268 = vld [vmem:[%s226 + $0x100] sm:$0x3]
      %v269 = vld [vmem:[%s226 + $0x108] sm:$0xff]
      %v270 = vld [vmem:[%s226 + $0x110] sm:$0xff]
      %v271 = vld [vmem:[%s226 + $0x118] sm:$0x3]
      %v272 = vld [vmem:[%s226 + $0x120] sm:$0xff]
      %v273 = vld [vmem:[%s226 + $0x128] sm:$0xff]
      %v274 = vld [vmem:[%s226 + $0x130] sm:$0x3]
      %v275 = vld [vmem:[%s226 + $0x138] sm:$0xff]
      %v276 = vld [vmem:[%s226 + $0x140] sm:$0xff]
      %v277 = vld [vmem:[%s226 + $0x148] sm:$0x3]
      %v278 = vld [vmem:[%s226 + $0x150] sm:$0xff]
      %v279 = vld [vmem:[%s226 + $0x158] sm:$0xff]
      %v280 = vld [vmem:[%s226 + $0x160] sm:$0x3]
      %v281 = vld [vmem:[%s226 + $0x168] sm:$0xff]
      %v282 = vld [vmem:[%s226 + $0x170] sm:$0xff]
      %v283 = vld [vmem:[%s226 + $0x178] sm:$0x3]
      %v284 = vld [vmem:[%s226 + $0x180] sm:$0xff]
      %v285 = vld [vmem:[%s226 + $0x188] sm:$0xff]
      %v286 = vld [vmem:[%s226 + $0x190] sm:$0x3]
      %v287 = vld [vmem:[%s226 + $0x198] sm:$0xff]
      %v288 = vld [vmem:[%s226 + $0x1a0] sm:$0xff]
      %v289 = vld [vmem:[%s226 + $0x1a8] sm:$0x3]
      %v290 = vld [vmem:[%s2] sm:$0x1]
      %v292 = vlaneseq
      %v293 = vshrl.u32 %v292, 7
      %v294 = vsub.s32 0, %v293
      %v295 = vrot.slane %v290, %v294
      %v297 = vmul.f32 %v236, %v295
      %v298 = vmul.f32 %v237, %v295
      %v299 = vmul.f32 %v238, %v295
      %v300 = vmul.f32 %v239, %v295
      %v301 = vmul.f32 %v240, %v295
      %v302 = vmul.f32 %v241, %v295
      %v303 = vmul.f32 %v242, %v295
      %v304 = vmul.f32 %v243, %v295
      %v305 = vmul.f32 %v244, %v295
      %v306 = vmul.f32 %v245, %v295
      %v307 = vmul.f32 %v246, %v295
      %v308 = vmul.f32 %v247, %v295
      %v309 = vmul.f32 %v248, %v295
      %v310 = vmul.f32 %v249, %v295
      %v311 = vmul.f32 %v250, %v295
      %v312 = vmul.f32 %v251, %v295
      %v313 = vmul.f32 %v252, %v295
      %v314 = vmul.f32 %v253, %v295
      %v315 = vmul.f32 %v254, %v295
      %v316 = vmul.f32 %v255, %v295
      %v317 = vmul.f32 %v256, %v295
      %v318 = vmul.f32 %v257, %v295
      %v319 = vmul.f32 %v258, %v295
      %v320 = vmul.f32 %v259, %v295
      %v321 = vmul.f32 %v260, %v295
      %v322 = vmul.f32 %v261, %v295
      %v323 = vmul.f32 %v262, %v295
      %v324 = vmul.f32 %v263, %v295
      %v325 = vmul.f32 %v264, %v295
      %v326 = vmul.f32 %v265, %v295
      %v327 = vmul.f32 %v266, %v295
      %v328 = vmul.f32 %v267, %v295
      %v329 = vmul.f32 %v268, %v295
      %v330 = vmul.f32 %v269, %v295
      %v331 = vmul.f32 %v270, %v295
      %v332 = vmul.f32 %v271, %v295
      %v333 = vmul.f32 %v272, %v295
      %v334 = vmul.f32 %v273, %v295
      %v335 = vmul.f32 %v274, %v295
      %v336 = vmul.f32 %v275, %v295
      %v337 = vmul.f32 %v276, %v295
      %v338 = vmul.f32 %v277, %v295
      %v339 = vmul.f32 %v278, %v295
      %v340 = vmul.f32 %v279, %v295
      %v341 = vmul.f32 %v280, %v295
      %v342 = vmul.f32 %v281, %v295
      %v343 = vmul.f32 %v282, %v295
      %v344 = vmul.f32 %v283, %v295
      %v345 = vmul.f32 %v284, %v295
      %v346 = vmul.f32 %v285, %v295
      %v347 = vmul.f32 %v286, %v295
      %v348 = vmul.f32 %v287, %v295
      %v349 = vmul.f32 %v288, %v295
      %v350 = vmul.f32 %v289, %v295
      %v351 = vld [vmem:[%s3] sm:$0x1]
      %v353 = vlaneseq
      %v354 = vshrl.u32 %v353, 7
      %v355 = vsub.s32 0, %v354
      %v356 = vrot.slane %v351, %v355
      %v358 = vadd.f32 %v297, %v356
      %v359 = vadd.f32 %v298, %v356
      %v360 = vadd.f32 %v299, %v356
      %v361 = vadd.f32 %v300, %v356
      %v362 = vadd.f32 %v301, %v356
      %v363 = vadd.f32 %v302, %v356
      %v364 = vadd.f32 %v303, %v356
      %v365 = vadd.f32 %v304, %v356
      %v366 = vadd.f32 %v305, %v356
      %v367 = vadd.f32 %v306, %v356
      %v368 = vadd.f32 %v307, %v356
      %v369 = vadd.f32 %v308, %v356
      %v370 = vadd.f32 %v309, %v356
      %v371 = vadd.f32 %v310, %v356
      %v372 = vadd.f32 %v311, %v356
      %v373 = vadd.f32 %v312, %v356
      %v374 = vadd.f32 %v313, %v356
      %v375 = vadd.f32 %v314, %v356
      %v376 = vadd.f32 %v315, %v356
      %v377 = vadd.f32 %v316, %v356
      %v378 = vadd.f32 %v317, %v356
      %v379 = vadd.f32 %v318, %v356
      %v380 = vadd.f32 %v319, %v356
      %v381 = vadd.f32 %v320, %v356
      %v382 = vadd.f32 %v321, %v356
      %v383 = vadd.f32 %v322, %v356
      %v384 = vadd.f32 %v323, %v356
      %v385 = vadd.f32 %v324, %v356
      %v386 = vadd.f32 %v325, %v356
      %v387 = vadd.f32 %v326, %v356
      %v388 = vadd.f32 %v327, %v356
      %v389 = vadd.f32 %v328, %v356
      %v390 = vadd.f32 %v329, %v356
      %v391 = vadd.f32 %v330, %v356
      %v392 = vadd.f32 %v331, %v356
      %v393 = vadd.f32 %v332, %v356
      %v394 = vadd.f32 %v333, %v356
      %v395 = vadd.f32 %v334, %v356
      %v396 = vadd.f32 %v335, %v356
      %v397 = vadd.f32 %v336, %v356
      %v398 = vadd.f32 %v337, %v356
      %v399 = vadd.f32 %v338, %v356
      %v400 = vadd.f32 %v339, %v356
      %v401 = vadd.f32 %v340, %v356
      %v402 = vadd.f32 %v341, %v356
      %v403 = vadd.f32 %v342, %v356
      %v404 = vadd.f32 %v343, %v356
      %v405 = vadd.f32 %v344, %v356
      %v406 = vadd.f32 %v345, %v356
      %v407 = vadd.f32 %v346, %v356
      %v408 = vadd.f32 %v347, %v356
      %v409 = vadd.f32 %v348, %v356
      %v410 = vadd.f32 %v349, %v356
      %v411 = vadd.f32 %v350, %v356
      %v412 = vmax.f32 %v358, 0.0
      %v413 = vmax.f32 %v359, 0.0
      %v414 = vmax.f32 %v360, 0.0
      %v415 = vmax.f32 %v361, 0.0
      %v416 = vmax.f32 %v362, 0.0
      %v417 = vmax.f32 %v363, 0.0
      %v418 = vmax.f32 %v364, 0.0
      %v419 = vmax.f32 %v365, 0.0
      %v420 = vmax.f32 %v366, 0.0
      %v421 = vmax.f32 %v367, 0.0
      %v422 = vmax.f32 %v368, 0.0
      %v423 = vmax.f32 %v369, 0.0
      %v424 = vmax.f32 %v370, 0.0
      %v425 = vmax.f32 %v371, 0.0
      %v426 = vmax.f32 %v372, 0.0
      %v427 = vmax.f32 %v373, 0.0
      %v428 = vmax.f32 %v374, 0.0
      %v429 = vmax.f32 %v375, 0.0
      %v430 = vmax.f32 %v376, 0.0
      %v431 = vmax.f32 %v377, 0.0
      %v432 = vmax.f32 %v378, 0.0
      %v433 = vmax.f32 %v379, 0.0
      %v434 = vmax.f32 %v380, 0.0
      %v435 = vmax.f32 %v381, 0.0
      %v436 = vmax.f32 %v382, 0.0
      %v437 = vmax.f32 %v383, 0.0
      %v438 = vmax.f32 %v384, 0.0
      %v439 = vmax.f32 %v385, 0.0
      %v440 = vmax.f32 %v386, 0.0
      %v441 = vmax.f32 %v387, 0.0
      %v442 = vmax.f32 %v388, 0.0
      %v443 = vmax.f32 %v389, 0.0
      %v444 = vmax.f32 %v390, 0.0
      %v445 = vmax.f32 %v391, 0.0
      %v446 = vmax.f32 %v392, 0.0
      %v447 = vmax.f32 %v393, 0.0
      %v448 = vmax.f32 %v394, 0.0
      %v449 = vmax.f32 %v395, 0.0
      %v450 = vmax.f32 %v396, 0.0
      %v451 = vmax.f32 %v397, 0.0
      %v452 = vmax.f32 %v398, 0.0
      %v453 = vmax.f32 %v399, 0.0
      %v454 = vmax.f32 %v400, 0.0
      %v455 = vmax.f32 %v401, 0.0
      %v456 = vmax.f32 %v402, 0.0
      %v457 = vmax.f32 %v403, 0.0
      %v458 = vmax.f32 %v404, 0.0
      %v459 = vmax.f32 %v405, 0.0
      %v460 = vmax.f32 %v406, 0.0
      %v461 = vmax.f32 %v407, 0.0
      %v462 = vmax.f32 %v408, 0.0
      %v463 = vmax.f32 %v409, 0.0
      %v464 = vmax.f32 %v410, 0.0
      %v465 = vmax.f32 %v411, 0.0
      %v466 = vlaneseq
      %v467 = vshrl.u32 %v466, 7
      %v468 = vadd.s32 %v467, 8
      %v469 = vadd.s32 %v467, 16
      %vm470 = vcmp.ge.s32.totalorder %v467, 1
      %vm471 = vcmp.ge.s32.totalorder %v468, 1
      %vm472 = vcmp.ge.s32.totalorder %v469, 1
      %vm473 = vmand 0, %vm470
      %vm474 = vmand 0, %vm471
      %vm475 = vmand 0, %vm472
      %vm476 = vmand 1, %vm470
      %vm477 = vmand 1, %vm471
      %vm478 = vmand 1, %vm472
      %vm479 = vcmp.le.s32.totalorder %v467, 16
      %vm480 = vcmp.le.s32.totalorder %v468, 16
      %vm481 = vcmp.le.s32.totalorder %v469, 16
      %vm482 = vmand %vm473, %vm479
      %vm483 = vmand %vm474, %vm480
      %vm484 = vmand %vm475, %vm481
      %vm485 = vmand %vm476, %vm479
      %vm486 = vmand %vm477, %vm480
      %vm487 = vmand %vm478, %vm481
      %v488 = vsel %vm482, %v412, 0.0
      %v489 = vsel %vm483, %v413, 0.0
      %v490 = vsel %vm484, %v414, 0.0
      %v491 = vsel %vm485, %v415, 0.0
      %v492 = vsel %vm486, %v416, 0.0
      %v493 = vsel %vm487, %v417, 0.0
      %v494 = vsel %vm485, %v418, 0.0
      %v495 = vsel %vm486, %v419, 0.0
      %v496 = vsel %vm487, %v420, 0.0
      %v497 = vsel %vm485, %v421, 0.0
      %v498 = vsel %vm486, %v422, 0.0
      %v499 = vsel %vm487, %v423, 0.0
      %v500 = vsel %vm485, %v424, 0.0
      %v501 = vsel %vm486, %v425, 0.0
      %v502 = vsel %vm487, %v426, 0.0
      %v503 = vsel %vm485, %v427, 0.0
      %v504 = vsel %vm486, %v428, 0.0
      %v505 = vsel %vm487, %v429, 0.0
      %v506 = vsel %vm485, %v430, 0.0
      %v507 = vsel %vm486, %v431, 0.0
      %v508 = vsel %vm487, %v432, 0.0
      %v509 = vsel %vm485, %v433, 0.0
      %v510 = vsel %vm486, %v434, 0.0
      %v511 = vsel %vm487, %v435, 0.0
      %v512 = vsel %vm485, %v436, 0.0
      %v513 = vsel %vm486, %v437, 0.0
      %v514 = vsel %vm487, %v438, 0.0
      %v515 = vsel %vm485, %v439, 0.0
      %v516 = vsel %vm486, %v440, 0.0
      %v517 = vsel %vm487, %v441, 0.0
      %v518 = vsel %vm485, %v442, 0.0
      %v519 = vsel %vm486, %v443, 0.0
      %v520 = vsel %vm487, %v444, 0.0
      %v521 = vsel %vm485, %v445, 0.0
      %v522 = vsel %vm486, %v446, 0.0
      %v523 = vsel %vm487, %v447, 0.0
      %v524 = vsel %vm485, %v448, 0.0
      %v525 = vsel %vm486, %v449, 0.0
      %v526 = vsel %vm487, %v450, 0.0
      %v527 = vsel %vm485, %v451, 0.0
      %v528 = vsel %vm486, %v452, 0.0
      %v529 = vsel %vm487, %v453, 0.0
      %v530 = vsel %vm485, %v454, 0.0
      %v531 = vsel %vm486, %v455, 0.0
      %v532 = vsel %vm487, %v456, 0.0
      %v533 = vsel %vm485, %v457, 0.0
      %v534 = vsel %vm486, %v458, 0.0
      %v535 = vsel %vm487, %v459, 0.0
      %v536 = vsel %vm485, %v460, 0.0
      %v537 = vsel %vm486, %v461, 0.0
      %v538 = vsel %vm487, %v462, 0.0
      %v539 = vsel %vm482, %v463, 0.0
      %v540 = vsel %vm483, %v464, 0.0
      %v541 = vsel %vm484, %v465, 0.0
      %vm590 = vcmask 1046528
      %v591 = vrot.slane %v488, 1
      %v592 = vrot.slane %v489, 1
      %v593 = vsel %vm590, %v591, %v592
      %v594 = vrot.slane %v490, 1
      %v595 = vsel %vm590, %v592, %v594
      %v596 = vrot.slane %v491, 1
      %v597 = vrot.slane %v492, 1
      %v598 = vsel %vm590, %v596, %v597
      %v599 = vrot.slane %v493, 1
      %v600 = vsel %vm590, %v597, %v599
      %v601 = vrot.slane %v494, 1
      %v602 = vrot.slane %v495, 1
      %v603 = vsel %vm590, %v601, %v602
      %v604 = vrot.slane %v496, 1
      %v605 = vsel %vm590, %v602, %v604
      %v606 = vrot.slane %v497, 1
      %v607 = vrot.slane %v498, 1
      %v608 = vsel %vm590, %v606, %v607
      %v609 = vrot.slane %v499, 1
      %v610 = vsel %vm590, %v607, %v609
      %v611 = vrot.slane %v500, 1
      %v612 = vrot.slane %v501, 1
      %v613 = vsel %vm590, %v611, %v612
      %v614 = vrot.slane %v502, 1
      %v615 = vsel %vm590, %v612, %v614
      %v616 = vrot.slane %v503, 1
      %v617 = vrot.slane %v504, 1
      %v618 = vsel %vm590, %v616, %v617
      %v619 = vrot.slane %v505, 1
      %v620 = vsel %vm590, %v617, %v619
      %v621 = vrot.slane %v506, 1
      %v622 = vrot.slane %v507, 1
      %v623 = vsel %vm590, %v621, %v622
      %v624 = vrot.slane %v508, 1
      %v625 = vsel %vm590, %v622, %v624
      %v626 = vrot.slane %v509, 1
      %v627 = vrot.slane %v510, 1
      %v628 = vsel %vm590, %v626, %v627
      %v629 = vrot.slane %v511, 1
      %v630 = vsel %vm590, %v627, %v629
      %v631 = vrot.slane %v512, 1
      %v632 = vrot.slane %v513, 1
      %v633 = vsel %vm590, %v631, %v632
      %v634 = vrot.slane %v514, 1
      %v635 = vsel %vm590, %v632, %v634
      %v636 = vrot.slane %v515, 1
      %v637 = vrot.slane %v516, 1
      %v638 = vsel %vm590, %v636, %v637
      %v639 = vrot.slane %v517, 1
      %v640 = vsel %vm590, %v637, %v639
      %v641 = vrot.slane %v518, 1
      %v642 = vrot.slane %v519, 1
      %v643 = vsel %vm590, %v641, %v642
      %v644 = vrot.slane %v520, 1
      %v645 = vsel %vm590, %v642, %v644
      %v646 = vrot.slane %v521, 1
      %v647 = vrot.slane %v522, 1
      %v648 = vsel %vm590, %v646, %v647
      %v649 = vrot.slane %v523, 1
      %v650 = vsel %vm590, %v647, %v649
      %v651 = vrot.slane %v524, 1
      %v652 = vrot.slane %v525, 1
      %v653 = vsel %vm590, %v651, %v652
      %v654 = vrot.slane %v526, 1
      %v655 = vsel %vm590, %v652, %v654
      %v656 = vrot.slane %v527, 1
      %v657 = vrot.slane %v528, 1
      %v658 = vsel %vm590, %v656, %v657
      %v659 = vrot.slane %v529, 1
      %v660 = vsel %vm590, %v657, %v659
      %v661 = vrot.slane %v530, 1
      %v662 = vrot.slane %v531, 1
      %v663 = vsel %vm590, %v661, %v662
      %v664 = vrot.slane %v532, 1
      %v665 = vsel %vm590, %v662, %v664
      %v666 = vrot.slane %v533, 1
      %v667 = vrot.slane %v534, 1
      %v668 = vsel %vm590, %v666, %v667
      %v669 = vrot.slane %v535, 1
      %v670 = vsel %vm590, %v667, %v669
      %vm703 = vcmask 1045504
      %v704 = vrot.slane %v488, 2
      %v705 = vrot.slane %v489, 2
      %v706 = vsel %vm703, %v704, %v705
      %v707 = vrot.slane %v490, 2
      %v708 = vsel %vm703, %v705, %v707
      %v709 = vrot.slane %v491, 2
      %v710 = vrot.slane %v492, 2
      %v711 = vsel %vm703, %v709, %v710
      %v712 = vrot.slane %v493, 2
      %v713 = vsel %vm703, %v710, %v712
      %v714 = vrot.slane %v494, 2
      %v715 = vrot.slane %v495, 2
      %v716 = vsel %vm703, %v714, %v715
      %v717 = vrot.slane %v496, 2
      %v718 = vsel %vm703, %v715, %v717
      %v719 = vrot.slane %v497, 2
      %v720 = vrot.slane %v498, 2
      %v721 = vsel %vm703, %v719, %v720
      %v722 = vrot.slane %v499, 2
      %v723 = vsel %vm703, %v720, %v722
      %v724 = vrot.slane %v500, 2
      %v725 = vrot.slane %v501, 2
      %v726 = vsel %vm703, %v724, %v725
      %v727 = vrot.slane %v502, 2
      %v728 = vsel %vm703, %v725, %v727
      %v729 = vrot.slane %v503, 2
      %v730 = vrot.slane %v504, 2
      %v731 = vsel %vm703, %v729, %v730
      %v732 = vrot.slane %v505, 2
      %v733 = vsel %vm703, %v730, %v732
      %v734 = vrot.slane %v506, 2
      %v735 = vrot.slane %v507, 2
      %v736 = vsel %vm703, %v734, %v735
      %v737 = vrot.slane %v508, 2
      %v738 = vsel %vm703, %v735, %v737
      %v739 = vrot.slane %v509, 2
      %v740 = vrot.slane %v510, 2
      %v741 = vsel %vm703, %v739, %v740
      %v742 = vrot.slane %v511, 2
      %v743 = vsel %vm703, %v740, %v742
      %v744 = vrot.slane %v512, 2
      %v745 = vrot.slane %v513, 2
      %v746 = vsel %vm703, %v744, %v745
      %v747 = vrot.slane %v514, 2
      %v748 = vsel %vm703, %v745, %v747
      %v749 = vrot.slane %v515, 2
      %v750 = vrot.slane %v516, 2
      %v751 = vsel %vm703, %v749, %v750
      %v752 = vrot.slane %v517, 2
      %v753 = vsel %vm703, %v750, %v752
      %v754 = vrot.slane %v518, 2
      %v755 = vrot.slane %v519, 2
      %v756 = vsel %vm703, %v754, %v755
      %v757 = vrot.slane %v520, 2
      %v758 = vsel %vm703, %v755, %v757
      %v759 = vrot.slane %v521, 2
      %v760 = vrot.slane %v522, 2
      %v761 = vsel %vm703, %v759, %v760
      %v762 = vrot.slane %v523, 2
      %v763 = vsel %vm703, %v760, %v762
      %v764 = vrot.slane %v524, 2
      %v765 = vrot.slane %v525, 2
      %v766 = vsel %vm703, %v764, %v765
      %v767 = vrot.slane %v526, 2
      %v768 = vsel %vm703, %v765, %v767
      %v769 = vrot.slane %v527, 2
      %v770 = vrot.slane %v528, 2
      %v771 = vsel %vm703, %v769, %v770
      %v772 = vrot.slane %v529, 2
      %v773 = vsel %vm703, %v770, %v772
      %v774 = vrot.slane %v530, 2
      %v775 = vrot.slane %v531, 2
      %v776 = vsel %vm703, %v774, %v775
      %v777 = vrot.slane %v532, 2
      %v778 = vsel %vm703, %v775, %v777
      %v779 = vrot.slane %v533, 2
      %v780 = vrot.slane %v534, 2
      %v781 = vsel %vm703, %v779, %v780
      %v782 = vrot.slane %v535, 2
      %v783 = vsel %vm703, %v780, %v782
      %v819 = vrot.slane %v536, 1
      %v820 = vrot.slane %v537, 1
      %v821 = vsel %vm590, %v819, %v820
      %v822 = vrot.slane %v538, 1
      %v823 = vsel %vm590, %v820, %v822
      %v826 = vrot.slane %v536, 2
      %v827 = vrot.slane %v537, 2
      %v828 = vsel %vm703, %v826, %v827
      %v829 = vrot.slane %v538, 2
      %v830 = vsel %vm703, %v827, %v829
      %v836 = vrot.slane %v539, 1
      %v837 = vrot.slane %v540, 1
      %v838 = vsel %vm590, %v836, %v837
      %v839 = vrot.slane %v541, 1
      %v840 = vsel %vm590, %v837, %v839
      %v843 = vrot.slane %v539, 2
      %v844 = vrot.slane %v540, 2
      %v845 = vsel %vm703, %v843, %v844
      %v846 = vrot.slane %v541, 2
      %v847 = vsel %vm703, %v844, %v846
      %v850 = vld [vmem:[%s1] sm:$0xff]
      %v851 = vld [vmem:[%s1 + $0x8] sm:$0xff]
      %v852 = vld [vmem:[%s1 + $0x10] sm:$0xff]
      %v853 = vld [vmem:[%s1 + $0x18] sm:$0xff]
      %v854 = vld [vmem:[%s1 + $0x20] sm:$0xff]
      %v855 = vld [vmem:[%s1 + $0x28] sm:$0xff]
      %v856 = vld [vmem:[%s1 + $0x30] sm:$0xff]
      %v857 = vld [vmem:[%s1 + $0x38] sm:$0xff]
      %v858 = vld [vmem:[%s1 + $0x40] sm:$0xff]
      %v859 = vld [vmem:[%s1 + $0x48] sm:$0xff]
      %v860 = vld [vmem:[%s1 + $0x50] sm:$0xff]
      %v861 = vld [vmem:[%s1 + $0x58] sm:$0xff]
      %v862 = vld [vmem:[%s1 + $0x60] sm:$0xff]
      %v863 = vld [vmem:[%s1 + $0x68] sm:$0xff]
      %v864 = vld [vmem:[%s1 + $0x70] sm:$0xff]
      %v865 = vld [vmem:[%s1 + $0x78] sm:$0xff]
      %v866 = vld [vmem:[%s1 + $0x80] sm:$0xff]
      %v867 = vld [vmem:[%s1 + $0x88] sm:$0xff]
      %v868 = vld [vmem:[%s1 + $0x90] sm:$0xff]
      %v869 = vld [vmem:[%s1 + $0x98] sm:$0xff]
      %v870 = vld [vmem:[%s1 + $0xa0] sm:$0xff]
      %v871 = vld [vmem:[%s1 + $0xa8] sm:$0xff]
      %v872 = vld [vmem:[%s1 + $0xb0] sm:$0xff]
      %v873 = vld [vmem:[%s1 + $0xb8] sm:$0xff]
      %v874 = vld [vmem:[%s1 + $0xc0] sm:$0xff]
      %v875 = vld [vmem:[%s1 + $0xc8] sm:$0xff]
      %v876 = vld [vmem:[%s1 + $0xd0] sm:$0xff]
      %v877 = vld [vmem:[%s1 + $0xd8] sm:$0xff]
      %v878 = vld [vmem:[%s1 + $0xe0] sm:$0xff]
      %v879 = vld [vmem:[%s1 + $0xe8] sm:$0xff]
      %v880 = vld [vmem:[%s1 + $0xf0] sm:$0xff]
      %v881 = vld [vmem:[%s1 + $0xf8] sm:$0xff]
      %v882 = vld [vmem:[%s1 + $0x100] sm:$0xff]
      %v883 = vld [vmem:[%s1 + $0x108] sm:$0xff]
      %v884 = vld [vmem:[%s1 + $0x110] sm:$0xff]
      %v885 = vld [vmem:[%s1 + $0x118] sm:$0xff]
      %v886 = vld [vmem:[%s1 + $0x120] sm:$0xff]
      %v887 = vld [vmem:[%s1 + $0x128] sm:$0xff]
      %v888 = vld [vmem:[%s1 + $0x130] sm:$0xff]
      %v889 = vld [vmem:[%s1 + $0x138] sm:$0xff]
      %v890 = vld [vmem:[%s1 + $0x140] sm:$0xff]
      %v891 = vld [vmem:[%s1 + $0x148] sm:$0xff]
      %v892 = vld [vmem:[%s1 + $0x150] sm:$0xff]
      %v893 = vld [vmem:[%s1 + $0x158] sm:$0xff]
      %v894 = vld [vmem:[%s1 + $0x160] sm:$0xff]
      %v895 = vld [vmem:[%s1 + $0x168] sm:$0xff]
      %v896 = vld [vmem:[%s1 + $0x170] sm:$0xff]
      %v897 = vld [vmem:[%s1 + $0x178] sm:$0xff]
      %v898 = vld [vmem:[%s1 + $0x180] sm:$0xff]
      %v899 = vld [vmem:[%s1 + $0x188] sm:$0xff]
      %v900 = vld [vmem:[%s1 + $0x190] sm:$0xff]
      %v901 = vld [vmem:[%s1 + $0x198] sm:$0xff]
      %v902 = vld [vmem:[%s1 + $0x1a0] sm:$0xff]
      %v903 = vld [vmem:[%s1 + $0x1a8] sm:$0xff]
      %v904 = vld [vmem:[%s1 + $0x1b0] sm:$0xff]
      %v905 = vld [vmem:[%s1 + $0x1b8] sm:$0xff]
      %v906 = vld [vmem:[%s1 + $0x1c0] sm:$0xff]
      %v907 = vld [vmem:[%s1 + $0x1c8] sm:$0xff]
      %v908 = vld [vmem:[%s1 + $0x1d0] sm:$0xff]
      %v909 = vld [vmem:[%s1 + $0x1d8] sm:$0xff]
      %v910 = vld [vmem:[%s1 + $0x1e0] sm:$0xff]
      %v911 = vld [vmem:[%s1 + $0x1e8] sm:$0xff]
      %v912 = vld [vmem:[%s1 + $0x1f0] sm:$0xff]
      %v913 = vld [vmem:[%s1 + $0x1f8] sm:$0xff]
      %v914 = vld [vmem:[%s1 + $0x200] sm:$0xff]
      %v915 = vld [vmem:[%s1 + $0x208] sm:$0xff]
      %v916 = vld [vmem:[%s1 + $0x210] sm:$0xff]
      %v917 = vld [vmem:[%s1 + $0x218] sm:$0xff]
      %v918 = vld [vmem:[%s1 + $0x220] sm:$0xff]
      %v919 = vld [vmem:[%s1 + $0x228] sm:$0xff]
      %v920 = vld [vmem:[%s1 + $0x230] sm:$0xff]
      %v921 = vld [vmem:[%s1 + $0x238] sm:$0xff]
      %v922 = vld [vmem:[%s1 + $0x240] sm:$0xff]
      %v923 = vld [vmem:[%s1 + $0x248] sm:$0xff]
      %v924 = vld [vmem:[%s1 + $0x250] sm:$0xff]
      %v925 = vld [vmem:[%s1 + $0x258] sm:$0xff]
      %v926 = vld [vmem:[%s1 + $0x260] sm:$0xff]
      %v927 = vld [vmem:[%s1 + $0x268] sm:$0xff]
      %v928 = vld [vmem:[%s1 + $0x270] sm:$0xff]
      %v929 = vld [vmem:[%s1 + $0x278] sm:$0xff]
      %v930 = vld [vmem:[%s1 + $0x280] sm:$0xff]
      %v931 = vld [vmem:[%s1 + $0x288] sm:$0xff]
      %v932 = vld [vmem:[%s1 + $0x290] sm:$0xff]
      %v933 = vld [vmem:[%s1 + $0x298] sm:$0xff]
      %v934 = vld [vmem:[%s1 + $0x2a0] sm:$0xff]
      %v935 = vld [vmem:[%s1 + $0x2a8] sm:$0xff]
      %v936 = vld [vmem:[%s1 + $0x2b0] sm:$0xff]
      %v937 = vld [vmem:[%s1 + $0x2b8] sm:$0xff]
      %v938 = vld [vmem:[%s1 + $0x2c0] sm:$0xff]
      %v939 = vld [vmem:[%s1 + $0x2c8] sm:$0xff]
      %v940 = vld [vmem:[%s1 + $0x2d0] sm:$0xff]
      %v941 = vld [vmem:[%s1 + $0x2d8] sm:$0xff]
      %v942 = vld [vmem:[%s1 + $0x2e0] sm:$0xff]
      %v943 = vld [vmem:[%s1 + $0x2e8] sm:$0xff]
      %v944 = vld [vmem:[%s1 + $0x2f0] sm:$0xff]
      %v945 = vld [vmem:[%s1 + $0x2f8] sm:$0xff]
      %v946 = vld [vmem:[%s1 + $0x300] sm:$0xff]
      %v947 = vld [vmem:[%s1 + $0x308] sm:$0xff]
      %v948 = vld [vmem:[%s1 + $0x310] sm:$0xff]
      %v949 = vld [vmem:[%s1 + $0x318] sm:$0xff]
      %v950 = vld [vmem:[%s1 + $0x320] sm:$0xff]
      %v951 = vld [vmem:[%s1 + $0x328] sm:$0xff]
      %v952 = vld [vmem:[%s1 + $0x330] sm:$0xff]
      %v953 = vld [vmem:[%s1 + $0x338] sm:$0xff]
      %v954 = vld [vmem:[%s1 + $0x340] sm:$0xff]
      %v955 = vld [vmem:[%s1 + $0x348] sm:$0xff]
      %v956 = vld [vmem:[%s1 + $0x350] sm:$0xff]
      %v957 = vld [vmem:[%s1 + $0x358] sm:$0xff]
      %v958 = vld [vmem:[%s1 + $0x360] sm:$0xff]
      %v959 = vld [vmem:[%s1 + $0x368] sm:$0xff]
      %v960 = vld [vmem:[%s1 + $0x370] sm:$0xff]
      %v961 = vld [vmem:[%s1 + $0x378] sm:$0xff]
      %v962 = vld [vmem:[%s1 + $0x380] sm:$0xff]
      %v963 = vld [vmem:[%s1 + $0x388] sm:$0xff]
      %v964 = vld [vmem:[%s1 + $0x390] sm:$0xff]
      %v965 = vld [vmem:[%s1 + $0x398] sm:$0xff]
      %v966 = vld [vmem:[%s1 + $0x3a0] sm:$0xff]
      %v967 = vld [vmem:[%s1 + $0x3a8] sm:$0xff]
      %v968 = vld [vmem:[%s1 + $0x3b0] sm:$0xff]
      %v969 = vld [vmem:[%s1 + $0x3b8] sm:$0xff]
      %v970 = vld [vmem:[%s1 + $0x3c0] sm:$0xff]
      %v971 = vld [vmem:[%s1 + $0x3c8] sm:$0xff]
      %v972 = vld [vmem:[%s1 + $0x3d0] sm:$0xff]
      %v973 = vld [vmem:[%s1 + $0x3d8] sm:$0xff]
      %v974 = vld [vmem:[%s1 + $0x3e0] sm:$0xff]
      %v975 = vld [vmem:[%s1 + $0x3e8] sm:$0xff]
      %v976 = vld [vmem:[%s1 + $0x3f0] sm:$0xff]
      %v977 = vld [vmem:[%s1 + $0x3f8] sm:$0xff]
      %v978 = vld [vmem:[%s1 + $0x400] sm:$0xff]
      %v979 = vld [vmem:[%s1 + $0x408] sm:$0xff]
      %v980 = vld [vmem:[%s1 + $0x410] sm:$0xff]
      %v981 = vld [vmem:[%s1 + $0x418] sm:$0xff]
      %v982 = vld [vmem:[%s1 + $0x420] sm:$0xff]
      %v983 = vld [vmem:[%s1 + $0x428] sm:$0xff]
      %v984 = vld [vmem:[%s1 + $0x430] sm:$0xff]
      %v985 = vld [vmem:[%s1 + $0x438] sm:$0xff]
      %v986 = vld [vmem:[%s1 + $0x440] sm:$0xff]
      %v987 = vld [vmem:[%s1 + $0x448] sm:$0xff]
      %v988 = vld [vmem:[%s1 + $0x450] sm:$0xff]
      %v989 = vld [vmem:[%s1 + $0x458] sm:$0xff]
      %v990 = vld [vmem:[%s1 + $0x460] sm:$0xff]
      %v991 = vld [vmem:[%s1 + $0x468] sm:$0xff]
      %v992 = vld [vmem:[%s1 + $0x470] sm:$0xff]
      %v993 = vld [vmem:[%s1 + $0x478] sm:$0xff]
      %994 = vmatprep.subr.mxu0 0.0
      %995 = vmatpush1.msra.mxu0 %v865
      %996 = vmatprep.subr.mxu0 0.0
      %997 = vmatpush1.msra.mxu0 %v864
      %998 = vmatprep.subr.mxu0 0.0
      %999 = vmatpush1.msra.mxu0 %v863
      %1000 = vmatprep.subr.mxu0 0.0
      %1001 = vmatpush1.msra.mxu0 %v862
      %1002 = vmatprep.subr.mxu0 0.0
      %1003 = vmatpush1.msra.mxu0 %v861
      %1004 = vmatprep.subr.mxu0 0.0
      %1005 = vmatpush1.msra.mxu0 %v860
      %1006 = vmatprep.subr.mxu0 0.0
      %1007 = vmatpush1.msra.mxu0 %v859
      %1008 = vmatprep.subr.mxu0 0.0
      %1009 = vmatpush1.msra.mxu0 %v858
      %1010 = vmatprep.subr.mxu0 0.0
      %1011 = vmatpush1.msra.mxu0 %v857
      %1012 = vmatprep.subr.mxu0 0.0
      %1013 = vmatpush1.msra.mxu0 %v856
      %1014 = vmatprep.subr.mxu0 0.0
      %1015 = vmatpush1.msra.mxu0 %v855
      %1016 = vmatprep.subr.mxu0 0.0
      %1017 = vmatpush1.msra.mxu0 %v854
      %1018 = vmatprep.subr.mxu0 0.0
      %1019 = vmatpush1.msra.mxu0 %v853
      %1020 = vmatprep.subr.mxu0 0.0
      %1021 = vmatpush1.msra.mxu0 %v852
      %1022 = vmatprep.subr.mxu0 0.0
      %1023 = vmatpush1.msra.mxu0 %v851
      %1024 = vmatprep.subr.mxu0 0.0
      %1025 = vmatpush1.msra.mxu0 %v850
      %1026 = vmatprep.subr.mxu0 0.0
      %1027 = vmatpush2.msra.mxu0 %v881
      %1028 = vmatprep.subr.mxu0 0.0
      %1029 = vmatpush2.msra.mxu0 %v880
      %1030 = vmatprep.subr.mxu0 0.0
      %1031 = vmatpush2.msra.mxu0 %v879
      %1032 = vmatprep.subr.mxu0 0.0
      %1033 = vmatpush2.msra.mxu0 %v878
      %1034 = vmatprep.subr.mxu0 0.0
      %1035 = vmatpush2.msra.mxu0 %v877
      %1036 = vmatprep.subr.mxu0 0.0
      %1037 = vmatpush2.msra.mxu0 %v876
      %1038 = vmatprep.subr.mxu0 0.0
      %1039 = vmatpush2.msra.mxu0 %v875
      %1040 = vmatprep.subr.mxu0 0.0
      %1041 = vmatpush2.msra.mxu0 %v874
      %1042 = vmatprep.subr.mxu0 0.0
      %1043 = vmatpush2.msra.mxu0 %v873
      %1044 = vmatprep.subr.mxu0 0.0
      %1045 = vmatpush2.msra.mxu0 %v872
      %1046 = vmatprep.subr.mxu0 0.0
      %1047 = vmatpush2.msra.mxu0 %v871
      %1048 = vmatprep.subr.mxu0 0.0
      %1049 = vmatpush2.msra.mxu0 %v870
      %1050 = vmatprep.subr.mxu0 0.0
      %1051 = vmatpush2.msra.mxu0 %v869
      %1052 = vmatprep.subr.mxu0 0.0
      %1053 = vmatpush2.msra.mxu0 %v868
      %1054 = vmatprep.subr.mxu0 0.0
      %1055 = vmatpush2.msra.mxu0 %v867
      %1056 = vmatprep.subr.mxu0 0.0
      %1057 = vmatpush2.msra.mxu0 %v866
      %1058 = vmatprep.mubr.f32.mxu0 %v593
      %1059 = vmatmul.mubr.f32.gmra.mxu0 %v488
      %v1060 = vpop.f32.mrf.mxu0
      %v1061 = vadd.f32 0.0, %v1060
      %v1062 = vpop.f32.mrf.mxu0
      %1063 = vmatprep.mubr.f32.mxu0 %v595
      %1064 = vmatmul.mubr.f32.gmra.mxu0 %v489
      %v1065 = vpop.f32.mrf.mxu0
      %v1066 = vadd.f32 0.0, %v1065
      %v1067 = vpop.f32.mrf.mxu0
      %1068 = vmatprep.mubr.f32.mxu0 %v598
      %1069 = vmatmul.mubr.f32.gmra.mxu0 %v491
      %v1070 = vpop.f32.mrf.mxu0
      %v1071 = vadd.f32 0.0, %v1070
      %v1072 = vpop.f32.mrf.mxu0
      %1073 = vmatprep.mubr.f32.mxu0 %v600
      %1074 = vmatmul.mubr.f32.gmra.mxu0 %v492
      %v1075 = vpop.f32.mrf.mxu0
      %v1076 = vadd.f32 0.0, %v1075
      %v1077 = vpop.f32.mrf.mxu0
      %1078 = vmatprep.mubr.f32.mxu0 %v603
      %1079 = vmatmul.mubr.f32.gmra.mxu0 %v494
      %v1080 = vpop.f32.mrf.mxu0
      %v1081 = vadd.f32 0.0, %v1080
      %v1082 = vpop.f32.mrf.mxu0
      %1083 = vmatprep.mubr.f32.mxu0 %v605
      %1084 = vmatmul.mubr.f32.gmra.mxu0 %v495
      %v1085 = vpop.f32.mrf.mxu0
      %v1086 = vadd.f32 0.0, %v1085
      %v1087 = vpop.f32.mrf.mxu0
      %1088 = vmatprep.mubr.f32.mxu0 %v608
      %1089 = vmatmul.mubr.f32.gmra.mxu0 %v497
      %v1090 = vpop.f32.mrf.mxu0
      %v1091 = vadd.f32 0.0, %v1090
      %v1092 = vpop.f32.mrf.mxu0
      %1093 = vmatprep.mubr.f32.mxu0 %v610
      %1094 = vmatmul.mubr.f32.gmra.mxu0 %v498
      %v1095 = vpop.f32.mrf.mxu0
      %v1096 = vadd.f32 0.0, %v1095
      %v1097 = vpop.f32.mrf.mxu0
      %1098 = vmatprep.mubr.f32.mxu0 %v613
      %1099 = vmatmul.mubr.f32.gmra.mxu0 %v500
      %v1100 = vpop.f32.mrf.mxu0
      %v1101 = vadd.f32 0.0, %v1100
      %v1102 = vpop.f32.mrf.mxu0
      %1103 = vmatprep.mubr.f32.mxu0 %v615
      %1104 = vmatmul.mubr.f32.gmra.mxu0 %v501
      %v1105 = vpop.f32.mrf.mxu0
      %v1106 = vadd.f32 0.0, %v1105
      %v1107 = vpop.f32.mrf.mxu0
      %1108 = vmatprep.mubr.f32.mxu0 %v618
      %1109 = vmatmul.mubr.f32.gmra.mxu0 %v503
      %v1110 = vpop.f32.mrf.mxu0
      %v1111 = vadd.f32 0.0, %v1110
      %v1112 = vpop.f32.mrf.mxu0
      %1113 = vmatprep.mubr.f32.mxu0 %v620
      %1114 = vmatmul.mubr.f32.gmra.mxu0 %v504
      %v1115 = vpop.f32.mrf.mxu0
      %v1116 = vadd.f32 0.0, %v1115
      %v1117 = vpop.f32.mrf.mxu0
      %1118 = vmatprep.mubr.f32.mxu0 %v623
      %1119 = vmatmul.mubr.f32.gmra.mxu0 %v506
      %v1120 = vpop.f32.mrf.mxu0
      %v1121 = vadd.f32 0.0, %v1120
      %v1122 = vpop.f32.mrf.mxu0
      %1123 = vmatprep.mubr.f32.mxu0 %v625
      %1124 = vmatmul.mubr.f32.gmra.mxu0 %v507
      %v1125 = vpop.f32.mrf.mxu0
      %v1126 = vadd.f32 0.0, %v1125
      %v1127 = vpop.f32.mrf.mxu0
      %1128 = vmatprep.mubr.f32.mxu0 %v628
      %1129 = vmatmul.mubr.f32.gmra.mxu0 %v509
      %v1130 = vpop.f32.mrf.mxu0
      %v1131 = vadd.f32 0.0, %v1130
      %v1132 = vpop.f32.mrf.mxu0
      %1133 = vmatprep.mubr.f32.mxu0 %v630
      %1134 = vmatmul.mubr.f32.gmra.mxu0 %v510
      %v1135 = vpop.f32.mrf.mxu0
      %v1136 = vadd.f32 0.0, %v1135
      %v1137 = vpop.f32.mrf.mxu0
      %1138 = vmatprep.mubr.f32.mxu0 %v633
      %1139 = vmatmul.mubr.f32.gmra.mxu0 %v512
      %v1140 = vpop.f32.mrf.mxu0
      %v1141 = vadd.f32 0.0, %v1140
      %v1142 = vpop.f32.mrf.mxu0
      %1143 = vmatprep.mubr.f32.mxu0 %v635
      %1144 = vmatmul.mubr.f32.gmra.mxu0 %v513
      %v1145 = vpop.f32.mrf.mxu0
      %v1146 = vadd.f32 0.0, %v1145
      %v1147 = vpop.f32.mrf.mxu0
      %1148 = vmatprep.mubr.f32.mxu0 %v638
      %1149 = vmatmul.mubr.f32.gmra.mxu0 %v515
      %v1150 = vpop.f32.mrf.mxu0
      %v1151 = vadd.f32 0.0, %v1150
      %v1152 = vpop.f32.mrf.mxu0
      %1153 = vmatprep.mubr.f32.mxu0 %v640
      %1154 = vmatmul.mubr.f32.gmra.mxu0 %v516
      %v1155 = vpop.f32.mrf.mxu0
      %v1156 = vadd.f32 0.0, %v1155
      %v1157 = vpop.f32.mrf.mxu0
      %1158 = vmatprep.mubr.f32.mxu0 %v643
      %1159 = vmatmul.mubr.f32.gmra.mxu0 %v518
      %v1160 = vpop.f32.mrf.mxu0
      %v1161 = vadd.f32 0.0, %v1160
      %v1162 = vpop.f32.mrf.mxu0
      %1163 = vmatprep.mubr.f32.mxu0 %v645
      %1164 = vmatmul.mubr.f32.gmra.mxu0 %v519
      %v1165 = vpop.f32.mrf.mxu0
      %v1166 = vadd.f32 0.0, %v1165
      %v1167 = vpop.f32.mrf.mxu0
      %1168 = vmatprep.mubr.f32.mxu0 %v648
      %1169 = vmatmul.mubr.f32.gmra.mxu0 %v521
      %v1170 = vpop.f32.mrf.mxu0
      %v1171 = vadd.f32 0.0, %v1170
      %v1172 = vpop.f32.mrf.mxu0
      %1173 = vmatprep.mubr.f32.mxu0 %v650
      %1174 = vmatmul.mubr.f32.gmra.mxu0 %v522
      %v1175 = vpop.f32.mrf.mxu0
      %v1176 = vadd.f32 0.0, %v1175
      %v1177 = vpop.f32.mrf.mxu0
      %1178 = vmatprep.mubr.f32.mxu0 %v653
      %1179 = vmatmul.mubr.f32.gmra.mxu0 %v524
      %v1180 = vpop.f32.mrf.mxu0
      %v1181 = vadd.f32 0.0, %v1180
      %v1182 = vpop.f32.mrf.mxu0
      %1183 = vmatprep.mubr.f32.mxu0 %v655
      %1184 = vmatmul.mubr.f32.gmra.mxu0 %v525
      %v1185 = vpop.f32.mrf.mxu0
      %v1186 = vadd.f32 0.0, %v1185
      %v1187 = vpop.f32.mrf.mxu0
      %1188 = vmatprep.mubr.f32.mxu0 %v658
      %1189 = vmatmul.mubr.f32.gmra.mxu0 %v527
      %v1190 = vpop.f32.mrf.mxu0
      %v1191 = vadd.f32 0.0, %v1190
      %v1192 = vpop.f32.mrf.mxu0
      %1193 = vmatprep.mubr.f32.mxu0 %v660
      %1194 = vmatmul.mubr.f32.gmra.mxu0 %v528
      %v1195 = vpop.f32.mrf.mxu0
      %v1196 = vadd.f32 0.0, %v1195
      %v1197 = vpop.f32.mrf.mxu0
      %1198 = vmatprep.mubr.f32.mxu0 %v663
      %1199 = vmatmul.mubr.f32.gmra.mxu0 %v530
      %v1200 = vpop.f32.mrf.mxu0
      %v1201 = vadd.f32 0.0, %v1200
      %v1202 = vpop.f32.mrf.mxu0
      %1203 = vmatprep.mubr.f32.mxu0 %v665
      %1204 = vmatmul.mubr.f32.gmra.mxu0 %v531
      %v1205 = vpop.f32.mrf.mxu0
      %v1206 = vadd.f32 0.0, %v1205
      %v1207 = vpop.f32.mrf.mxu0
      %1208 = vmatprep.mubr.f32.mxu0 %v668
      %1209 = vmatmul.mubr.f32.gmra.mxu0 %v533
      %v1210 = vpop.f32.mrf.mxu0
      %v1211 = vadd.f32 0.0, %v1210
      %v1212 = vpop.f32.mrf.mxu0
      %1213 = vmatprep.mubr.f32.mxu0 %v670
      %1214 = vmatmul.mubr.f32.gmra.mxu0 %v534
      %v1215 = vpop.f32.mrf.mxu0
      %v1216 = vadd.f32 0.0, %v1215
      %v1217 = vpop.f32.mrf.mxu0
      %1218 = vdwg.mxu0
      %1219 = vmatprep.subr.mxu0 0.0
      %1220 = vmatpush1.msra.mxu0 %v897
      %1221 = vmatprep.subr.mxu0 0.0
      %1222 = vmatpush1.msra.mxu0 %v896
      %1223 = vmatprep.subr.mxu0 0.0
      %1224 = vmatpush1.msra.mxu0 %v895
      %1225 = vmatprep.subr.mxu0 0.0
      %1226 = vmatpush1.msra.mxu0 %v894
      %1227 = vmatprep.subr.mxu0 0.0
      %1228 = vmatpush1.msra.mxu0 %v893
      %1229 = vmatprep.subr.mxu0 0.0
      %1230 = vmatpush1.msra.mxu0 %v892
      %1231 = vmatprep.subr.mxu0 0.0
      %1232 = vmatpush1.msra.mxu0 %v891
      %1233 = vmatprep.subr.mxu0 0.0
      %1234 = vmatpush1.msra.mxu0 %v890
      %1235 = vmatprep.subr.mxu0 0.0
      %1236 = vmatpush1.msra.mxu0 %v889
      %1237 = vmatprep.subr.mxu0 0.0
      %1238 = vmatpush1.msra.mxu0 %v888
      %1239 = vmatprep.subr.mxu0 0.0
      %1240 = vmatpush1.msra.mxu0 %v887
      %1241 = vmatprep.subr.mxu0 0.0
      %1242 = vmatpush1.msra.mxu0 %v886
      %1243 = vmatprep.subr.mxu0 0.0
      %1244 = vmatpush1.msra.mxu0 %v885
      %1245 = vmatprep.subr.mxu0 0.0
      %1246 = vmatpush1.msra.mxu0 %v884
      %1247 = vmatprep.subr.mxu0 0.0
      %1248 = vmatpush1.msra.mxu0 %v883
      %1249 = vmatprep.subr.mxu0 0.0
      %1250 = vmatpush1.msra.mxu0 %v882
      %1251 = vmatprep.subr.mxu0 0.0
      %1252 = vmatpush2.msra.mxu0 %v913
      %1253 = vmatprep.subr.mxu0 0.0
      %1254 = vmatpush2.msra.mxu0 %v912
      %1255 = vmatprep.subr.mxu0 0.0
      %1256 = vmatpush2.msra.mxu0 %v911
      %1257 = vmatprep.subr.mxu0 0.0
      %1258 = vmatpush2.msra.mxu0 %v910
      %1259 = vmatprep.subr.mxu0 0.0
      %1260 = vmatpush2.msra.mxu0 %v909
      %1261 = vmatprep.subr.mxu0 0.0
      %1262 = vmatpush2.msra.mxu0 %v908
      %1263 = vmatprep.subr.mxu0 0.0
      %1264 = vmatpush2.msra.mxu0 %v907
      %1265 = vmatprep.subr.mxu0 0.0
      %1266 = vmatpush2.msra.mxu0 %v906
      %1267 = vmatprep.subr.mxu0 0.0
      %1268 = vmatpush2.msra.mxu0 %v905
      %1269 = vmatprep.subr.mxu0 0.0
      %1270 = vmatpush2.msra.mxu0 %v904
      %1271 = vmatprep.subr.mxu0 0.0
      %1272 = vmatpush2.msra.mxu0 %v903
      %1273 = vmatprep.subr.mxu0 0.0
      %1274 = vmatpush2.msra.mxu0 %v902
      %1275 = vmatprep.subr.mxu0 0.0
      %1276 = vmatpush2.msra.mxu0 %v901
      %1277 = vmatprep.subr.mxu0 0.0
      %1278 = vmatpush2.msra.mxu0 %v900
      %1279 = vmatprep.subr.mxu0 0.0
      %1280 = vmatpush2.msra.mxu0 %v899
      %1281 = vmatprep.subr.mxu0 0.0
      %1282 = vmatpush2.msra.mxu0 %v898
      %1283 = vmatprep.mubr.f32.mxu0 %v491
      %1284 = vmatmul.mubr.f32.gmra.mxu0 %v706
      %v1285 = vpop.f32.mrf.mxu0
      %v1286 = vadd.f32 %v1061, %v1285
      %v1287 = vpop.f32.mrf.mxu0
      %1288 = vmatprep.mubr.f32.mxu0 %v492
      %1289 = vmatmul.mubr.f32.gmra.mxu0 %v708
      %v1290 = vpop.f32.mrf.mxu0
      %v1291 = vadd.f32 %v1066, %v1290
      %v1292 = vpop.f32.mrf.mxu0
      %1293 = vmatprep.mubr.f32.mxu0 %v494
      %1294 = vmatmul.mubr.f32.gmra.mxu0 %v711
      %v1295 = vpop.f32.mrf.mxu0
      %v1296 = vadd.f32 %v1071, %v1295
      %v1297 = vpop.f32.mrf.mxu0
      %1298 = vmatprep.mubr.f32.mxu0 %v495
      %1299 = vmatmul.mubr.f32.gmra.mxu0 %v713
      %v1300 = vpop.f32.mrf.mxu0
      %v1301 = vadd.f32 %v1076, %v1300
      %v1302 = vpop.f32.mrf.mxu0
      %1303 = vmatprep.mubr.f32.mxu0 %v497
      %1304 = vmatmul.mubr.f32.gmra.mxu0 %v716
      %v1305 = vpop.f32.mrf.mxu0
      %v1306 = vadd.f32 %v1081, %v1305
      %v1307 = vpop.f32.mrf.mxu0
      %1308 = vmatprep.mubr.f32.mxu0 %v498
      %1309 = vmatmul.mubr.f32.gmra.mxu0 %v718
      %v1310 = vpop.f32.mrf.mxu0
      %v1311 = vadd.f32 %v1086, %v1310
      %v1312 = vpop.f32.mrf.mxu0
      %1313 = vmatprep.mubr.f32.mxu0 %v500
      %1314 = vmatmul.mubr.f32.gmra.mxu0 %v721
      %v1315 = vpop.f32.mrf.mxu0
      %v1316 = vadd.f32 %v1091, %v1315
      %v1317 = vpop.f32.mrf.mxu0
      %1318 = vmatprep.mubr.f32.mxu0 %v501
      %1319 = vmatmul.mubr.f32.gmra.mxu0 %v723
      %v1320 = vpop.f32.mrf.mxu0
      %v1321 = vadd.f32 %v1096, %v1320
      %v1322 = vpop.f32.mrf.mxu0
      %1323 = vmatprep.mubr.f32.mxu0 %v503
      %1324 = vmatmul.mubr.f32.gmra.mxu0 %v726
      %v1325 = vpop.f32.mrf.mxu0
      %v1326 = vadd.f32 %v1101, %v1325
      %v1327 = vpop.f32.mrf.mxu0
      %1328 = vmatprep.mubr.f32.mxu0 %v504
      %1329 = vmatmul.mubr.f32.gmra.mxu0 %v728
      %v1330 = vpop.f32.mrf.mxu0
      %v1331 = vadd.f32 %v1106, %v1330
      %v1332 = vpop.f32.mrf.mxu0
      %1333 = vmatprep.mubr.f32.mxu0 %v506
      %1334 = vmatmul.mubr.f32.gmra.mxu0 %v731
      %v1335 = vpop.f32.mrf.mxu0
      %v1336 = vadd.f32 %v1111, %v1335
      %v1337 = vpop.f32.mrf.mxu0
      %1338 = vmatprep.mubr.f32.mxu0 %v507
      %1339 = vmatmul.mubr.f32.gmra.mxu0 %v733
      %v1340 = vpop.f32.mrf.mxu0
      %v1341 = vadd.f32 %v1116, %v1340
      %v1342 = vpop.f32.mrf.mxu0
      %1343 = vmatprep.mubr.f32.mxu0 %v509
      %1344 = vmatmul.mubr.f32.gmra.mxu0 %v736
      %v1345 = vpop.f32.mrf.mxu0
      %v1346 = vadd.f32 %v1121, %v1345
      %v1347 = vpop.f32.mrf.mxu0
      %1348 = vmatprep.mubr.f32.mxu0 %v510
      %1349 = vmatmul.mubr.f32.gmra.mxu0 %v738
      %v1350 = vpop.f32.mrf.mxu0
      %v1351 = vadd.f32 %v1126, %v1350
      %v1352 = vpop.f32.mrf.mxu0
      %1353 = vmatprep.mubr.f32.mxu0 %v512
      %1354 = vmatmul.mubr.f32.gmra.mxu0 %v741
      %v1355 = vpop.f32.mrf.mxu0
      %v1356 = vadd.f32 %v1131, %v1355
      %v1357 = vpop.f32.mrf.mxu0
      %1358 = vmatprep.mubr.f32.mxu0 %v513
      %1359 = vmatmul.mubr.f32.gmra.mxu0 %v743
      %v1360 = vpop.f32.mrf.mxu0
      %v1361 = vadd.f32 %v1136, %v1360
      %v1362 = vpop.f32.mrf.mxu0
      %1363 = vmatprep.mubr.f32.mxu0 %v515
      %1364 = vmatmul.mubr.f32.gmra.mxu0 %v746
      %v1365 = vpop.f32.mrf.mxu0
      %v1366 = vadd.f32 %v1141, %v1365
      %v1367 = vpop.f32.mrf.mxu0
      %1368 = vmatprep.mubr.f32.mxu0 %v516
      %1369 = vmatmul.mubr.f32.gmra.mxu0 %v748
      %v1370 = vpop.f32.mrf.mxu0
      %v1371 = vadd.f32 %v1146, %v1370
      %v1372 = vpop.f32.mrf.mxu0
      %1373 = vmatprep.mubr.f32.mxu0 %v518
      %1374 = vmatmul.mubr.f32.gmra.mxu0 %v751
      %v1375 = vpop.f32.mrf.mxu0
      %v1376 = vadd.f32 %v1151, %v1375
      %v1377 = vpop.f32.mrf.mxu0
      %1378 = vmatprep.mubr.f32.mxu0 %v519
      %1379 = vmatmul.mubr.f32.gmra.mxu0 %v753
      %v1380 = vpop.f32.mrf.mxu0
      %v1381 = vadd.f32 %v1156, %v1380
      %v1382 = vpop.f32.mrf.mxu0
      %1383 = vmatprep.mubr.f32.mxu0 %v521
      %1384 = vmatmul.mubr.f32.gmra.mxu0 %v756
      %v1385 = vpop.f32.mrf.mxu0
      %v1386 = vadd.f32 %v1161, %v1385
      %v1387 = vpop.f32.mrf.mxu0
      %1388 = vmatprep.mubr.f32.mxu0 %v522
      %1389 = vmatmul.mubr.f32.gmra.mxu0 %v758
      %v1390 = vpop.f32.mrf.mxu0
      %v1391 = vadd.f32 %v1166, %v1390
      %v1392 = vpop.f32.mrf.mxu0
      %1393 = vmatprep.mubr.f32.mxu0 %v524
      %1394 = vmatmul.mubr.f32.gmra.mxu0 %v761
      %v1395 = vpop.f32.mrf.mxu0
      %v1396 = vadd.f32 %v1171, %v1395
      %v1397 = vpop.f32.mrf.mxu0
      %1398 = vmatprep.mubr.f32.mxu0 %v525
      %1399 = vmatmul.mubr.f32.gmra.mxu0 %v763
      %v1400 = vpop.f32.mrf.mxu0
      %v1401 = vadd.f32 %v1176, %v1400
      %v1402 = vpop.f32.mrf.mxu0
      %1403 = vmatprep.mubr.f32.mxu0 %v527
      %1404 = vmatmul.mubr.f32.gmra.mxu0 %v766
      %v1405 = vpop.f32.mrf.mxu0
      %v1406 = vadd.f32 %v1181, %v1405
      %v1407 = vpop.f32.mrf.mxu0
      %1408 = vmatprep.mubr.f32.mxu0 %v528
      %1409 = vmatmul.mubr.f32.gmra.mxu0 %v768
      %v1410 = vpop.f32.mrf.mxu0
      %v1411 = vadd.f32 %v1186, %v1410
      %v1412 = vpop.f32.mrf.mxu0
      %1413 = vmatprep.mubr.f32.mxu0 %v530
      %1414 = vmatmul.mubr.f32.gmra.mxu0 %v771
      %v1415 = vpop.f32.mrf.mxu0
      %v1416 = vadd.f32 %v1191, %v1415
      %v1417 = vpop.f32.mrf.mxu0
      %1418 = vmatprep.mubr.f32.mxu0 %v531
      %1419 = vmatmul.mubr.f32.gmra.mxu0 %v773
      %v1420 = vpop.f32.mrf.mxu0
      %v1421 = vadd.f32 %v1196, %v1420
      %v1422 = vpop.f32.mrf.mxu0
      %1423 = vmatprep.mubr.f32.mxu0 %v533
      %1424 = vmatmul.mubr.f32.gmra.mxu0 %v776
      %v1425 = vpop.f32.mrf.mxu0
      %v1426 = vadd.f32 %v1201, %v1425
      %v1427 = vpop.f32.mrf.mxu0
      %1428 = vmatprep.mubr.f32.mxu0 %v534
      %1429 = vmatmul.mubr.f32.gmra.mxu0 %v778
      %v1430 = vpop.f32.mrf.mxu0
      %v1431 = vadd.f32 %v1206, %v1430
      %v1432 = vpop.f32.mrf.mxu0
      %1433 = vmatprep.mubr.f32.mxu0 %v536
      %1434 = vmatmul.mubr.f32.gmra.mxu0 %v781
      %v1435 = vpop.f32.mrf.mxu0
      %v1436 = vadd.f32 %v1211, %v1435
      %v1437 = vpop.f32.mrf.mxu0
      %1438 = vmatprep.mubr.f32.mxu0 %v537
      %1439 = vmatmul.mubr.f32.gmra.mxu0 %v783
      %v1440 = vpop.f32.mrf.mxu0
      %v1441 = vadd.f32 %v1216, %v1440
      %v1442 = vpop.f32.mrf.mxu0
      %1443 = vdwg.mxu0
      %1444 = vmatprep.subr.mxu0 0.0
      %1445 = vmatpush1.msra.mxu0 %v929
      %1446 = vmatprep.subr.mxu0 0.0
      %1447 = vmatpush1.msra.mxu0 %v928
      %1448 = vmatprep.subr.mxu0 0.0
      %1449 = vmatpush1.msra.mxu0 %v927
      %1450 = vmatprep.subr.mxu0 0.0
      %1451 = vmatpush1.msra.mxu0 %v926
      %1452 = vmatprep.subr.mxu0 0.0
      %1453 = vmatpush1.msra.mxu0 %v925
      %1454 = vmatprep.subr.mxu0 0.0
      %1455 = vmatpush1.msra.mxu0 %v924
      %1456 = vmatprep.subr.mxu0 0.0
      %1457 = vmatpush1.msra.mxu0 %v923
      %1458 = vmatprep.subr.mxu0 0.0
      %1459 = vmatpush1.msra.mxu0 %v922
      %1460 = vmatprep.subr.mxu0 0.0
      %1461 = vmatpush1.msra.mxu0 %v921
      %1462 = vmatprep.subr.mxu0 0.0
      %1463 = vmatpush1.msra.mxu0 %v920
      %1464 = vmatprep.subr.mxu0 0.0
      %1465 = vmatpush1.msra.mxu0 %v919
      %1466 = vmatprep.subr.mxu0 0.0
      %1467 = vmatpush1.msra.mxu0 %v918
      %1468 = vmatprep.subr.mxu0 0.0
      %1469 = vmatpush1.msra.mxu0 %v917
      %1470 = vmatprep.subr.mxu0 0.0
      %1471 = vmatpush1.msra.mxu0 %v916
      %1472 = vmatprep.subr.mxu0 0.0
      %1473 = vmatpush1.msra.mxu0 %v915
      %1474 = vmatprep.subr.mxu0 0.0
      %1475 = vmatpush1.msra.mxu0 %v914
      %1476 = vmatprep.subr.mxu0 0.0
      %1477 = vmatpush2.msra.mxu0 %v945
      %1478 = vmatprep.subr.mxu0 0.0
      %1479 = vmatpush2.msra.mxu0 %v944
      %1480 = vmatprep.subr.mxu0 0.0
      %1481 = vmatpush2.msra.mxu0 %v943
      %1482 = vmatprep.subr.mxu0 0.0
      %1483 = vmatpush2.msra.mxu0 %v942
      %1484 = vmatprep.subr.mxu0 0.0
      %1485 = vmatpush2.msra.mxu0 %v941
      %1486 = vmatprep.subr.mxu0 0.0
      %1487 = vmatpush2.msra.mxu0 %v940
      %1488 = vmatprep.subr.mxu0 0.0
      %1489 = vmatpush2.msra.mxu0 %v939
      %1490 = vmatprep.subr.mxu0 0.0
      %1491 = vmatpush2.msra.mxu0 %v938
      %1492 = vmatprep.subr.mxu0 0.0
      %1493 = vmatpush2.msra.mxu0 %v937
      %1494 = vmatprep.subr.mxu0 0.0
      %1495 = vmatpush2.msra.mxu0 %v936
      %1496 = vmatprep.subr.mxu0 0.0
      %1497 = vmatpush2.msra.mxu0 %v935
      %1498 = vmatprep.subr.mxu0 0.0
      %1499 = vmatpush2.msra.mxu0 %v934
      %1500 = vmatprep.subr.mxu0 0.0
      %1501 = vmatpush2.msra.mxu0 %v933
      %1502 = vmatprep.subr.mxu0 0.0
      %1503 = vmatpush2.msra.mxu0 %v932
      %1504 = vmatprep.subr.mxu0 0.0
      %1505 = vmatpush2.msra.mxu0 %v931
      %1506 = vmatprep.subr.mxu0 0.0
      %1507 = vmatpush2.msra.mxu0 %v930
      %1508 = vmatprep.mubr.f32.mxu0 %v711
      %1509 = vmatmul.mubr.f32.gmra.mxu0 %v598
      %v1510 = vpop.f32.mrf.mxu0
      %v1511 = vadd.f32 %v1286, %v1510
      %v1512 = vpop.f32.mrf.mxu0
      %1513 = vmatprep.mubr.f32.mxu0 %v713
      %1514 = vmatmul.mubr.f32.gmra.mxu0 %v600
      %v1515 = vpop.f32.mrf.mxu0
      %v1516 = vadd.f32 %v1291, %v1515
      %v1517 = vpop.f32.mrf.mxu0
      %1518 = vmatprep.mubr.f32.mxu0 %v716
      %1519 = vmatmul.mubr.f32.gmra.mxu0 %v603
      %v1520 = vpop.f32.mrf.mxu0
      %v1521 = vadd.f32 %v1296, %v1520
      %v1522 = vpop.f32.mrf.mxu0
      %1523 = vmatprep.mubr.f32.mxu0 %v718
      %1524 = vmatmul.mubr.f32.gmra.mxu0 %v605
      %v1525 = vpop.f32.mrf.mxu0
      %v1526 = vadd.f32 %v1301, %v1525
      %v1527 = vpop.f32.mrf.mxu0
      %1528 = vmatprep.mubr.f32.mxu0 %v721
      %1529 = vmatmul.mubr.f32.gmra.mxu0 %v608
      %v1530 = vpop.f32.mrf.mxu0
      %v1531 = vadd.f32 %v1306, %v1530
      %v1532 = vpop.f32.mrf.mxu0
      %1533 = vmatprep.mubr.f32.mxu0 %v723
      %1534 = vmatmul.mubr.f32.gmra.mxu0 %v610
      %v1535 = vpop.f32.mrf.mxu0
      %v1536 = vadd.f32 %v1311, %v1535
      %v1537 = vpop.f32.mrf.mxu0
      %1538 = vmatprep.mubr.f32.mxu0 %v726
      %1539 = vmatmul.mubr.f32.gmra.mxu0 %v613
      %v1540 = vpop.f32.mrf.mxu0
      %v1541 = vadd.f32 %v1316, %v1540
      %v1542 = vpop.f32.mrf.mxu0
      %1543 = vmatprep.mubr.f32.mxu0 %v728
      %1544 = vmatmul.mubr.f32.gmra.mxu0 %v615
      %v1545 = vpop.f32.mrf.mxu0
      %v1546 = vadd.f32 %v1321, %v1545
      %v1547 = vpop.f32.mrf.mxu0
      %1548 = vmatprep.mubr.f32.mxu0 %v731
      %1549 = vmatmul.mubr.f32.gmra.mxu0 %v618
      %v1550 = vpop.f32.mrf.mxu0
      %v1551 = vadd.f32 %v1326, %v1550
      %v1552 = vpop.f32.mrf.mxu0
      %1553 = vmatprep.mubr.f32.mxu0 %v733
      %1554 = vmatmul.mubr.f32.gmra.mxu0 %v620
      %v1555 = vpop.f32.mrf.mxu0
      %v1556 = vadd.f32 %v1331, %v1555
      %v1557 = vpop.f32.mrf.mxu0
      %1558 = vmatprep.mubr.f32.mxu0 %v736
      %1559 = vmatmul.mubr.f32.gmra.mxu0 %v623
      %v1560 = vpop.f32.mrf.mxu0
      %v1561 = vadd.f32 %v1336, %v1560
      %v1562 = vpop.f32.mrf.mxu0
      %1563 = vmatprep.mubr.f32.mxu0 %v738
      %1564 = vmatmul.mubr.f32.gmra.mxu0 %v625
      %v1565 = vpop.f32.mrf.mxu0
      %v1566 = vadd.f32 %v1341, %v1565
      %v1567 = vpop.f32.mrf.mxu0
      %1568 = vmatprep.mubr.f32.mxu0 %v741
      %1569 = vmatmul.mubr.f32.gmra.mxu0 %v628
      %v1570 = vpop.f32.mrf.mxu0
      %v1571 = vadd.f32 %v1346, %v1570
      %v1572 = vpop.f32.mrf.mxu0
      %1573 = vmatprep.mubr.f32.mxu0 %v743
      %1574 = vmatmul.mubr.f32.gmra.mxu0 %v630
      %v1575 = vpop.f32.mrf.mxu0
      %v1576 = vadd.f32 %v1351, %v1575
      %v1577 = vpop.f32.mrf.mxu0
      %1578 = vmatprep.mubr.f32.mxu0 %v746
      %1579 = vmatmul.mubr.f32.gmra.mxu0 %v633
      %v1580 = vpop.f32.mrf.mxu0
      %v1581 = vadd.f32 %v1356, %v1580
      %v1582 = vpop.f32.mrf.mxu0
      %1583 = vmatprep.mubr.f32.mxu0 %v748
      %1584 = vmatmul.mubr.f32.gmra.mxu0 %v635
      %v1585 = vpop.f32.mrf.mxu0
      %v1586 = vadd.f32 %v1361, %v1585
      %v1587 = vpop.f32.mrf.mxu0
      %1588 = vmatprep.mubr.f32.mxu0 %v751
      %1589 = vmatmul.mubr.f32.gmra.mxu0 %v638
      %v1590 = vpop.f32.mrf.mxu0
      %v1591 = vadd.f32 %v1366, %v1590
      %v1592 = vpop.f32.mrf.mxu0
      %1593 = vmatprep.mubr.f32.mxu0 %v753
      %1594 = vmatmul.mubr.f32.gmra.mxu0 %v640
      %v1595 = vpop.f32.mrf.mxu0
      %v1596 = vadd.f32 %v1371, %v1595
      %v1597 = vpop.f32.mrf.mxu0
      %1598 = vmatprep.mubr.f32.mxu0 %v756
      %1599 = vmatmul.mubr.f32.gmra.mxu0 %v643
      %v1600 = vpop.f32.mrf.mxu0
      %v1601 = vadd.f32 %v1376, %v1600
      %v1602 = vpop.f32.mrf.mxu0
      %1603 = vmatprep.mubr.f32.mxu0 %v758
      %1604 = vmatmul.mubr.f32.gmra.mxu0 %v645
      %v1605 = vpop.f32.mrf.mxu0
      %v1606 = vadd.f32 %v1381, %v1605
      %v1607 = vpop.f32.mrf.mxu0
      %1608 = vmatprep.mubr.f32.mxu0 %v761
      %1609 = vmatmul.mubr.f32.gmra.mxu0 %v648
      %v1610 = vpop.f32.mrf.mxu0
      %v1611 = vadd.f32 %v1386, %v1610
      %v1612 = vpop.f32.mrf.mxu0
      %1613 = vmatprep.mubr.f32.mxu0 %v763
      %1614 = vmatmul.mubr.f32.gmra.mxu0 %v650
      %v1615 = vpop.f32.mrf.mxu0
      %v1616 = vadd.f32 %v1391, %v1615
      %v1617 = vpop.f32.mrf.mxu0
      %1618 = vmatprep.mubr.f32.mxu0 %v766
      %1619 = vmatmul.mubr.f32.gmra.mxu0 %v653
      %v1620 = vpop.f32.mrf.mxu0
      %v1621 = vadd.f32 %v1396, %v1620
      %v1622 = vpop.f32.mrf.mxu0
      %1623 = vmatprep.mubr.f32.mxu0 %v768
      %1624 = vmatmul.mubr.f32.gmra.mxu0 %v655
      %v1625 = vpop.f32.mrf.mxu0
      %v1626 = vadd.f32 %v1401, %v1625
      %v1627 = vpop.f32.mrf.mxu0
      %1628 = vmatprep.mubr.f32.mxu0 %v771
      %1629 = vmatmul.mubr.f32.gmra.mxu0 %v658
      %v1630 = vpop.f32.mrf.mxu0
      %v1631 = vadd.f32 %v1406, %v1630
      %v1632 = vpop.f32.mrf.mxu0
      %1633 = vmatprep.mubr.f32.mxu0 %v773
      %1634 = vmatmul.mubr.f32.gmra.mxu0 %v660
      %v1635 = vpop.f32.mrf.mxu0
      %v1636 = vadd.f32 %v1411, %v1635
      %v1637 = vpop.f32.mrf.mxu0
      %1638 = vmatprep.mubr.f32.mxu0 %v776
      %1639 = vmatmul.mubr.f32.gmra.mxu0 %v663
      %v1640 = vpop.f32.mrf.mxu0
      %v1641 = vadd.f32 %v1416, %v1640
      %v1642 = vpop.f32.mrf.mxu0
      %1643 = vmatprep.mubr.f32.mxu0 %v778
      %1644 = vmatmul.mubr.f32.gmra.mxu0 %v665
      %v1645 = vpop.f32.mrf.mxu0
      %v1646 = vadd.f32 %v1421, %v1645
      %v1647 = vpop.f32.mrf.mxu0
      %1648 = vmatprep.mubr.f32.mxu0 %v781
      %1649 = vmatmul.mubr.f32.gmra.mxu0 %v668
      %v1650 = vpop.f32.mrf.mxu0
      %v1651 = vadd.f32 %v1426, %v1650
      %v1652 = vpop.f32.mrf.mxu0
      %1653 = vmatprep.mubr.f32.mxu0 %v783
      %1654 = vmatmul.mubr.f32.gmra.mxu0 %v670
      %v1655 = vpop.f32.mrf.mxu0
      %v1656 = vadd.f32 %v1431, %v1655
      %v1657 = vpop.f32.mrf.mxu0
      %1658 = vmatprep.mubr.f32.mxu0 %v828
      %1659 = vmatmul.mubr.f32.gmra.mxu0 %v821
      %v1660 = vpop.f32.mrf.mxu0
      %v1661 = vadd.f32 %v1436, %v1660
      %v1662 = vpop.f32.mrf.mxu0
      %1663 = vmatprep.mubr.f32.mxu0 %v830
      %1664 = vmatmul.mubr.f32.gmra.mxu0 %v823
      %v1665 = vpop.f32.mrf.mxu0
      %v1666 = vadd.f32 %v1441, %v1665
      %v1667 = vpop.f32.mrf.mxu0
      %1668 = vdwg.mxu0
      %1669 = vmatprep.subr.mxu0 0.0
      %1670 = vmatpush1.msra.mxu0 %v961
      %1671 = vmatprep.subr.mxu0 0.0
      %1672 = vmatpush1.msra.mxu0 %v960
      %1673 = vmatprep.subr.mxu0 0.0
      %1674 = vmatpush1.msra.mxu0 %v959
      %1675 = vmatprep.subr.mxu0 0.0
      %1676 = vmatpush1.msra.mxu0 %v958
      %1677 = vmatprep.subr.mxu0 0.0
      %1678 = vmatpush1.msra.mxu0 %v957
      %1679 = vmatprep.subr.mxu0 0.0
      %1680 = vmatpush1.msra.mxu0 %v956
      %1681 = vmatprep.subr.mxu0 0.0
      %1682 = vmatpush1.msra.mxu0 %v955
      %1683 = vmatprep.subr.mxu0 0.0
      %1684 = vmatpush1.msra.mxu0 %v954
      %1685 = vmatprep.subr.mxu0 0.0
      %1686 = vmatpush1.msra.mxu0 %v953
      %1687 = vmatprep.subr.mxu0 0.0
      %1688 = vmatpush1.msra.mxu0 %v952
      %1689 = vmatprep.subr.mxu0 0.0
      %1690 = vmatpush1.msra.mxu0 %v951
      %1691 = vmatprep.subr.mxu0 0.0
      %1692 = vmatpush1.msra.mxu0 %v950
      %1693 = vmatprep.subr.mxu0 0.0
      %1694 = vmatpush1.msra.mxu0 %v949
      %1695 = vmatprep.subr.mxu0 0.0
      %1696 = vmatpush1.msra.mxu0 %v948
      %1697 = vmatprep.subr.mxu0 0.0
      %1698 = vmatpush1.msra.mxu0 %v947
      %1699 = vmatprep.subr.mxu0 0.0
      %1700 = vmatpush1.msra.mxu0 %v946
      %1701 = vmatprep.subr.mxu0 0.0
      %1702 = vmatpush2.msra.mxu0 %v977
      %1703 = vmatprep.subr.mxu0 0.0
      %1704 = vmatpush2.msra.mxu0 %v976
      %1705 = vmatprep.subr.mxu0 0.0
      %1706 = vmatpush2.msra.mxu0 %v975
      %1707 = vmatprep.subr.mxu0 0.0
      %1708 = vmatpush2.msra.mxu0 %v974
      %1709 = vmatprep.subr.mxu0 0.0
      %1710 = vmatpush2.msra.mxu0 %v973
      %1711 = vmatprep.subr.mxu0 0.0
      %1712 = vmatpush2.msra.mxu0 %v972
      %1713 = vmatprep.subr.mxu0 0.0
      %1714 = vmatpush2.msra.mxu0 %v971
      %1715 = vmatprep.subr.mxu0 0.0
      %1716 = vmatpush2.msra.mxu0 %v970
      %1717 = vmatprep.subr.mxu0 0.0
      %1718 = vmatpush2.msra.mxu0 %v969
      %1719 = vmatprep.subr.mxu0 0.0
      %1720 = vmatpush2.msra.mxu0 %v968
      %1721 = vmatprep.subr.mxu0 0.0
      %1722 = vmatpush2.msra.mxu0 %v967
      %1723 = vmatprep.subr.mxu0 0.0
      %1724 = vmatpush2.msra.mxu0 %v966
      %1725 = vmatprep.subr.mxu0 0.0
      %1726 = vmatpush2.msra.mxu0 %v965
      %1727 = vmatprep.subr.mxu0 0.0
      %1728 = vmatpush2.msra.mxu0 %v964
      %1729 = vmatprep.subr.mxu0 0.0
      %1730 = vmatpush2.msra.mxu0 %v963
      %1731 = vmatprep.subr.mxu0 0.0
      %1732 = vmatpush2.msra.mxu0 %v962
      %1733 = vmatprep.mubr.f32.mxu0 %v603
      %1734 = vmatmul.mubr.f32.gmra.mxu0 %v494
      %v1735 = vpop.f32.mrf.mxu0
      %v1736 = vadd.f32 %v1511, %v1735
      %v1737 = vpop.f32.mrf.mxu0
      %1738 = vmatprep.mubr.f32.mxu0 %v605
      %1739 = vmatmul.mubr.f32.gmra.mxu0 %v495
      %v1740 = vpop.f32.mrf.mxu0
      %v1741 = vadd.f32 %v1516, %v1740
      %v1742 = vpop.f32.mrf.mxu0
      %1743 = vmatprep.mubr.f32.mxu0 %v608
      %1744 = vmatmul.mubr.f32.gmra.mxu0 %v497
      %v1745 = vpop.f32.mrf.mxu0
      %v1746 = vadd.f32 %v1521, %v1745
      %v1747 = vpop.f32.mrf.mxu0
      %1748 = vmatprep.mubr.f32.mxu0 %v610
      %1749 = vmatmul.mubr.f32.gmra.mxu0 %v498
      %v1750 = vpop.f32.mrf.mxu0
      %v1751 = vadd.f32 %v1526, %v1750
      %v1752 = vpop.f32.mrf.mxu0
      %1753 = vmatprep.mubr.f32.mxu0 %v613
      %1754 = vmatmul.mubr.f32.gmra.mxu0 %v500
      %v1755 = vpop.f32.mrf.mxu0
      %v1756 = vadd.f32 %v1531, %v1755
      %v1757 = vpop.f32.mrf.mxu0
      %1758 = vmatprep.mubr.f32.mxu0 %v615
      %1759 = vmatmul.mubr.f32.gmra.mxu0 %v501
      %v1760 = vpop.f32.mrf.mxu0
      %v1761 = vadd.f32 %v1536, %v1760
      %v1762 = vpop.f32.mrf.mxu0
      %1763 = vmatprep.mubr.f32.mxu0 %v618
      %1764 = vmatmul.mubr.f32.gmra.mxu0 %v503
      %v1765 = vpop.f32.mrf.mxu0
      %v1766 = vadd.f32 %v1541, %v1765
      %v1767 = vpop.f32.mrf.mxu0
      %1768 = vmatprep.mubr.f32.mxu0 %v620
      %1769 = vmatmul.mubr.f32.gmra.mxu0 %v504
      %v1770 = vpop.f32.mrf.mxu0
      %v1771 = vadd.f32 %v1546, %v1770
      %v1772 = vpop.f32.mrf.mxu0
      %1773 = vmatprep.mubr.f32.mxu0 %v623
      %1774 = vmatmul.mubr.f32.gmra.mxu0 %v506
      %v1775 = vpop.f32.mrf.mxu0
      %v1776 = vadd.f32 %v1551, %v1775
      %v1777 = vpop.f32.mrf.mxu0
      %1778 = vmatprep.mubr.f32.mxu0 %v625
      %1779 = vmatmul.mubr.f32.gmra.mxu0 %v507
      %v1780 = vpop.f32.mrf.mxu0
      %v1781 = vadd.f32 %v1556, %v1780
      %v1782 = vpop.f32.mrf.mxu0
      %1783 = vmatprep.mubr.f32.mxu0 %v628
      %1784 = vmatmul.mubr.f32.gmra.mxu0 %v509
      %v1785 = vpop.f32.mrf.mxu0
      %v1786 = vadd.f32 %v1561, %v1785
      %v1787 = vpop.f32.mrf.mxu0
      %1788 = vmatprep.mubr.f32.mxu0 %v630
      %1789 = vmatmul.mubr.f32.gmra.mxu0 %v510
      %v1790 = vpop.f32.mrf.mxu0
      %v1791 = vadd.f32 %v1566, %v1790
      %v1792 = vpop.f32.mrf.mxu0
      %1793 = vmatprep.mubr.f32.mxu0 %v633
      %1794 = vmatmul.mubr.f32.gmra.mxu0 %v512
      %v1795 = vpop.f32.mrf.mxu0
      %v1796 = vadd.f32 %v1571, %v1795
      %v1797 = vpop.f32.mrf.mxu0
      %1798 = vmatprep.mubr.f32.mxu0 %v635
      %1799 = vmatmul.mubr.f32.gmra.mxu0 %v513
      %v1800 = vpop.f32.mrf.mxu0
      %v1801 = vadd.f32 %v1576, %v1800
      %v1802 = vpop.f32.mrf.mxu0
      %1803 = vmatprep.mubr.f32.mxu0 %v638
      %1804 = vmatmul.mubr.f32.gmra.mxu0 %v515
      %v1805 = vpop.f32.mrf.mxu0
      %v1806 = vadd.f32 %v1581, %v1805
      %v1807 = vpop.f32.mrf.mxu0
      %1808 = vmatprep.mubr.f32.mxu0 %v640
      %1809 = vmatmul.mubr.f32.gmra.mxu0 %v516
      %v1810 = vpop.f32.mrf.mxu0
      %v1811 = vadd.f32 %v1586, %v1810
      %v1812 = vpop.f32.mrf.mxu0
      %1813 = vmatprep.mubr.f32.mxu0 %v643
      %1814 = vmatmul.mubr.f32.gmra.mxu0 %v518
      %v1815 = vpop.f32.mrf.mxu0
      %v1816 = vadd.f32 %v1591, %v1815
      %v1817 = vpop.f32.mrf.mxu0
      %1818 = vmatprep.mubr.f32.mxu0 %v645
      %1819 = vmatmul.mubr.f32.gmra.mxu0 %v519
      %v1820 = vpop.f32.mrf.mxu0
      %v1821 = vadd.f32 %v1596, %v1820
      %v1822 = vpop.f32.mrf.mxu0
      %1823 = vmatprep.mubr.f32.mxu0 %v648
      %1824 = vmatmul.mubr.f32.gmra.mxu0 %v521
      %v1825 = vpop.f32.mrf.mxu0
      %v1826 = vadd.f32 %v1601, %v1825
      %v1827 = vpop.f32.mrf.mxu0
      %1828 = vmatprep.mubr.f32.mxu0 %v650
      %1829 = vmatmul.mubr.f32.gmra.mxu0 %v522
      %v1830 = vpop.f32.mrf.mxu0
      %v1831 = vadd.f32 %v1606, %v1830
      %v1832 = vpop.f32.mrf.mxu0
      %1833 = vmatprep.mubr.f32.mxu0 %v653
      %1834 = vmatmul.mubr.f32.gmra.mxu0 %v524
      %v1835 = vpop.f32.mrf.mxu0
      %v1836 = vadd.f32 %v1611, %v1835
      %v1837 = vpop.f32.mrf.mxu0
      %1838 = vmatprep.mubr.f32.mxu0 %v655
      %1839 = vmatmul.mubr.f32.gmra.mxu0 %v525
      %v1840 = vpop.f32.mrf.mxu0
      %v1841 = vadd.f32 %v1616, %v1840
      %v1842 = vpop.f32.mrf.mxu0
      %1843 = vmatprep.mubr.f32.mxu0 %v658
      %1844 = vmatmul.mubr.f32.gmra.mxu0 %v527
      %v1845 = vpop.f32.mrf.mxu0
      %v1846 = vadd.f32 %v1621, %v1845
      %v1847 = vpop.f32.mrf.mxu0
      %1848 = vmatprep.mubr.f32.mxu0 %v660
      %1849 = vmatmul.mubr.f32.gmra.mxu0 %v528
      %v1850 = vpop.f32.mrf.mxu0
      %v1851 = vadd.f32 %v1626, %v1850
      %v1852 = vpop.f32.mrf.mxu0
      %1853 = vmatprep.mubr.f32.mxu0 %v663
      %1854 = vmatmul.mubr.f32.gmra.mxu0 %v530
      %v1855 = vpop.f32.mrf.mxu0
      %v1856 = vadd.f32 %v1631, %v1855
      %v1857 = vpop.f32.mrf.mxu0
      %1858 = vmatprep.mubr.f32.mxu0 %v665
      %1859 = vmatmul.mubr.f32.gmra.mxu0 %v531
      %v1860 = vpop.f32.mrf.mxu0
      %v1861 = vadd.f32 %v1636, %v1860
      %v1862 = vpop.f32.mrf.mxu0
      %1863 = vmatprep.mubr.f32.mxu0 %v668
      %1864 = vmatmul.mubr.f32.gmra.mxu0 %v533
      %v1865 = vpop.f32.mrf.mxu0
      %v1866 = vadd.f32 %v1641, %v1865
      %v1867 = vpop.f32.mrf.mxu0
      %1868 = vmatprep.mubr.f32.mxu0 %v670
      %1869 = vmatmul.mubr.f32.gmra.mxu0 %v534
      %v1870 = vpop.f32.mrf.mxu0
      %v1871 = vadd.f32 %v1646, %v1870
      %v1872 = vpop.f32.mrf.mxu0
      %1873 = vmatprep.mubr.f32.mxu0 %v821
      %1874 = vmatmul.mubr.f32.gmra.mxu0 %v536
      %v1875 = vpop.f32.mrf.mxu0
      %v1876 = vadd.f32 %v1651, %v1875
      %v1877 = vpop.f32.mrf.mxu0
      %1878 = vmatprep.mubr.f32.mxu0 %v823
      %1879 = vmatmul.mubr.f32.gmra.mxu0 %v537
      %v1880 = vpop.f32.mrf.mxu0
      %v1881 = vadd.f32 %v1656, %v1880
      %v1882 = vpop.f32.mrf.mxu0
      %1883 = vmatprep.mubr.f32.mxu0 %v838
      %1884 = vmatmul.mubr.f32.gmra.mxu0 %v539
      %v1885 = vpop.f32.mrf.mxu0
      %v1886 = vadd.f32 %v1661, %v1885
      %v1887 = vpop.f32.mrf.mxu0
      %1888 = vmatprep.mubr.f32.mxu0 %v840
      %1889 = vmatmul.mubr.f32.gmra.mxu0 %v540
      %v1890 = vpop.f32.mrf.mxu0
      %v1891 = vadd.f32 %v1666, %v1890
      %v1892 = vpop.f32.mrf.mxu0
      %1893 = vdwg.mxu0
      %1894 = vmatprep.subr.mxu0 0.0
      %1895 = vmatpush1.msra.mxu0 %v993
      %1896 = vmatprep.subr.mxu0 0.0
      %1897 = vmatpush1.msra.mxu0 %v992
      %1898 = vmatprep.subr.mxu0 0.0
      %1899 = vmatpush1.msra.mxu0 %v991
      %1900 = vmatprep.subr.mxu0 0.0
      %1901 = vmatpush1.msra.mxu0 %v990
      %1902 = vmatprep.subr.mxu0 0.0
      %1903 = vmatpush1.msra.mxu0 %v989
      %1904 = vmatprep.subr.mxu0 0.0
      %1905 = vmatpush1.msra.mxu0 %v988
      %1906 = vmatprep.subr.mxu0 0.0
      %1907 = vmatpush1.msra.mxu0 %v987
      %1908 = vmatprep.subr.mxu0 0.0
      %1909 = vmatpush1.msra.mxu0 %v986
      %1910 = vmatprep.subr.mxu0 0.0
      %1911 = vmatpush1.msra.mxu0 %v985
      %1912 = vmatprep.subr.mxu0 0.0
      %1913 = vmatpush1.msra.mxu0 %v984
      %1914 = vmatprep.subr.mxu0 0.0
      %1915 = vmatpush1.msra.mxu0 %v983
      %1916 = vmatprep.subr.mxu0 0.0
      %1917 = vmatpush1.msra.mxu0 %v982
      %1918 = vmatprep.subr.mxu0 0.0
      %1919 = vmatpush1.msra.mxu0 %v981
      %1920 = vmatprep.subr.mxu0 0.0
      %1921 = vmatpush1.msra.mxu0 %v980
      %1922 = vmatprep.subr.mxu0 0.0
      %1923 = vmatpush1.msra.mxu0 %v979
      %1924 = vmatprep.subr.mxu0 0.0
      %1925 = vmatpush1.msra.mxu0 %v978
      %1926 = vmatprep.subr.mxu0 0.0
      %1927 = vmatpush2.msra.mxu0 0.0
      %1928 = vmatprep.subr.mxu0 0.0
      %1929 = vmatpush2.msra.mxu0 0.0
      %1930 = vmatprep.subr.mxu0 0.0
      %1931 = vmatpush2.msra.mxu0 0.0
      %1932 = vmatprep.subr.mxu0 0.0
      %1933 = vmatpush2.msra.mxu0 0.0
      %1934 = vmatprep.subr.mxu0 0.0
      %1935 = vmatpush2.msra.mxu0 0.0
      %1936 = vmatprep.subr.mxu0 0.0
      %1937 = vmatpush2.msra.mxu0 0.0
      %1938 = vmatprep.subr.mxu0 0.0
      %1939 = vmatpush2.msra.mxu0 0.0
      %1940 = vmatprep.subr.mxu0 0.0
      %1941 = vmatpush2.msra.mxu0 0.0
      %1942 = vmatprep.subr.mxu0 0.0
      %1943 = vmatpush2.msra.mxu0 0.0
      %1944 = vmatprep.subr.mxu0 0.0
      %1945 = vmatpush2.msra.mxu0 0.0
      %1946 = vmatprep.subr.mxu0 0.0
      %1947 = vmatpush2.msra.mxu0 0.0
      %1948 = vmatprep.subr.mxu0 0.0
      %1949 = vmatpush2.msra.mxu0 0.0
      %1950 = vmatprep.subr.mxu0 0.0
      %1951 = vmatpush2.msra.mxu0 0.0
      %1952 = vmatprep.subr.mxu0 0.0
      %1953 = vmatpush2.msra.mxu0 0.0
      %1954 = vmatprep.subr.mxu0 0.0
      %1955 = vmatpush2.msra.mxu0 0.0
      %1956 = vmatprep.subr.mxu0 0.0
      %1957 = vmatpush2.msra.mxu0 0.0
      %1958 = vmatprep.mubr.f32.mxu0 0.0
      %1959 = vmatmul.mubr.f32.gmra.mxu0 %v716
      %v1960 = vpop.f32.mrf.mxu0
      %v1961 = vadd.f32 %v1736, %v1960
      %v1962 = vpop.f32.mrf.mxu0
      %1963 = vmatprep.mubr.f32.mxu0 0.0
      %1964 = vmatmul.mubr.f32.gmra.mxu0 %v718
      %v1965 = vpop.f32.mrf.mxu0
      %v1966 = vadd.f32 %v1741, %v1965
      %v1967 = vpop.f32.mrf.mxu0
      %1968 = vmatprep.mubr.f32.mxu0 0.0
      %1969 = vmatmul.mubr.f32.gmra.mxu0 %v721
      %v1970 = vpop.f32.mrf.mxu0
      %v1971 = vadd.f32 %v1746, %v1970
      %v1972 = vpop.f32.mrf.mxu0
      %1973 = vmatprep.mubr.f32.mxu0 0.0
      %1974 = vmatmul.mubr.f32.gmra.mxu0 %v723
      %v1975 = vpop.f32.mrf.mxu0
      %v1976 = vadd.f32 %v1751, %v1975
      %v1977 = vpop.f32.mrf.mxu0
      %1978 = vmatprep.mubr.f32.mxu0 0.0
      %1979 = vmatmul.mubr.f32.gmra.mxu0 %v726
      %v1980 = vpop.f32.mrf.mxu0
      %v1981 = vadd.f32 %v1756, %v1980
      %v1982 = vpop.f32.mrf.mxu0
      %1983 = vmatprep.mubr.f32.mxu0 0.0
      %1984 = vmatmul.mubr.f32.gmra.mxu0 %v728
      %v1985 = vpop.f32.mrf.mxu0
      %v1986 = vadd.f32 %v1761, %v1985
      %v1987 = vpop.f32.mrf.mxu0
      %1988 = vmatprep.mubr.f32.mxu0 0.0
      %1989 = vmatmul.mubr.f32.gmra.mxu0 %v731
      %v1990 = vpop.f32.mrf.mxu0
      %v1991 = vadd.f32 %v1766, %v1990
      %v1992 = vpop.f32.mrf.mxu0
      %1993 = vmatprep.mubr.f32.mxu0 0.0
      %1994 = vmatmul.mubr.f32.gmra.mxu0 %v733
      %v1995 = vpop.f32.mrf.mxu0
      %v1996 = vadd.f32 %v1771, %v1995
      %v1997 = vpop.f32.mrf.mxu0
      %1998 = vmatprep.mubr.f32.mxu0 0.0
      %1999 = vmatmul.mubr.f32.gmra.mxu0 %v736
      %v2000 = vpop.f32.mrf.mxu0
      %v2001 = vadd.f32 %v1776, %v2000
      %v2002 = vpop.f32.mrf.mxu0
      %2003 = vmatprep.mubr.f32.mxu0 0.0
      %2004 = vmatmul.mubr.f32.gmra.mxu0 %v738
      %v2005 = vpop.f32.mrf.mxu0
      %v2006 = vadd.f32 %v1781, %v2005
      %v2007 = vpop.f32.mrf.mxu0
      %2008 = vmatprep.mubr.f32.mxu0 0.0
      %2009 = vmatmul.mubr.f32.gmra.mxu0 %v741
      %v2010 = vpop.f32.mrf.mxu0
      %v2011 = vadd.f32 %v1786, %v2010
      %v2012 = vpop.f32.mrf.mxu0
      %2013 = vmatprep.mubr.f32.mxu0 0.0
      %2014 = vmatmul.mubr.f32.gmra.mxu0 %v743
      %v2015 = vpop.f32.mrf.mxu0
      %v2016 = vadd.f32 %v1791, %v2015
      %v2017 = vpop.f32.mrf.mxu0
      %2018 = vmatprep.mubr.f32.mxu0 0.0
      %2019 = vmatmul.mubr.f32.gmra.mxu0 %v746
      %v2020 = vpop.f32.mrf.mxu0
      %v2021 = vadd.f32 %v1796, %v2020
      %v2022 = vpop.f32.mrf.mxu0
      %2023 = vmatprep.mubr.f32.mxu0 0.0
      %2024 = vmatmul.mubr.f32.gmra.mxu0 %v748
      %v2025 = vpop.f32.mrf.mxu0
      %v2026 = vadd.f32 %v1801, %v2025
      %v2027 = vpop.f32.mrf.mxu0
      %2028 = vmatprep.mubr.f32.mxu0 0.0
      %2029 = vmatmul.mubr.f32.gmra.mxu0 %v751
      %v2030 = vpop.f32.mrf.mxu0
      %v2031 = vadd.f32 %v1806, %v2030
      %v2032 = vpop.f32.mrf.mxu0
      %2033 = vmatprep.mubr.f32.mxu0 0.0
      %2034 = vmatmul.mubr.f32.gmra.mxu0 %v753
      %v2035 = vpop.f32.mrf.mxu0
      %v2036 = vadd.f32 %v1811, %v2035
      %v2037 = vpop.f32.mrf.mxu0
      %2038 = vmatprep.mubr.f32.mxu0 0.0
      %2039 = vmatmul.mubr.f32.gmra.mxu0 %v756
      %v2040 = vpop.f32.mrf.mxu0
      %v2041 = vadd.f32 %v1816, %v2040
      %v2042 = vpop.f32.mrf.mxu0
      %2043 = vmatprep.mubr.f32.mxu0 0.0
      %2044 = vmatmul.mubr.f32.gmra.mxu0 %v758
      %v2045 = vpop.f32.mrf.mxu0
      %v2046 = vadd.f32 %v1821, %v2045
      %v2047 = vpop.f32.mrf.mxu0
      %2048 = vmatprep.mubr.f32.mxu0 0.0
      %2049 = vmatmul.mubr.f32.gmra.mxu0 %v761
      %v2050 = vpop.f32.mrf.mxu0
      %v2051 = vadd.f32 %v1826, %v2050
      %v2052 = vpop.f32.mrf.mxu0
      %2053 = vmatprep.mubr.f32.mxu0 0.0
      %2054 = vmatmul.mubr.f32.gmra.mxu0 %v763
      %v2055 = vpop.f32.mrf.mxu0
      %v2056 = vadd.f32 %v1831, %v2055
      %v2057 = vpop.f32.mrf.mxu0
      %2058 = vmatprep.mubr.f32.mxu0 0.0
      %2059 = vmatmul.mubr.f32.gmra.mxu0 %v766
      %v2060 = vpop.f32.mrf.mxu0
      %v2061 = vadd.f32 %v1836, %v2060
      %v2062 = vpop.f32.mrf.mxu0
      %2063 = vmatprep.mubr.f32.mxu0 0.0
      %2064 = vmatmul.mubr.f32.gmra.mxu0 %v768
      %v2065 = vpop.f32.mrf.mxu0
      %v2066 = vadd.f32 %v1841, %v2065
      %v2067 = vpop.f32.mrf.mxu0
      %2068 = vmatprep.mubr.f32.mxu0 0.0
      %2069 = vmatmul.mubr.f32.gmra.mxu0 %v771
      %v2070 = vpop.f32.mrf.mxu0
      %v2071 = vadd.f32 %v1846, %v2070
      %v2072 = vpop.f32.mrf.mxu0
      %2073 = vmatprep.mubr.f32.mxu0 0.0
      %2074 = vmatmul.mubr.f32.gmra.mxu0 %v773
      %v2075 = vpop.f32.mrf.mxu0
      %v2076 = vadd.f32 %v1851, %v2075
      %v2077 = vpop.f32.mrf.mxu0
      %2078 = vmatprep.mubr.f32.mxu0 0.0
      %2079 = vmatmul.mubr.f32.gmra.mxu0 %v776
      %v2080 = vpop.f32.mrf.mxu0
      %v2081 = vadd.f32 %v1856, %v2080
      %v2082 = vpop.f32.mrf.mxu0
      %2083 = vmatprep.mubr.f32.mxu0 0.0
      %2084 = vmatmul.mubr.f32.gmra.mxu0 %v778
      %v2085 = vpop.f32.mrf.mxu0
      %v2086 = vadd.f32 %v1861, %v2085
      %v2087 = vpop.f32.mrf.mxu0
      %2088 = vmatprep.mubr.f32.mxu0 0.0
      %2089 = vmatmul.mubr.f32.gmra.mxu0 %v781
      %v2090 = vpop.f32.mrf.mxu0
      %v2091 = vadd.f32 %v1866, %v2090
      %v2092 = vpop.f32.mrf.mxu0
      %2093 = vmatprep.mubr.f32.mxu0 0.0
      %2094 = vmatmul.mubr.f32.gmra.mxu0 %v783
      %v2095 = vpop.f32.mrf.mxu0
      %v2096 = vadd.f32 %v1871, %v2095
      %v2097 = vpop.f32.mrf.mxu0
      %2098 = vmatprep.mubr.f32.mxu0 0.0
      %2099 = vmatmul.mubr.f32.gmra.mxu0 %v828
      %v2100 = vpop.f32.mrf.mxu0
      %v2101 = vadd.f32 %v1876, %v2100
      %v2102 = vpop.f32.mrf.mxu0
      %2103 = vmatprep.mubr.f32.mxu0 0.0
      %2104 = vmatmul.mubr.f32.gmra.mxu0 %v830
      %v2105 = vpop.f32.mrf.mxu0
      %v2106 = vadd.f32 %v1881, %v2105
      %v2107 = vpop.f32.mrf.mxu0
      %2108 = vmatprep.mubr.f32.mxu0 0.0
      %2109 = vmatmul.mubr.f32.gmra.mxu0 %v845
      %v2110 = vpop.f32.mrf.mxu0
      %v2111 = vadd.f32 %v1886, %v2110
      %v2112 = vpop.f32.mrf.mxu0
      %2113 = vmatprep.mubr.f32.mxu0 0.0
      %2114 = vmatmul.mubr.f32.gmra.mxu0 %v847
      %v2115 = vpop.f32.mrf.mxu0
      %v2116 = vadd.f32 %v1891, %v2115
      %v2117 = vpop.f32.mrf.mxu0
      %2118 = vdwg.mxu0
      %2119 = vst [vmem:[%s231] sm:$0xff] %v1961
      %2120 = vst [vmem:[%s231 + $0x8] sm:$0xff] %v1966
      %2121 = vst [vmem:[%s231 + $0x10] sm:$0xff] %v1971
      %2122 = vst [vmem:[%s231 + $0x18] sm:$0xff] %v1976
      %2123 = vst [vmem:[%s231 + $0x20] sm:$0xff] %v1981
      %2124 = vst [vmem:[%s231 + $0x28] sm:$0xff] %v1986
      %2125 = vst [vmem:[%s231 + $0x30] sm:$0xff] %v1991
      %2126 = vst [vmem:[%s231 + $0x38] sm:$0xff] %v1996
      %2127 = vst [vmem:[%s231 + $0x40] sm:$0xff] %v2001
      %2128 = vst [vmem:[%s231 + $0x48] sm:$0xff] %v2006
      %2129 = vst [vmem:[%s231 + $0x50] sm:$0xff] %v2011
      %2130 = vst [vmem:[%s231 + $0x58] sm:$0xff] %v2016
      %2131 = vst [vmem:[%s231 + $0x60] sm:$0xff] %v2021
      %2132 = vst [vmem:[%s231 + $0x68] sm:$0xff] %v2026
      %2133 = vst [vmem:[%s231 + $0x70] sm:$0xff] %v2031
      %2134 = vst [vmem:[%s231 + $0x78] sm:$0xff] %v2036
      %2135 = vst [vmem:[%s231 + $0x80] sm:$0xff] %v2041
      %2136 = vst [vmem:[%s231 + $0x88] sm:$0xff] %v2046
      %2137 = vst [vmem:[%s231 + $0x90] sm:$0xff] %v2051
      %2138 = vst [vmem:[%s231 + $0x98] sm:$0xff] %v2056
      %2139 = vst [vmem:[%s231 + $0xa0] sm:$0xff] %v2061
      %2140 = vst [vmem:[%s231 + $0xa8] sm:$0xff] %v2066
      %2141 = vst [vmem:[%s231 + $0xb0] sm:$0xff] %v2071
      %2142 = vst [vmem:[%s231 + $0xb8] sm:$0xff] %v2076
      %2143 = vst [vmem:[%s231 + $0xc0] sm:$0xff] %v2081
      %2144 = vst [vmem:[%s231 + $0xc8] sm:$0xff] %v2086
      %2145 = vst [vmem:[%s231 + $0xd0] sm:$0xff] %v2091
      %2146 = vst [vmem:[%s231 + $0xd8] sm:$0xff] %v2096
      %2147 = vst [vmem:[%s231 + $0xe0] sm:$0xff] %v2101
      %2148 = vst [vmem:[%s231 + $0xe8] sm:$0xff] %v2106
      %2149 = vst [vmem:[%s231 + $0xf0] sm:$0xff] %v2111
      %2150 = vst [vmem:[%s231 + $0xf8] sm:$0xff] %v2116
      %v2151 = vadd.f32 %v1961, %v1966
      %v2152 = vadd.f32 %v2151, %v1971
      %v2153 = vadd.f32 %v2152, %v1976
      %v2154 = vadd.f32 %v2153, %v1981
      %v2155 = vadd.f32 %v2154, %v1986
      %v2156 = vadd.f32 %v2155, %v1991
      %v2157 = vadd.f32 %v2156, %v1996
      %v2158 = vadd.f32 %v2157, %v2001
      %v2159 = vadd.f32 %v2158, %v2006
      %v2160 = vadd.f32 %v2159, %v2011
      %v2161 = vadd.f32 %v2160, %v2016
      %v2162 = vadd.f32 %v2161, %v2021
      %v2163 = vadd.f32 %v2162, %v2026
      %v2164 = vadd.f32 %v2163, %v2031
      %v2165 = vadd.f32 %v2164, %v2036
      %v2166 = vadd.f32 %v2165, %v2041
      %v2167 = vadd.f32 %v2166, %v2046
      %v2168 = vadd.f32 %v2167, %v2051
      %v2169 = vadd.f32 %v2168, %v2056
      %v2170 = vadd.f32 %v2169, %v2061
      %v2171 = vadd.f32 %v2170, %v2066
      %v2172 = vadd.f32 %v2171, %v2071
      %v2173 = vadd.f32 %v2172, %v2076
      %v2174 = vadd.f32 %v2173, %v2081
      %v2175 = vadd.f32 %v2174, %v2086
      %v2176 = vadd.f32 %v2175, %v2091
      %v2177 = vadd.f32 %v2176, %v2096
      %v2178 = vadd.f32 %v2177, %v2101
      %v2179 = vadd.f32 %v2178, %v2106
      %v2180 = vadd.f32 %v2179, %v2111
      %v2181 = vadd.f32 %v2180, %v2116
      %v2182 = vrot.slane %v2181, 4
      %v2183 = vadd.f32 %v2181, %v2182
      %v2184 = vrot.slane %v2183, 2
      %v2185 = vadd.f32 %v2183, %v2184
      %v2186 = vrot.slane %v2185, 1
      %v2187 = vadd.f32 %v2185, %v2186
      %2188 = vst [vmem:[%s235] sm:$0x1] %v2187
      %v2189 = vmul.f32 %v1961, %v1961
      %v2190 = vmul.f32 %v1966, %v1966
      %v2191 = vmul.f32 %v1971, %v1971
      %v2192 = vmul.f32 %v1976, %v1976
      %v2193 = vmul.f32 %v1981, %v1981
      %v2194 = vmul.f32 %v1986, %v1986
      %v2195 = vmul.f32 %v1991, %v1991
      %v2196 = vmul.f32 %v1996, %v1996
      %v2197 = vmul.f32 %v2001, %v2001
      %v2198 = vmul.f32 %v2006, %v2006
      %v2199 = vmul.f32 %v2011, %v2011
      %v2200 = vmul.f32 %v2016, %v2016
      %v2201 = vmul.f32 %v2021, %v2021
      %v2202 = vmul.f32 %v2026, %v2026
      %v2203 = vmul.f32 %v2031, %v2031
      %v2204 = vmul.f32 %v2036, %v2036
      %v2205 = vmul.f32 %v2041, %v2041
      %v2206 = vmul.f32 %v2046, %v2046
      %v2207 = vmul.f32 %v2051, %v2051
      %v2208 = vmul.f32 %v2056, %v2056
      %v2209 = vmul.f32 %v2061, %v2061
      %v2210 = vmul.f32 %v2066, %v2066
      %v2211 = vmul.f32 %v2071, %v2071
      %v2212 = vmul.f32 %v2076, %v2076
      %v2213 = vmul.f32 %v2081, %v2081
      %v2214 = vmul.f32 %v2086, %v2086
      %v2215 = vmul.f32 %v2091, %v2091
      %v2216 = vmul.f32 %v2096, %v2096
      %v2217 = vmul.f32 %v2101, %v2101
      %v2218 = vmul.f32 %v2106, %v2106
      %v2219 = vmul.f32 %v2111, %v2111
      %v2220 = vmul.f32 %v2116, %v2116
      %v2221 = vadd.f32 %v2189, %v2190
      %v2222 = vadd.f32 %v2221, %v2191
      %v2223 = vadd.f32 %v2222, %v2192
      %v2224 = vadd.f32 %v2223, %v2193
      %v2225 = vadd.f32 %v2224, %v2194
      %v2226 = vadd.f32 %v2225, %v2195
      %v2227 = vadd.f32 %v2226, %v2196
      %v2228 = vadd.f32 %v2227, %v2197
      %v2229 = vadd.f32 %v2228, %v2198
      %v2230 = vadd.f32 %v2229, %v2199
      %v2231 = vadd.f32 %v2230, %v2200
      %v2232 = vadd.f32 %v2231, %v2201
      %v2233 = vadd.f32 %v2232, %v2202
      %v2234 = vadd.f32 %v2233, %v2203
      %v2235 = vadd.f32 %v2234, %v2204
      %v2236 = vadd.f32 %v2235, %v2205
      %v2237 = vadd.f32 %v2236, %v2206
      %v2238 = vadd.f32 %v2237, %v2207
      %v2239 = vadd.f32 %v2238, %v2208
      %v2240 = vadd.f32 %v2239, %v2209
      %v2241 = vadd.f32 %v2240, %v2210
      %v2242 = vadd.f32 %v2241, %v2211
      %v2243 = vadd.f32 %v2242, %v2212
      %v2244 = vadd.f32 %v2243, %v2213
      %v2245 = vadd.f32 %v2244, %v2214
      %v2246 = vadd.f32 %v2245, %v2215
      %v2247 = vadd.f32 %v2246, %v2216
      %v2248 = vadd.f32 %v2247, %v2217
      %v2249 = vadd.f32 %v2248, %v2218
      %v2250 = vadd.f32 %v2249, %v2219
      %v2251 = vadd.f32 %v2250, %v2220
      %v2252 = vrot.slane %v2251, 4
      %v2253 = vadd.f32 %v2251, %v2252
      %v2254 = vrot.slane %v2253, 2
      %v2255 = vadd.f32 %v2253, %v2254
      %v2256 = vrot.slane %v2255, 1
      %v2257 = vadd.f32 %v2255, %v2256
      %2258 = vst [vmem:[%s235 + $0x1] sm:$0x1] %v2257
      %p2259 = scmp.lt.s32.totalorder %s17, 1
      %s2260 = scalar_select %p2259, %s17, 1
      %s2261 = smul.addr %s2260, 32
      %s2262 = smul.addr %s2261, 8
      %s2263 = scalar_lea.vmem %s4, %s2262
      %p2264 = scmp.lt.s32.totalorder %s17, 1
      %s2265 = scalar_select %p2264, %s17, 1
      %s2266 = smul.addr %s2265, 2
      %s2267 = scalar_lea.vmem %s5, %s2266
      // Predicated region
      $region37: #{double_conv.4} parent=35 // pred_check
        %p2268 = pneg %p124
      $region38: #{double_conv.4} parent=35 // pred_check_branch
        %2270 = sbr.rel (%p2268) target = $region40
      $region39: #{double_conv.4} parent=35 // pred_region
        _
      $region40: #{double_conv.4} parent=35 // pred_fallthru
        _
      // Predicated region
      $region41: #{double_conv.4} parent=35 // pred_check
        %p2271 = pneg %p150
      $region42: #{double_conv.4} parent=35 // pred_check_branch
        %2273 = sbr.rel (%p2271) target = $region44
      $region43: #{double_conv.4} parent=35 // pred_region
        _
      $region44: #{double_conv.4} parent=35 // pred_fallthru
        _
    $region36: #{double_conv.4} parent=5 // pred_fallthru
      _
    %p2274 = scmp.le.s32.totalorder 2, %s12
    // Predicated region
    $region45: #{double_conv.4} parent=5 // pred_check
      %p2275 = pneg %p2274
    $region46: #{double_conv.4} parent=5 // pred_check_branch
      %2277 = sbr.rel (%p2275) target = $region48
    $region47: #{double_conv.4} parent=5 // pred_region
      %s2278 = ssub.s32 %s12, 2
      // Predicated region
      $region49: #{double_conv.4} parent=47 // pred_check
        %p2279 = pneg %p130
      $region50: #{double_conv.4} parent=47 // pred_check_branch
        %2281 = sbr.rel (%p2279) target = $region52
      $region51: #{double_conv.4} parent=47 // pred_region
        %p2282 = scmp.lt.s32.totalorder %s18, 1
        %s2283 = scalar_select %p2282, %s18, 1
        %s2284 = smul.addr %s2283, 32
        %s2285 = smul.addr %s2284, 8
        %s2286 = scalar_lea.vmem %s4, %s2285
      $region52: #{double_conv.4} parent=47 // pred_fallthru
        _
      // Predicated region
      $region53: #{double_conv.4} parent=47 // pred_check
        %p2287 = pneg %p156
      $region54: #{double_conv.4} parent=47 // pred_check_branch
        %2289 = sbr.rel (%p2287) target = $region56
      $region55: #{double_conv.4} parent=47 // pred_region
        %p2290 = scmp.lt.s32.totalorder %s18, 1
        %s2291 = scalar_select %p2290, %s18, 1
        %s2292 = smul.addr %s2291, 2
        %s2293 = scalar_lea.vmem %s5, %s2292
      $region56: #{double_conv.4} parent=47 // pred_fallthru
        _
    $region48: #{double_conv.4} parent=5 // pred_fallthru
      _
  $region6: #{double_conv.4} parent=0 // loop_footer
    %s16 = sadd.s32 1, %s12
  $region7: #{double_conv.4} parent=0 // loop_footer_branch
    %11 = sbr.rel target = $region3
  $region8: #{double_conv.4} parent=0 // loop_exit
    _

</llo_original>
